<compile_context>
chip_gen: v7x
topology: tpu7x:2x2x1
jax: 0.10.0
libtpu: 0.0.40
codegen_flags: <defaults>
</compile_context>

<pallas_src>
import functools

import jax
import jax.numpy as jnp
from jax.experimental import pallas as pl
from jax.experimental.pallas import tpu as pltpu

_VMEM_LIMIT_BYTES = 64 * 1024 * 1024  # comfortably > ~12 MiB working set @ TM=1024


def _round_up(x, m):
    return ((x + m - 1) // m) * m


def code_estimate_kernel(z_ref,
                         w1_ref, b1_ref,
                         w2_ref, b2_ref,
                         w3_ref, b3_ref,
                         w4_ref, b4_ref,
                         w5_ref, b5_ref,
                         o_ref):
    # z_ref: (TM, ch_inout) f32; weights (in, out) in weight dtype; biases f32 (1, out).
    wt = w1_ref.dtype
    x = z_ref[...]

    # L1 (+ identity LeakyReLU)
    h = jnp.dot(x.astype(wt), w1_ref[...],
                preferred_element_type=jnp.float32) + b1_ref[...]
    # L2
    h = jnp.dot(h.astype(wt), w2_ref[...],
                preferred_element_type=jnp.float32) + b2_ref[...]
    # L3
    h = jnp.dot(h.astype(wt), w3_ref[...],
                preferred_element_type=jnp.float32) + b3_ref[...]
    # L4 (+ identity LeakyReLU)
    h = jnp.dot(h.astype(wt), w4_ref[...],
                preferred_element_type=jnp.float32) + b4_ref[...]
    # L5 (+ identity LeakyReLU)
    h = jnp.dot(h.astype(wt), w5_ref[...],
                preferred_element_type=jnp.float32) + b5_ref[...]

    o_ref[...] = h.astype(o_ref.dtype)


def init_params(key, ch_inout=64, ch_hidden=256, dtype=jnp.float32):
    """PyTorch-default-like Linear init (uniform(-1/sqrt(fan_in), +)).
    Weights stored as (in, out); biases as (1, out)."""
    dims = [(ch_inout, ch_hidden),
            (ch_hidden, 2 * ch_hidden),
            (2 * ch_hidden, 2 * ch_hidden),
            (2 * ch_hidden, ch_hidden),
            (ch_hidden, ch_inout)]
    params = []
    for (fan_in, fan_out) in dims:
        key, kw, kb = jax.random.split(key, 3)
        bound = 1.0 / jnp.sqrt(jnp.float32(fan_in))
        w = jax.random.uniform(kw, (fan_in, fan_out), dtype, -bound, bound)
        b = jax.random.uniform(kb, (1, fan_out), dtype, -bound, bound)
        params.append((w, b))
    return params


def prepare_params(params, weight_dtype=jnp.bfloat16):
    """One-time (out of the per-call path) cast of weights to `weight_dtype`.
    Biases stay f32 so the bias add happens on the f32 accumulator.
    TODO(synk): optionally fp8 weights for L2-L4 on v7x (gate on accuracy)."""
    return tuple((w.astype(weight_dtype), b.astype(jnp.float32)) for (w, b) in params)


@functools.partial(jax.jit,
                   static_argnames=("tm_max", "min_steps", "single_buffer_weights"))
def _forward(z, packed_params, tm_max, min_steps, single_buffer_weights):
    B = z.shape[0]
    z2d = z.reshape(B, -1).astype(jnp.float32)
    ch_inout = z2d.shape[1]
    ch_out = packed_params[-1][0].shape[1]

    # ---- batch tiling -------------------------------------------------------
    # Balanced tile: n_steps grid steps of TM rows each (TM a multiple of 16 so
    # bf16 intermediates pack full vregs).  min_steps>=2 lets v7x shard the
    # batch over both TensorCores.  The final block may be ragged: rows are
    # independent and out-of-bounds stores are masked, so no batch padding.
    n_steps = pl.cdiv(B, tm_max)
    if n_steps < min_steps and B >= 16 * min_steps:
        n_steps = min_steps
    TM = _round_up(pl.cdiv(B, n_steps), 16)
    if TM >= B:
        TM = B  # single full-batch block (full-dim block is always legal)
    grid = (pl.cdiv(B, TM),)

    flat_params = [a for wb in packed_params for a in wb]

    def pinned(arr):
        # Constant block index -> weights/biases stay VMEM-resident across the
        # grid; single-buffer them (they are never re-fetched).
        if single_buffer_weights:
            return pl.BlockSpec(arr.shape, lambda i: (0, 0),
                                pipeline_mode=pl.Buffered(1))
        return pl.BlockSpec(arr.shape, lambda i: (0, 0))

    # Advisory cost estimate so XLA schedules the surrounding ops sensibly.
    macs_per_row = sum(int(w.shape[0]) * int(w.shape[1]) for (w, _) in packed_params)
    param_bytes = sum(w.size * w.dtype.itemsize + b.size * b.dtype.itemsize
                      for (w, b) in packed_params)
    cost = pl.CostEstimate(
        flops=2 * B * macs_per_row,
        transcendentals=0,
        bytes_accessed=B * (ch_inout + ch_out) * 4 + int(param_bytes))

    out = pl.pallas_call(
        code_estimate_kernel,
        out_shape=jax.ShapeDtypeStruct((B, ch_out), jnp.float32),
        grid=grid,
        in_specs=[pl.BlockSpec((TM, ch_inout), lambda i: (i, 0))]
                 + [pinned(p) for p in flat_params],
        out_specs=pl.BlockSpec((TM, ch_out), lambda i: (i, 0)),
        compiler_params=pltpu.CompilerParams(
            dimension_semantics=("parallel",),
            vmem_limit_bytes=_VMEM_LIMIT_BYTES),
        cost_estimate=cost,
    )(z2d, *flat_params)
    return out


def code_estimate_net(z, packed_params, tm_max=1024, min_steps=2):
    """z: any (B, ...) array; flattened to (B, ch_inout) as in the PyTorch forward.
    `packed_params` comes from prepare_params(...).  Returns f32 (B, ch_inout)."""
    # TODO(synk): tiny-B serving regime is bound by the ~1.1 MiB per-call weight
    # DMA; keep weights VMEM-resident across calls via a cross-call prefetch
    # (prior pallas_call starts the weight DMA and returns SEMAPHORE + VMEM refs,
    # has_side_effects=True) or batch multiple forwards into one call.
    packed_params = tuple(packed_params)
    try:
        return _forward(z, packed_params, tm_max, min_steps, True)
    except Exception:
        # Pallas build without pl.Buffered(1) support: fall back to default
        # double-buffered pinned weights (~1.1 MiB extra VMEM, otherwise identical).
        return _forward(z, packed_params, tm_max, min_steps, False)


def reference_forward(z, packed_params):
    """Pure-JAX reference with the same weight-dtype / f32-accumulate numerics.
    (All LeakyReLU(True) activations are the identity.)"""
    x = z.reshape(z.shape[0], -1).astype(jnp.float32)
    for (w, b) in packed_params:
        x = jnp.dot(x.astype(w.dtype), w,
                    preferred_element_type=jnp.float32) + b.astype(jnp.float32)
    return x


if __name__ == "__main__":
    key = jax.random.PRNGKey(0)
    k_in, k_par = jax.random.split(key)

    # (B, C, H, W) = (2, 4, 4, 4) flattens to (2, 64) == (B, ch_inout),
    # matching the module defaults ch_inout=64, ch_hidden=256.
    ch_inout, ch_hidden = 64, 256
    x = jax.random.normal(k_in, (2, 4, 4, 4), dtype=jnp.float32)

    params = init_params(k_par, ch_inout=ch_inout, ch_hidden=ch_hidden)
    packed = prepare_params(params)   # one-time bf16 weight cast (not per call)

    out = code_estimate_net(x, packed)
    out = jax.block_until_ready(out)

    ref = reference_forward(x, packed)
    assert out.shape == (2, ch_inout), out.shape
    assert jnp.allclose(out, ref, atol=1e-3, rtol=1e-3), \
        float(jnp.max(jnp.abs(out - ref)))

    print("KERNEL_OK")
</pallas_src>

<mosaic_0001>
module attributes {stable_mosaic.version = 11 : i64} {
  func.func @code_estimate_kernel(%arg0: i32, %arg1: memref<2x64xf32, #tpu.memory_space<vmem>>, %arg2: memref<64x256xbf16, #tpu.memory_space<vmem>>, %arg3: memref<1x256xf32, #tpu.memory_space<vmem>>, %arg4: memref<256x512xbf16, #tpu.memory_space<vmem>>, %arg5: memref<1x512xf32, #tpu.memory_space<vmem>>, %arg6: memref<512x512xbf16, #tpu.memory_space<vmem>>, %arg7: memref<1x512xf32, #tpu.memory_space<vmem>>, %arg8: memref<512x256xbf16, #tpu.memory_space<vmem>>, %arg9: memref<1x256xf32, #tpu.memory_space<vmem>>, %arg10: memref<256x64xbf16, #tpu.memory_space<vmem>>, %arg11: memref<1x64xf32, #tpu.memory_space<vmem>>, %arg12: memref<2x64xf32, #tpu.memory_space<vmem>>) attributes {dimension_semantics = [#tpu.dimension_semantics<parallel>], iteration_bounds = array<i64: 1>, scalar_prefetch = 0 : i64, scratch_operands = 0 : i64, tpu.core_type = #tpu.core_type<tc>, window_params = [{transform_indices = @transform_0, window_bounds = array<i64: 2, 64>}, {pipeline_mode = #tpu.pipeline_mode<synchronous>, transform_indices = @transform_1, window_bounds = array<i64: 64, 256>}, {pipeline_mode = #tpu.pipeline_mode<synchronous>, transform_indices = @transform_2, window_bounds = array<i64: 1, 256>}, {pipeline_mode = #tpu.pipeline_mode<synchronous>, transform_indices = @transform_3, window_bounds = array<i64: 256, 512>}, {pipeline_mode = #tpu.pipeline_mode<synchronous>, transform_indices = @transform_4, window_bounds = array<i64: 1, 512>}, {pipeline_mode = #tpu.pipeline_mode<synchronous>, transform_indices = @transform_5, window_bounds = array<i64: 512, 512>}, {pipeline_mode = #tpu.pipeline_mode<synchronous>, transform_indices = @transform_6, window_bounds = array<i64: 1, 512>}, {pipeline_mode = #tpu.pipeline_mode<synchronous>, transform_indices = @transform_7, window_bounds = array<i64: 512, 256>}, {pipeline_mode = #tpu.pipeline_mode<synchronous>, transform_indices = @transform_8, window_bounds = array<i64: 1, 256>}, {pipeline_mode = #tpu.pipeline_mode<synchronous>, transform_indices = @transform_9, window_bounds = array<i64: 256, 64>}, {pipeline_mode = #tpu.pipeline_mode<synchronous>, transform_indices = @transform_10, window_bounds = array<i64: 1, 64>}, {transform_indices = @transform_11, window_bounds = array<i64: 2, 64>}]} {
    %c0 = arith.constant 0 : index
    %c0_0 = arith.constant 0 : index
    %0 = vector.load %arg1[%c0, %c0_0] : memref<2x64xf32, #tpu.memory_space<vmem>>, vector<2x64xf32>
    %1 = arith.truncf %0 : vector<2x64xf32> to vector<2x64xbf16>
    %c0_1 = arith.constant 0 : index
    %c0_2 = arith.constant 0 : index
    %2 = vector.load %arg2[%c0_1, %c0_2] : memref<64x256xbf16, #tpu.memory_space<vmem>>, vector<64x256xbf16>
    %cst = arith.constant dense<0.000000e+00> : vector<2x256xf32>
    %3 = tpu.matmul %1, %2, %cst {dimension_numbers = #tpu.dot_dimension_numbers<[1], [0], [0], [1], [0, 0, 1, 1], [], []>} : vector<2x64xbf16>, vector<64x256xbf16>, vector<2x256xf32> -> vector<2x256xf32>
    %c0_3 = arith.constant 0 : index
    %c0_4 = arith.constant 0 : index
    %4 = vector.load %arg3[%c0_3, %c0_4] : memref<1x256xf32, #tpu.memory_space<vmem>>, vector<1x256xf32>
    %5 = vector.broadcast %4 : vector<1x256xf32> to vector<2x256xf32>
    %6 = arith.addf %3, %5 : vector<2x256xf32>
    %7 = arith.truncf %6 : vector<2x256xf32> to vector<2x256xbf16>
    %c0_5 = arith.constant 0 : index
    %c0_6 = arith.constant 0 : index
    %8 = vector.load %arg4[%c0_5, %c0_6] : memref<256x512xbf16, #tpu.memory_space<vmem>>, vector<256x512xbf16>
    %cst_7 = arith.constant dense<0.000000e+00> : vector<2x512xf32>
    %9 = tpu.matmul %7, %8, %cst_7 {dimension_numbers = #tpu.dot_dimension_numbers<[1], [0], [0], [1], [0, 0, 1, 1], [], []>} : vector<2x256xbf16>, vector<256x512xbf16>, vector<2x512xf32> -> vector<2x512xf32>
    %c0_8 = arith.constant 0 : index
    %c0_9 = arith.constant 0 : index
    %10 = vector.load %arg5[%c0_8, %c0_9] : memref<1x512xf32, #tpu.memory_space<vmem>>, vector<1x512xf32>
    %11 = vector.broadcast %10 : vector<1x512xf32> to vector<2x512xf32>
    %12 = arith.addf %9, %11 : vector<2x512xf32>
    %13 = arith.truncf %12 : vector<2x512xf32> to vector<2x512xbf16>
    %c0_10 = arith.constant 0 : index
    %c0_11 = arith.constant 0 : index
    %14 = vector.load %arg6[%c0_10, %c0_11] : memref<512x512xbf16, #tpu.memory_space<vmem>>, vector<512x512xbf16>
    %cst_12 = arith.constant dense<0.000000e+00> : vector<2x512xf32>
    %15 = tpu.matmul %13, %14, %cst_12 {dimension_numbers = #tpu.dot_dimension_numbers<[1], [0], [0], [1], [0, 0, 1, 1], [], []>} : vector<2x512xbf16>, vector<512x512xbf16>, vector<2x512xf32> -> vector<2x512xf32>
    %c0_13 = arith.constant 0 : index
    %c0_14 = arith.constant 0 : index
    %16 = vector.load %arg7[%c0_13, %c0_14] : memref<1x512xf32, #tpu.memory_space<vmem>>, vector<1x512xf32>
    %17 = vector.broadcast %16 : vector<1x512xf32> to vector<2x512xf32>
    %18 = arith.addf %15, %17 : vector<2x512xf32>
    %19 = arith.truncf %18 : vector<2x512xf32> to vector<2x512xbf16>
    %c0_15 = arith.constant 0 : index
    %c0_16 = arith.constant 0 : index
    %20 = vector.load %arg8[%c0_15, %c0_16] : memref<512x256xbf16, #tpu.memory_space<vmem>>, vector<512x256xbf16>
    %cst_17 = arith.constant dense<0.000000e+00> : vector<2x256xf32>
    %21 = tpu.matmul %19, %20, %cst_17 {dimension_numbers = #tpu.dot_dimension_numbers<[1], [0], [0], [1], [0, 0, 1, 1], [], []>} : vector<2x512xbf16>, vector<512x256xbf16>, vector<2x256xf32> -> vector<2x256xf32>
    %c0_18 = arith.constant 0 : index
    %c0_19 = arith.constant 0 : index
    %22 = vector.load %arg9[%c0_18, %c0_19] : memref<1x256xf32, #tpu.memory_space<vmem>>, vector<1x256xf32>
    %23 = vector.broadcast %22 : vector<1x256xf32> to vector<2x256xf32>
    %24 = arith.addf %21, %23 : vector<2x256xf32>
    %25 = arith.truncf %24 : vector<2x256xf32> to vector<2x256xbf16>
    %c0_20 = arith.constant 0 : index
    %c0_21 = arith.constant 0 : index
    %26 = vector.load %arg10[%c0_20, %c0_21] : memref<256x64xbf16, #tpu.memory_space<vmem>>, vector<256x64xbf16>
    %cst_22 = arith.constant dense<0.000000e+00> : vector<2x64xf32>
    %27 = tpu.matmul %25, %26, %cst_22 {dimension_numbers = #tpu.dot_dimension_numbers<[1], [0], [0], [1], [0, 0, 1, 1], [], []>} : vector<2x256xbf16>, vector<256x64xbf16>, vector<2x64xf32> -> vector<2x64xf32>
    %c0_23 = arith.constant 0 : index
    %c0_24 = arith.constant 0 : index
    %28 = vector.load %arg11[%c0_23, %c0_24] : memref<1x64xf32, #tpu.memory_space<vmem>>, vector<1x64xf32>
    %29 = vector.broadcast %28 : vector<1x64xf32> to vector<2x64xf32>
    %30 = arith.addf %27, %29 : vector<2x64xf32>
    %c0_25 = arith.constant 0 : index
    %c0_26 = arith.constant 0 : index
    %31 = vector.load %arg12[%c0_25, %c0_26] : memref<2x64xf32, #tpu.memory_space<vmem>>, vector<2x64xf32>
    tpu.vector_store %arg12[%c0_25, %c0_26], %30 {strides = array<i32>} : memref<2x64xf32, #tpu.memory_space<vmem>>, vector<2x64xf32>,
    return
  }
  func.func @transform_0(%arg0: i32) -> (i32, i32) {
    %c0_i32 = arith.constant 0 : i32
    %c0_i32_0 = arith.constant 0 : i32
    return %arg0, %c0_i32 : i32, i32
  }
  func.func @transform_1(%arg0: i32) -> (i32, i32) {
    %c0_i32 = arith.constant 0 : i32
    %c0_i32_0 = arith.constant 0 : i32
    %c0_i32_1 = arith.constant 0 : i32
    return %c0_i32, %c0_i32_0 : i32, i32
  }
  func.func @transform_2(%arg0: i32) -> (i32, i32) {
    %c0_i32 = arith.constant 0 : i32
    %c0_i32_0 = arith.constant 0 : i32
    %c0_i32_1 = arith.constant 0 : i32
    return %c0_i32, %c0_i32_0 : i32, i32
  }
  func.func @transform_3(%arg0: i32) -> (i32, i32) {
    %c0_i32 = arith.constant 0 : i32
    %c0_i32_0 = arith.constant 0 : i32
    %c0_i32_1 = arith.constant 0 : i32
    return %c0_i32, %c0_i32_0 : i32, i32
  }
  func.func @transform_4(%arg0: i32) -> (i32, i32) {
    %c0_i32 = arith.constant 0 : i32
    %c0_i32_0 = arith.constant 0 : i32
    %c0_i32_1 = arith.constant 0 : i32
    return %c0_i32, %c0_i32_0 : i32, i32
  }
  func.func @transform_5(%arg0: i32) -> (i32, i32) {
    %c0_i32 = arith.constant 0 : i32
    %c0_i32_0 = arith.constant 0 : i32
    %c0_i32_1 = arith.constant 0 : i32
    return %c0_i32, %c0_i32_0 : i32, i32
  }
  func.func @transform_6(%arg0: i32) -> (i32, i32) {
    %c0_i32 = arith.constant 0 : i32
    %c0_i32_0 = arith.constant 0 : i32
    %c0_i32_1 = arith.constant 0 : i32
    return %c0_i32, %c0_i32_0 : i32, i32
  }
  func.func @transform_7(%arg0: i32) -> (i32, i32) {
    %c0_i32 = arith.constant 0 : i32
    %c0_i32_0 = arith.constant 0 : i32
    %c0_i32_1 = arith.constant 0 : i32
    return %c0_i32, %c0_i32_0 : i32, i32
  }
  func.func @transform_8(%arg0: i32) -> (i32, i32) {
    %c0_i32 = arith.constant 0 : i32
    %c0_i32_0 = arith.constant 0 : i32
    %c0_i32_1 = arith.constant 0 : i32
    return %c0_i32, %c0_i32_0 : i32, i32
  }
  func.func @transform_9(%arg0: i32) -> (i32, i32) {
    %c0_i32 = arith.constant 0 : i32
    %c0_i32_0 = arith.constant 0 : i32
    %c0_i32_1 = arith.constant 0 : i32
    return %c0_i32, %c0_i32_0 : i32, i32
  }
  func.func @transform_10(%arg0: i32) -> (i32, i32) {
    %c0_i32 = arith.constant 0 : i32
    %c0_i32_0 = arith.constant 0 : i32
    %c0_i32_1 = arith.constant 0 : i32
    return %c0_i32, %c0_i32_0 : i32, i32
  }
  func.func @transform_11(%arg0: i32) -> (i32, i32) {
    %c0_i32 = arith.constant 0 : i32
    %c0_i32_0 = arith.constant 0 : i32
    return %arg0, %c0_i32 : i32, i32
  }
}

module attributes {stable_mosaic.version = 11 : i64} {
  func.func @code_estimate_kernel(%arg0: i32, %arg1: memref<2x64xf32, #tpu.memory_space<vmem>>, %arg2: memref<64x256xbf16, #tpu.memory_space<vmem>>, %arg3: memref<1x256xf32, #tpu.memory_space<vmem>>, %arg4: memref<256x512xbf16, #tpu.memory_space<vmem>>, %arg5: memref<1x512xf32, #tpu.memory_space<vmem>>, %arg6: memref<512x512xbf16, #tpu.memory_space<vmem>>, %arg7: memref<1x512xf32, #tpu.memory_space<vmem>>, %arg8: memref<512x256xbf16, #tpu.memory_space<vmem>>, %arg9: memref<1x256xf32, #tpu.memory_space<vmem>>, %arg10: memref<256x64xbf16, #tpu.memory_space<vmem>>, %arg11: memref<1x64xf32, #tpu.memory_space<vmem>>, %arg12: memref<2x64xf32, #tpu.memory_space<vmem>>) attributes {dimension_semantics = [#tpu.dimension_semantics<parallel>], iteration_bounds = array<i64: 1>, scalar_prefetch = 0 : i64, scratch_operands = 0 : i64, tpu.core_type = #tpu.core_type<tc>, window_params = [{transform_indices = @transform_0, window_bounds = array<i64: 2, 64>}, {pipeline_mode = #tpu.pipeline_mode<synchronous>, transform_indices = @transform_1, window_bounds = array<i64: 64, 256>}, {pipeline_mode = #tpu.pipeline_mode<synchronous>, transform_indices = @transform_2, window_bounds = array<i64: 1, 256>}, {pipeline_mode = #tpu.pipeline_mode<synchronous>, transform_indices = @transform_3, window_bounds = array<i64: 256, 512>}, {pipeline_mode = #tpu.pipeline_mode<synchronous>, transform_indices = @transform_4, window_bounds = array<i64: 1, 512>}, {pipeline_mode = #tpu.pipeline_mode<synchronous>, transform_indices = @transform_5, window_bounds = array<i64: 512, 512>}, {pipeline_mode = #tpu.pipeline_mode<synchronous>, transform_indices = @transform_6, window_bounds = array<i64: 1, 512>}, {pipeline_mode = #tpu.pipeline_mode<synchronous>, transform_indices = @transform_7, window_bounds = array<i64: 512, 256>}, {pipeline_mode = #tpu.pipeline_mode<synchronous>, transform_indices = @transform_8, window_bounds = array<i64: 1, 256>}, {pipeline_mode = #tpu.pipeline_mode<synchronous>, transform_indices = @transform_9, window_bounds = array<i64: 256, 64>}, {pipeline_mode = #tpu.pipeline_mode<synchronous>, transform_indices = @transform_10, window_bounds = array<i64: 1, 64>}, {transform_indices = @transform_11, window_bounds = array<i64: 2, 64>}]} {
    %c0 = arith.constant 0 : index
    %c0_0 = arith.constant 0 : index
    %0 = vector.load %arg1[%c0, %c0_0] : memref<2x64xf32, #tpu.memory_space<vmem>>, vector<2x64xf32>
    %1 = arith.truncf %0 : vector<2x64xf32> to vector<2x64xbf16>
    %c0_1 = arith.constant 0 : index
    %c0_2 = arith.constant 0 : index
    %2 = vector.load %arg2[%c0_1, %c0_2] : memref<64x256xbf16, #tpu.memory_space<vmem>>, vector<64x256xbf16>
    %cst = arith.constant dense<0.000000e+00> : vector<2x256xf32>
    %3 = tpu.matmul %1, %2, %cst {dimension_numbers = #tpu.dot_dimension_numbers<[1], [0], [0], [1], [0, 0, 1, 1], [], []>} : vector<2x64xbf16>, vector<64x256xbf16>, vector<2x256xf32> -> vector<2x256xf32>
    %c0_3 = arith.constant 0 : index
    %c0_4 = arith.constant 0 : index
    %4 = vector.load %arg3[%c0_3, %c0_4] : memref<1x256xf32, #tpu.memory_space<vmem>>, vector<1x256xf32>
    %5 = vector.broadcast %4 : vector<1x256xf32> to vector<2x256xf32>
    %6 = arith.addf %3, %5 : vector<2x256xf32>
    %7 = arith.truncf %6 : vector<2x256xf32> to vector<2x256xbf16>
    %c0_5 = arith.constant 0 : index
    %c0_6 = arith.constant 0 : index
    %8 = vector.load %arg4[%c0_5, %c0_6] : memref<256x512xbf16, #tpu.memory_space<vmem>>, vector<256x512xbf16>
    %cst_7 = arith.constant dense<0.000000e+00> : vector<2x512xf32>
    %9 = tpu.matmul %7, %8, %cst_7 {dimension_numbers = #tpu.dot_dimension_numbers<[1], [0], [0], [1], [0, 0, 1, 1], [], []>} : vector<2x256xbf16>, vector<256x512xbf16>, vector<2x512xf32> -> vector<2x512xf32>
    %c0_8 = arith.constant 0 : index
    %c0_9 = arith.constant 0 : index
    %10 = vector.load %arg5[%c0_8, %c0_9] : memref<1x512xf32, #tpu.memory_space<vmem>>, vector<1x512xf32>
    %11 = vector.broadcast %10 : vector<1x512xf32> to vector<2x512xf32>
    %12 = arith.addf %9, %11 : vector<2x512xf32>
    %13 = arith.truncf %12 : vector<2x512xf32> to vector<2x512xbf16>
    %c0_10 = arith.constant 0 : index
    %c0_11 = arith.constant 0 : index
    %14 = vector.load %arg6[%c0_10, %c0_11] : memref<512x512xbf16, #tpu.memory_space<vmem>>, vector<512x512xbf16>
    %cst_12 = arith.constant dense<0.000000e+00> : vector<2x512xf32>
    %15 = tpu.matmul %13, %14, %cst_12 {dimension_numbers = #tpu.dot_dimension_numbers<[1], [0], [0], [1], [0, 0, 1, 1], [], []>} : vector<2x512xbf16>, vector<512x512xbf16>, vector<2x512xf32> -> vector<2x512xf32>
    %c0_13 = arith.constant 0 : index
    %c0_14 = arith.constant 0 : index
    %16 = vector.load %arg7[%c0_13, %c0_14] : memref<1x512xf32, #tpu.memory_space<vmem>>, vector<1x512xf32>
    %17 = vector.broadcast %16 : vector<1x512xf32> to vector<2x512xf32>
    %18 = arith.addf %15, %17 : vector<2x512xf32>
    %19 = arith.truncf %18 : vector<2x512xf32> to vector<2x512xbf16>
    %c0_15 = arith.constant 0 : index
    %c0_16 = arith.constant 0 : index
    %20 = vector.load %arg8[%c0_15, %c0_16] : memref<512x256xbf16, #tpu.memory_space<vmem>>, vector<512x256xbf16>
    %cst_17 = arith.constant dense<0.000000e+00> : vector<2x256xf32>
    %21 = tpu.matmul %19, %20, %cst_17 {dimension_numbers = #tpu.dot_dimension_numbers<[1], [0], [0], [1], [0, 0, 1, 1], [], []>} : vector<2x512xbf16>, vector<512x256xbf16>, vector<2x256xf32> -> vector<2x256xf32>
    %c0_18 = arith.constant 0 : index
    %c0_19 = arith.constant 0 : index
    %22 = vector.load %arg9[%c0_18, %c0_19] : memref<1x256xf32, #tpu.memory_space<vmem>>, vector<1x256xf32>
    %23 = vector.broadcast %22 : vector<1x256xf32> to vector<2x256xf32>
    %24 = arith.addf %21, %23 : vector<2x256xf32>
    %25 = arith.truncf %24 : vector<2x256xf32> to vector<2x256xbf16>
    %c0_20 = arith.constant 0 : index
    %c0_21 = arith.constant 0 : index
    %26 = vector.load %arg10[%c0_20, %c0_21] : memref<256x64xbf16, #tpu.memory_space<vmem>>, vector<256x64xbf16>
    %cst_22 = arith.constant dense<0.000000e+00> : vector<2x64xf32>
    %27 = tpu.matmul %25, %26, %cst_22 {dimension_numbers = #tpu.dot_dimension_numbers<[1], [0], [0], [1], [0, 0, 1, 1], [], []>} : vector<2x256xbf16>, vector<256x64xbf16>, vector<2x64xf32> -> vector<2x64xf32>
    %c0_23 = arith.constant 0 : index
    %c0_24 = arith.constant 0 : index
    %28 = vector.load %arg11[%c0_23, %c0_24] : memref<1x64xf32, #tpu.memory_space<vmem>>, vector<1x64xf32>
    %29 = vector.broadcast %28 : vector<1x64xf32> to vector<2x64xf32>
    %30 = arith.addf %27, %29 : vector<2x64xf32>
    %c0_25 = arith.constant 0 : index
    %c0_26 = arith.constant 0 : index
    %31 = vector.load %arg12[%c0_25, %c0_26] : memref<2x64xf32, #tpu.memory_space<vmem>>, vector<2x64xf32>
    tpu.vector_store %arg12[%c0_25, %c0_26], %30 {strides = array<i32>} : memref<2x64xf32, #tpu.memory_space<vmem>>, vector<2x64xf32>,
    return
  }
  func.func @transform_0(%arg0: i32) -> (i32, i32) {
    %c0_i32 = arith.constant 0 : i32
    %c0_i32_0 = arith.constant 0 : i32
    return %arg0, %c0_i32 : i32, i32
  }
  func.func @transform_1(%arg0: i32) -> (i32, i32) {
    %c0_i32 = arith.constant 0 : i32
    %c0_i32_0 = arith.constant 0 : i32
    %c0_i32_1 = arith.constant 0 : i32
    return %c0_i32, %c0_i32_0 : i32, i32
  }
  func.func @transform_2(%arg0: i32) -> (i32, i32) {
    %c0_i32 = arith.constant 0 : i32
    %c0_i32_0 = arith.constant 0 : i32
    %c0_i32_1 = arith.constant 0 : i32
    return %c0_i32, %c0_i32_0 : i32, i32
  }
  func.func @transform_3(%arg0: i32) -> (i32, i32) {
    %c0_i32 = arith.constant 0 : i32
    %c0_i32_0 = arith.constant 0 : i32
    %c0_i32_1 = arith.constant 0 : i32
    return %c0_i32, %c0_i32_0 : i32, i32
  }
  func.func @transform_4(%arg0: i32) -> (i32, i32) {
    %c0_i32 = arith.constant 0 : i32
    %c0_i32_0 = arith.constant 0 : i32
    %c0_i32_1 = arith.constant 0 : i32
    return %c0_i32, %c0_i32_0 : i32, i32
  }
  func.func @transform_5(%arg0: i32) -> (i32, i32) {
    %c0_i32 = arith.constant 0 : i32
    %c0_i32_0 = arith.constant 0 : i32
    %c0_i32_1 = arith.constant 0 : i32
    return %c0_i32, %c0_i32_0 : i32, i32
  }
  func.func @transform_6(%arg0: i32) -> (i32, i32) {
    %c0_i32 = arith.constant 0 : i32
    %c0_i32_0 = arith.constant 0 : i32
    %c0_i32_1 = arith.constant 0 : i32
    return %c0_i32, %c0_i32_0 : i32, i32
  }
  func.func @transform_7(%arg0: i32) -> (i32, i32) {
    %c0_i32 = arith.constant 0 : i32
    %c0_i32_0 = arith.constant 0 : i32
    %c0_i32_1 = arith.constant 0 : i32
    return %c0_i32, %c0_i32_0 : i32, i32
  }
  func.func @transform_8(%arg0: i32) -> (i32, i32) {
    %c0_i32 = arith.constant 0 : i32
    %c0_i32_0 = arith.constant 0 : i32
    %c0_i32_1 = arith.constant 0 : i32
    return %c0_i32, %c0_i32_0 : i32, i32
  }
  func.func @transform_9(%arg0: i32) -> (i32, i32) {
    %c0_i32 = arith.constant 0 : i32
    %c0_i32_0 = arith.constant 0 : i32
    %c0_i32_1 = arith.constant 0 : i32
    return %c0_i32, %c0_i32_0 : i32, i32
  }
  func.func @transform_10(%arg0: i32) -> (i32, i32) {
    %c0_i32 = arith.constant 0 : i32
    %c0_i32_0 = arith.constant 0 : i32
    %c0_i32_1 = arith.constant 0 : i32
    return %c0_i32, %c0_i32_0 : i32, i32
  }
  func.func @transform_11(%arg0: i32) -> (i32, i32) {
    %c0_i32 = arith.constant 0 : i32
    %c0_i32_0 = arith.constant 0 : i32
    return %arg0, %c0_i32 : i32, i32
  }
}

</mosaic_0001>

<llo_original>
// kernel: _forward.1
$region0: #{_forward.1}
  #allocation0 [shape = 'u32[]', space=smem, size = 0x4, offset = 0x4, fixed_abs, tag = 'smem constant byte address 0x4 - core index']
  #allocation1 [shape = 'u32[144,128]{1,0:T(1,128)}', space=vmem, size = 0x12000, scoped, tag = 'internal scratch']
  %s0 = inlined_call_operand.hbm [shape: f32[2,64], index: 0, kind: input, shape index: {}]
  %s1 = inlined_call_operand.hbm [shape: bf16[64,256], index: 1, kind: input, shape index: {}]
  %s2 = inlined_call_operand.hbm [shape: f32[1,256], index: 2, kind: input, shape index: {}]
  %s3 = inlined_call_operand.hbm [shape: bf16[256,512], index: 3, kind: input, shape index: {}]
  %s4 = inlined_call_operand.hbm [shape: f32[1,512], index: 4, kind: input, shape index: {}]
  %s5 = inlined_call_operand.hbm [shape: bf16[512,512], index: 5, kind: input, shape index: {}]
  %s6 = inlined_call_operand.hbm [shape: f32[1,512], index: 6, kind: input, shape index: {}]
  %s7 = inlined_call_operand.hbm [shape: bf16[512,256], index: 7, kind: input, shape index: {}]
  %s8 = inlined_call_operand.hbm [shape: f32[1,256], index: 8, kind: input, shape index: {}]
  %s9 = inlined_call_operand.hbm [shape: bf16[256,64], index: 9, kind: input, shape index: {}]
  %s10 = inlined_call_operand.hbm [shape: f32[1,64], index: 10, kind: input, shape index: {}]
  %s11 = inlined_call_operand.hbm [shape: f32[2,64], index: 11, kind: output, shape index: {}]
  %s12 = sld [smem:[#allocation0]]
  $region98: #{_forward.1} parent=0
    _
  %s14 = ssub.s32 1, %s12
  %s15 = scalar_select 0, %s14, %s12
  $region1: #{_forward.1} parent=0
    #allocation2 [shape = 'u8[1024]{0}', space=vmem, size = 0x400, scoped, tag = 'input window, operand 0, single buffered']
    #allocation3 [shape = 's32[1]{0}', space=sflag, size = 0x4, scoped, tag = 'scoped memory for _forward.1']
    #allocation4 [shape = 's32[1]{0}', space=sflag, size = 0x4, scoped, tag = 'scoped memory for _forward.1']
    #allocation5 [shape = 'u8[32768]{0}', space=vmem, size = 0x8000, scoped, tag = 'input window, operand 1, single buffered']
    #allocation6 [shape = 's32[1]{0}', space=sflag, size = 0x4, scoped, tag = 'scoped memory for _forward.1']
    #allocation7 [shape = 'u8[1024]{0}', space=vmem, size = 0x400, scoped, tag = 'input window, operand 2, single buffered']
    #allocation8 [shape = 'u8[262144]{0}', space=vmem, size = 0x40000, scoped, tag = 'input window, operand 3, single buffered']
    #allocation9 [shape = 's32[1]{0}', space=sflag, size = 0x4, scoped, tag = 'scoped memory for _forward.1']
    #allocation10 [shape = 'u8[2048]{0}', space=vmem, size = 0x800, scoped, tag = 'input window, operand 4, single buffered']
    #allocation11 [shape = 'u8[524288]{0}', space=vmem, size = 0x80000, scoped, tag = 'input window, operand 5, single buffered']
    #allocation12 [shape = 's32[1]{0}', space=sflag, size = 0x4, scoped, tag = 'scoped memory for _forward.1']
    #allocation13 [shape = 'u8[2048]{0}', space=vmem, size = 0x800, scoped, tag = 'input window, operand 6, single buffered']
    #allocation14 [shape = 'u8[262144]{0}', space=vmem, size = 0x40000, scoped, tag = 'input window, operand 7, single buffered']
    #allocation15 [shape = 's32[1]{0}', space=sflag, size = 0x4, scoped, tag = 'scoped memory for _forward.1']
    #allocation16 [shape = 'u8[1024]{0}', space=vmem, size = 0x400, scoped, tag = 'input window, operand 8, single buffered']
    #allocation17 [shape = 'u8[65536]{0}', space=vmem, size = 0x10000, scoped, tag = 'input window, operand 9, single buffered']
    #allocation18 [shape = 's32[1]{0}', space=sflag, size = 0x4, scoped, tag = 'scoped memory for _forward.1']
    #allocation19 [shape = 'u8[512]{0}', space=vmem, size = 0x400, scoped, tag = 'input window, operand 10, single buffered']
    #allocation20 [shape = 'u8[1024]{0}', space=vmem, size = 0x400, scoped, tag = 'output window, operand 0, single buffered']
    %16 = vsyncpa [#allocation3], 0
    %17 = vsyncpa [#allocation6], 0
    %18 = vsyncpa [#allocation9], 0
    %19 = vsyncpa [#allocation12], 0
    %20 = vsyncpa [#allocation15], 0
    %21 = vsyncpa [#allocation18], 0
    %22 = vsyncpa [#allocation4], 0
    // Predicated region
    $region2: #{_forward.1} parent=1 // pred_check
      _
    $region3: #{_forward.1} parent=1 // pred_check_branch
      %24 = sbr.rel (0) target = $region5
    $region4: #{_forward.1} parent=1 // pred_region
      %s26 = ssub.s32 32, 32
      %27 = vsyncadd [#allocation3], %s26
      %s29 = sshll.u32 [#allocation2], 4
      %s30 = int_to_ptr.vmem [resolvable:$true] %s29
      %32 = dma.hbm_to_vmem [thread:$0]  %s0, 32, %s30, [#allocation3]
    $region5: #{_forward.1} parent=1 // pred_fallthru
      _
    // Predicated region
    $region6: #{_forward.1} parent=1 // pred_check
      _
    $region7: #{_forward.1} parent=1 // pred_check_branch
      %34 = sbr.rel (0) target = $region9
    $region8: #{_forward.1} parent=1 // pred_region
      %s36 = ssub.s32 1024, 1024
      %37 = vsyncadd [#allocation6], %s36
      %s38 = sshll.u32 [#allocation5], 4
      %s39 = int_to_ptr.vmem [resolvable:$true] %s38
      %44 = dma.hbm_to_vmem [thread:$0]  %s1, 1024, %s39, [#allocation6], 128, 128, 8
    $region9: #{_forward.1} parent=1 // pred_fallthru
      _
    // Predicated region
    $region10: #{_forward.1} parent=1 // pred_check
      _
    $region11: #{_forward.1} parent=1 // pred_check_branch
      %46 = sbr.rel (0) target = $region13
    $region12: #{_forward.1} parent=1 // pred_region
      %s48 = ssub.s32 32, 32
      %49 = vsyncadd [#allocation6], %s48
      %s51 = sshll.u32 [#allocation7], 4
      %s52 = int_to_ptr.vmem [resolvable:$true] %s51
      %54 = dma.hbm_to_vmem [thread:$0]  %s2, 32, %s52, [#allocation6]
    $region13: #{_forward.1} parent=1 // pred_fallthru
      _
    // Predicated region
    $region14: #{_forward.1} parent=1 // pred_check
      _
    $region15: #{_forward.1} parent=1 // pred_check_branch
      %56 = sbr.rel (0) target = $region17
    $region16: #{_forward.1} parent=1 // pred_region
      %s58 = ssub.s32 8192, 8192
      %59 = vsyncadd [#allocation9], %s58
      %s60 = sshll.u32 [#allocation8], 4
      %s61 = int_to_ptr.vmem [resolvable:$true] %s60
      %66 = dma.hbm_to_vmem [thread:$0]  %s3, 8192, %s61, [#allocation9], 256, 256, 16
    $region17: #{_forward.1} parent=1 // pred_fallthru
      _
    // Predicated region
    $region18: #{_forward.1} parent=1 // pred_check
      _
    $region19: #{_forward.1} parent=1 // pred_check_branch
      %68 = sbr.rel (0) target = $region21
    $region20: #{_forward.1} parent=1 // pred_region
      %s70 = ssub.s32 64, 64
      %71 = vsyncadd [#allocation9], %s70
      %s73 = sshll.u32 [#allocation10], 4
      %s74 = int_to_ptr.vmem [resolvable:$true] %s73
      %76 = dma.hbm_to_vmem [thread:$0]  %s4, 64, %s74, [#allocation9]
    $region21: #{_forward.1} parent=1 // pred_fallthru
      _
    // Predicated region
    $region22: #{_forward.1} parent=1 // pred_check
      _
    $region23: #{_forward.1} parent=1 // pred_check_branch
      %78 = sbr.rel (0) target = $region25
    $region24: #{_forward.1} parent=1 // pred_region
      %s80 = ssub.s32 16384, 16384
      %81 = vsyncadd [#allocation12], %s80
      %s82 = sshll.u32 [#allocation11], 4
      %s83 = int_to_ptr.vmem [resolvable:$true] %s82
      %88 = dma.hbm_to_vmem [thread:$0]  %s5, 16384, %s83, [#allocation12], 256, 256, 16
    $region25: #{_forward.1} parent=1 // pred_fallthru
      _
    // Predicated region
    $region26: #{_forward.1} parent=1 // pred_check
      _
    $region27: #{_forward.1} parent=1 // pred_check_branch
      %90 = sbr.rel (0) target = $region29
    $region28: #{_forward.1} parent=1 // pred_region
      %s92 = ssub.s32 64, 64
      %93 = vsyncadd [#allocation12], %s92
      %s95 = sshll.u32 [#allocation13], 4
      %s96 = int_to_ptr.vmem [resolvable:$true] %s95
      %98 = dma.hbm_to_vmem [thread:$0]  %s6, 64, %s96, [#allocation12]
    $region29: #{_forward.1} parent=1 // pred_fallthru
      _
    // Predicated region
    $region30: #{_forward.1} parent=1 // pred_check
      _
    $region31: #{_forward.1} parent=1 // pred_check_branch
      %100 = sbr.rel (0) target = $region33
    $region32: #{_forward.1} parent=1 // pred_region
      %s102 = ssub.s32 8192, 8192
      %103 = vsyncadd [#allocation15], %s102
      %s104 = sshll.u32 [#allocation14], 4
      %s105 = int_to_ptr.vmem [resolvable:$true] %s104
      %110 = dma.hbm_to_vmem [thread:$0]  %s7, 8192, %s105, [#allocation15], 128, 128, 8
    $region33: #{_forward.1} parent=1 // pred_fallthru
      _
    // Predicated region
    $region34: #{_forward.1} parent=1 // pred_check
      _
    $region35: #{_forward.1} parent=1 // pred_check_branch
      %112 = sbr.rel (0) target = $region37
    $region36: #{_forward.1} parent=1 // pred_region
      %s114 = ssub.s32 32, 32
      %115 = vsyncadd [#allocation15], %s114
      %s117 = sshll.u32 [#allocation16], 4
      %s118 = int_to_ptr.vmem [resolvable:$true] %s117
      %120 = dma.hbm_to_vmem [thread:$0]  %s8, 32, %s118, [#allocation15]
    $region37: #{_forward.1} parent=1 // pred_fallthru
      _
    // Predicated region
    $region38: #{_forward.1} parent=1 // pred_check
      _
    $region39: #{_forward.1} parent=1 // pred_check_branch
      %122 = sbr.rel (0) target = $region41
    $region40: #{_forward.1} parent=1 // pred_region
      %s124 = ssub.s32 2048, 2048
      %125 = vsyncadd [#allocation18], %s124
      %s126 = sshll.u32 [#allocation17], 4
      %s127 = int_to_ptr.vmem [resolvable:$true] %s126
      %132 = dma.hbm_to_vmem [thread:$0]  %s9, 2048, %s127, [#allocation18], 64, 64, 4
    $region41: #{_forward.1} parent=1 // pred_fallthru
      _
    // Predicated region
    $region42: #{_forward.1} parent=1 // pred_check
      _
    $region43: #{_forward.1} parent=1 // pred_check_branch
      %134 = sbr.rel (0) target = $region45
    $region44: #{_forward.1} parent=1 // pred_region
      %s136 = ssub.s32 16, 16
      %137 = vsyncadd [#allocation18], %s136
      %s139 = sshll.u32 [#allocation19], 4
      %s140 = int_to_ptr.vmem [resolvable:$true] %s139
      %142 = dma.hbm_to_vmem [thread:$0]  %s10, 16, %s140, [#allocation18]
    $region45: #{_forward.1} parent=1 // pred_fallthru
      _
    // Predicated region
    $region46: #{_forward.1} parent=1 // pred_check
      _
    $region47: #{_forward.1} parent=1 // pred_check_branch
      %144 = sbr.rel (0) target = $region49
    $region48: #{_forward.1} parent=1 // pred_region
      %145 = dma.done [#allocation3], 32
    $region49: #{_forward.1} parent=1 // pred_fallthru
      _
    // Predicated region
    $region50: #{_forward.1} parent=1 // pred_check
      _
    $region51: #{_forward.1} parent=1 // pred_check_branch
      %147 = sbr.rel (0) target = $region53
    $region52: #{_forward.1} parent=1 // pred_region
      %148 = dma.done [#allocation6], 1024
    $region53: #{_forward.1} parent=1 // pred_fallthru
      _
    // Predicated region
    $region54: #{_forward.1} parent=1 // pred_check
      _
    $region55: #{_forward.1} parent=1 // pred_check_branch
      %150 = sbr.rel (0) target = $region57
    $region56: #{_forward.1} parent=1 // pred_region
      %151 = dma.done [#allocation6], 32
    $region57: #{_forward.1} parent=1 // pred_fallthru
      _
    // Predicated region
    $region58: #{_forward.1} parent=1 // pred_check
      _
    $region59: #{_forward.1} parent=1 // pred_check_branch
      %153 = sbr.rel (0) target = $region61
    $region60: #{_forward.1} parent=1 // pred_region
      %154 = dma.done [#allocation9], 8192
    $region61: #{_forward.1} parent=1 // pred_fallthru
      _
    // Predicated region
    $region62: #{_forward.1} parent=1 // pred_check
      _
    $region63: #{_forward.1} parent=1 // pred_check_branch
      %156 = sbr.rel (0) target = $region65
    $region64: #{_forward.1} parent=1 // pred_region
      %157 = dma.done [#allocation9], 64
    $region65: #{_forward.1} parent=1 // pred_fallthru
      _
    // Predicated region
    $region66: #{_forward.1} parent=1 // pred_check
      _
    $region67: #{_forward.1} parent=1 // pred_check_branch
      %159 = sbr.rel (0) target = $region69
    $region68: #{_forward.1} parent=1 // pred_region
      %160 = dma.done [#allocation12], 16384
    $region69: #{_forward.1} parent=1 // pred_fallthru
      _
    // Predicated region
    $region70: #{_forward.1} parent=1 // pred_check
      _
    $region71: #{_forward.1} parent=1 // pred_check_branch
      %162 = sbr.rel (0) target = $region73
    $region72: #{_forward.1} parent=1 // pred_region
      %163 = dma.done [#allocation12], 64
    $region73: #{_forward.1} parent=1 // pred_fallthru
      _
    // Predicated region
    $region74: #{_forward.1} parent=1 // pred_check
      _
    $region75: #{_forward.1} parent=1 // pred_check_branch
      %165 = sbr.rel (0) target = $region77
    $region76: #{_forward.1} parent=1 // pred_region
      %166 = dma.done [#allocation15], 8192
    $region77: #{_forward.1} parent=1 // pred_fallthru
      _
    // Predicated region
    $region78: #{_forward.1} parent=1 // pred_check
      _
    $region79: #{_forward.1} parent=1 // pred_check_branch
      %168 = sbr.rel (0) target = $region81
    $region80: #{_forward.1} parent=1 // pred_region
      %169 = dma.done [#allocation15], 32
    $region81: #{_forward.1} parent=1 // pred_fallthru
      _
    // Predicated region
    $region82: #{_forward.1} parent=1 // pred_check
      _
    $region83: #{_forward.1} parent=1 // pred_check_branch
      %171 = sbr.rel (0) target = $region85
    $region84: #{_forward.1} parent=1 // pred_region
      %172 = dma.done [#allocation18], 2048
    $region85: #{_forward.1} parent=1 // pred_fallthru
      _
    // Predicated region
    $region86: #{_forward.1} parent=1 // pred_check
      _
    $region87: #{_forward.1} parent=1 // pred_check_branch
      %174 = sbr.rel (0) target = $region89
    $region88: #{_forward.1} parent=1 // pred_region
      %175 = dma.done [#allocation18], 16
    $region89: #{_forward.1} parent=1 // pred_fallthru
      _
    %v177 = vld [vmem:[#allocation2] sm:$0x3]
    %v178 = vpack.c.bf16 %v177, %v177
    %v179 = vld [vmem:[#allocation5] sm:$0xff]
    %v180 = vld [vmem:[#allocation5 + $0x8] sm:$0xff]
    %v181 = vld [vmem:[#allocation5 + $0x10] sm:$0xff]
    %v182 = vld [vmem:[#allocation5 + $0x18] sm:$0xff]
    %v183 = vld [vmem:[#allocation5 + $0x20] sm:$0xff]
    %v184 = vld [vmem:[#allocation5 + $0x28] sm:$0xff]
    %v185 = vld [vmem:[#allocation5 + $0x30] sm:$0xff]
    %v186 = vld [vmem:[#allocation5 + $0x38] sm:$0xff]
    %v187 = vld [vmem:[#allocation7] sm:$0x3]
    %v189 = vlaneseq
    %v190 = vshrl.u32 %v189, 7
    %v191 = vsub.s32 0, %v190
    %v192 = vrot.slane %v187, %v191
    %v193 = vlaneseq
    %v194 = vshrl.u32 %v193, 7
    %v195 = vsub.s32 1, %v194
    %v196 = vrot.slane %v187, %v195
    %v207 = vunpack.c.l.b16 %v179
    %v208 = vunpack.c.h.b16 %v179
    %v209 = vunpack.c.l.b16 %v180
    %v210 = vunpack.c.h.b16 %v180
    %v211 = vunpack.c.l.b16 %v181
    %v212 = vunpack.c.h.b16 %v181
    %v213 = vunpack.c.l.b16 %v182
    %v214 = vunpack.c.h.b16 %v182
    %v215 = vunpack.c.l.b16 %v183
    %v216 = vunpack.c.h.b16 %v183
    %v217 = vunpack.c.l.b16 %v184
    %v218 = vunpack.c.h.b16 %v184
    %v219 = vunpack.c.l.b16 %v185
    %v220 = vunpack.c.h.b16 %v185
    %v221 = vunpack.c.l.b16 %v186
    %v222 = vunpack.c.h.b16 %v186
    %v223 = vpack.c.b16 %v209, %v207
    %v224 = vpack.c.b16 %v210, %v208
    %v225 = vpack.c.b16 %v213, %v211
    %v226 = vpack.c.b16 %v214, %v212
    %v227 = vpack.c.b16 %v217, %v215
    %v228 = vpack.c.b16 %v218, %v216
    %v229 = vpack.c.b16 %v221, %v219
    %v230 = vpack.c.b16 %v222, %v220
    %vm239 = vcmask 523264
    %v241 = vsel %vm239, %v178, 0
    %243 = vmatprep.subr.bf16.mxu0 %v224
    %244 = vmatpush1.bf16.msra.mxu0 %v223
    %245 = vmatprep.subr.bf16.mxu0 %v226
    %246 = vmatpush1.bf16.msra.mxu0 %v225
    %247 = vmatprep.subr.bf16.mxu0 %v228
    %248 = vmatpush1.bf16.msra.mxu0 %v227
    %249 = vmatprep.subr.bf16.mxu0 %v230
    %250 = vmatpush1.bf16.msra.mxu0 %v229
    %251 = vmatprep.subr.bf16.mxu0 0
    %252 = vmatpush1.bf16.msra.mxu0 0
    %253 = vmatprep.subr.bf16.mxu0 0
    %254 = vmatpush1.bf16.msra.mxu0 0
    %255 = vmatprep.subr.bf16.mxu0 0
    %256 = vmatpush1.bf16.msra.mxu0 0
    %257 = vmatprep.subr.bf16.mxu0 0
    %258 = vmatpush1.bf16.msra.mxu0 0
    %259 = vmatprep.subr.bf16.mxu0 0
    %260 = vmatpush1.bf16.msra.mxu0 0
    %261 = vmatprep.subr.bf16.mxu0 0
    %262 = vmatpush1.bf16.msra.mxu0 0
    %263 = vmatprep.subr.bf16.mxu0 0
    %264 = vmatpush1.bf16.msra.mxu0 0
    %265 = vmatprep.subr.bf16.mxu0 0
    %266 = vmatpush1.bf16.msra.mxu0 0
    %267 = vmatprep.subr.bf16.mxu0 0
    %268 = vmatpush1.bf16.msra.mxu0 0
    %269 = vmatprep.subr.bf16.mxu0 0
    %270 = vmatpush1.bf16.msra.mxu0 0
    %271 = vmatprep.subr.bf16.mxu0 0
    %272 = vmatpush1.bf16.msra.mxu0 0
    %273 = vmatprep.subr.bf16.mxu0 0
    %274 = vmatpush1.bf16.msra.mxu0 0
    %275 = vmatprep.mubr.bf16.mxu0 0
    %276 = vmatmul.mubr.bf16.gmra.mrb[0].mxu0 %v241
    %v277 = vpop.f32.mrb[0].mxu0
    %v278 = vadd.f32 %v192, %v277
    %v279 = vpop.f32.mrb[0].mxu0
    %v280 = vadd.f32 %v196, %v279
    %v281 = vpop.f32.mrb[0].mxu0
    %v282 = vpop.f32.mrb[0].mxu0
    %283 = vdwg.mxu0
    %v284 = vpack.c.bf16 %v278, %v278
    %v285 = vpack.c.bf16 %v280, %v280
    %v286 = vld [vmem:[#allocation8] sm:$0xff]
    %v287 = vld [vmem:[#allocation8 + $0x8] sm:$0xff]
    %v288 = vld [vmem:[#allocation8 + $0x10] sm:$0xff]
    %v289 = vld [vmem:[#allocation8 + $0x18] sm:$0xff]
    %v290 = vld [vmem:[#allocation8 + $0x20] sm:$0xff]
    %v291 = vld [vmem:[#allocation8 + $0x28] sm:$0xff]
    %v292 = vld [vmem:[#allocation8 + $0x30] sm:$0xff]
    %v293 = vld [vmem:[#allocation8 + $0x38] sm:$0xff]
    %v294 = vld [vmem:[#allocation8 + $0x40] sm:$0xff]
    %v295 = vld [vmem:[#allocation8 + $0x48] sm:$0xff]
    %v296 = vld [vmem:[#allocation8 + $0x50] sm:$0xff]
    %v297 = vld [vmem:[#allocation8 + $0x58] sm:$0xff]
    %v298 = vld [vmem:[#allocation8 + $0x60] sm:$0xff]
    %v299 = vld [vmem:[#allocation8 + $0x68] sm:$0xff]
    %v300 = vld [vmem:[#allocation8 + $0x70] sm:$0xff]
    %v301 = vld [vmem:[#allocation8 + $0x78] sm:$0xff]
    %v302 = vld [vmem:[#allocation8 + $0x80] sm:$0xff]
    %v303 = vld [vmem:[#allocation8 + $0x88] sm:$0xff]
    %v304 = vld [vmem:[#allocation8 + $0x90] sm:$0xff]
    %v305 = vld [vmem:[#allocation8 + $0x98] sm:$0xff]
    %v306 = vld [vmem:[#allocation8 + $0xa0] sm:$0xff]
    %v307 = vld [vmem:[#allocation8 + $0xa8] sm:$0xff]
    %v308 = vld [vmem:[#allocation8 + $0xb0] sm:$0xff]
    %v309 = vld [vmem:[#allocation8 + $0xb8] sm:$0xff]
    %v310 = vld [vmem:[#allocation8 + $0xc0] sm:$0xff]
    %v311 = vld [vmem:[#allocation8 + $0xc8] sm:$0xff]
    %v312 = vld [vmem:[#allocation8 + $0xd0] sm:$0xff]
    %v313 = vld [vmem:[#allocation8 + $0xd8] sm:$0xff]
    %v314 = vld [vmem:[#allocation8 + $0xe0] sm:$0xff]
    %v315 = vld [vmem:[#allocation8 + $0xe8] sm:$0xff]
    %v316 = vld [vmem:[#allocation8 + $0xf0] sm:$0xff]
    %v317 = vld [vmem:[#allocation8 + $0xf8] sm:$0xff]
    %v318 = vld [vmem:[#allocation8 + $0x100] sm:$0xff]
    %v319 = vld [vmem:[#allocation8 + $0x108] sm:$0xff]
    %v320 = vld [vmem:[#allocation8 + $0x110] sm:$0xff]
    %v321 = vld [vmem:[#allocation8 + $0x118] sm:$0xff]
    %v322 = vld [vmem:[#allocation8 + $0x120] sm:$0xff]
    %v323 = vld [vmem:[#allocation8 + $0x128] sm:$0xff]
    %v324 = vld [vmem:[#allocation8 + $0x130] sm:$0xff]
    %v325 = vld [vmem:[#allocation8 + $0x138] sm:$0xff]
    %v326 = vld [vmem:[#allocation8 + $0x140] sm:$0xff]
    %v327 = vld [vmem:[#allocation8 + $0x148] sm:$0xff]
    %v328 = vld [vmem:[#allocation8 + $0x150] sm:$0xff]
    %v329 = vld [vmem:[#allocation8 + $0x158] sm:$0xff]
    %v330 = vld [vmem:[#allocation8 + $0x160] sm:$0xff]
    %v331 = vld [vmem:[#allocation8 + $0x168] sm:$0xff]
    %v332 = vld [vmem:[#allocation8 + $0x170] sm:$0xff]
    %v333 = vld [vmem:[#allocation8 + $0x178] sm:$0xff]
    %v334 = vld [vmem:[#allocation8 + $0x180] sm:$0xff]
    %v335 = vld [vmem:[#allocation8 + $0x188] sm:$0xff]
    %v336 = vld [vmem:[#allocation8 + $0x190] sm:$0xff]
    %v337 = vld [vmem:[#allocation8 + $0x198] sm:$0xff]
    %v338 = vld [vmem:[#allocation8 + $0x1a0] sm:$0xff]
    %v339 = vld [vmem:[#allocation8 + $0x1a8] sm:$0xff]
    %v340 = vld [vmem:[#allocation8 + $0x1b0] sm:$0xff]
    %v341 = vld [vmem:[#allocation8 + $0x1b8] sm:$0xff]
    %v342 = vld [vmem:[#allocation8 + $0x1c0] sm:$0xff]
    %v343 = vld [vmem:[#allocation8 + $0x1c8] sm:$0xff]
    %v344 = vld [vmem:[#allocation8 + $0x1d0] sm:$0xff]
    %v345 = vld [vmem:[#allocation8 + $0x1d8] sm:$0xff]
    %v346 = vld [vmem:[#allocation8 + $0x1e0] sm:$0xff]
    %v347 = vld [vmem:[#allocation8 + $0x1e8] sm:$0xff]
    %v348 = vld [vmem:[#allocation8 + $0x1f0] sm:$0xff]
    %v349 = vld [vmem:[#allocation8 + $0x1f8] sm:$0xff]
    %v350 = vld [vmem:[#allocation10] sm:$0xf]
    %v352 = vlaneseq
    %v353 = vshrl.u32 %v352, 7
    %v354 = vsub.s32 0, %v353
    %v355 = vrot.slane %v350, %v354
    %v356 = vlaneseq
    %v357 = vshrl.u32 %v356, 7
    %v358 = vsub.s32 1, %v357
    %v359 = vrot.slane %v350, %v358
    %v360 = vlaneseq
    %v361 = vshrl.u32 %v360, 7
    %v362 = vsub.s32 2, %v361
    %v363 = vrot.slane %v350, %v362
    %v364 = vlaneseq
    %v365 = vshrl.u32 %v364, 7
    %v366 = vsub.s32 3, %v365
    %v367 = vrot.slane %v350, %v366
    %v436 = vunpack.c.l.b16 %v286
    %v437 = vunpack.c.h.b16 %v286
    %v438 = vunpack.c.l.b16 %v287
    %v439 = vunpack.c.h.b16 %v287
    %v440 = vunpack.c.l.b16 %v288
    %v441 = vunpack.c.h.b16 %v288
    %v442 = vunpack.c.l.b16 %v289
    %v443 = vunpack.c.h.b16 %v289
    %v444 = vunpack.c.l.b16 %v290
    %v445 = vunpack.c.h.b16 %v290
    %v446 = vunpack.c.l.b16 %v291
    %v447 = vunpack.c.h.b16 %v291
    %v448 = vunpack.c.l.b16 %v292
    %v449 = vunpack.c.h.b16 %v292
    %v450 = vunpack.c.l.b16 %v293
    %v451 = vunpack.c.h.b16 %v293
    %v452 = vunpack.c.l.b16 %v294
    %v453 = vunpack.c.h.b16 %v294
    %v454 = vunpack.c.l.b16 %v295
    %v455 = vunpack.c.h.b16 %v295
    %v456 = vunpack.c.l.b16 %v296
    %v457 = vunpack.c.h.b16 %v296
    %v458 = vunpack.c.l.b16 %v297
    %v459 = vunpack.c.h.b16 %v297
    %v460 = vunpack.c.l.b16 %v298
    %v461 = vunpack.c.h.b16 %v298
    %v462 = vunpack.c.l.b16 %v299
    %v463 = vunpack.c.h.b16 %v299
    %v464 = vunpack.c.l.b16 %v300
    %v465 = vunpack.c.h.b16 %v300
    %v466 = vunpack.c.l.b16 %v301
    %v467 = vunpack.c.h.b16 %v301
    %v468 = vunpack.c.l.b16 %v302
    %v469 = vunpack.c.h.b16 %v302
    %v470 = vunpack.c.l.b16 %v303
    %v471 = vunpack.c.h.b16 %v303
    %v472 = vunpack.c.l.b16 %v304
    %v473 = vunpack.c.h.b16 %v304
    %v474 = vunpack.c.l.b16 %v305
    %v475 = vunpack.c.h.b16 %v305
    %v476 = vunpack.c.l.b16 %v306
    %v477 = vunpack.c.h.b16 %v306
    %v478 = vunpack.c.l.b16 %v307
    %v479 = vunpack.c.h.b16 %v307
    %v480 = vunpack.c.l.b16 %v308
    %v481 = vunpack.c.h.b16 %v308
    %v482 = vunpack.c.l.b16 %v309
    %v483 = vunpack.c.h.b16 %v309
    %v484 = vunpack.c.l.b16 %v310
    %v485 = vunpack.c.h.b16 %v310
    %v486 = vunpack.c.l.b16 %v311
    %v487 = vunpack.c.h.b16 %v311
    %v488 = vunpack.c.l.b16 %v312
    %v489 = vunpack.c.h.b16 %v312
    %v490 = vunpack.c.l.b16 %v313
    %v491 = vunpack.c.h.b16 %v313
    %v492 = vunpack.c.l.b16 %v314
    %v493 = vunpack.c.h.b16 %v314
    %v494 = vunpack.c.l.b16 %v315
    %v495 = vunpack.c.h.b16 %v315
    %v496 = vunpack.c.l.b16 %v316
    %v497 = vunpack.c.h.b16 %v316
    %v498 = vunpack.c.l.b16 %v317
    %v499 = vunpack.c.h.b16 %v317
    %v500 = vunpack.c.l.b16 %v318
    %v501 = vunpack.c.h.b16 %v318
    %v502 = vunpack.c.l.b16 %v319
    %v503 = vunpack.c.h.b16 %v319
    %v504 = vunpack.c.l.b16 %v320
    %v505 = vunpack.c.h.b16 %v320
    %v506 = vunpack.c.l.b16 %v321
    %v507 = vunpack.c.h.b16 %v321
    %v508 = vunpack.c.l.b16 %v322
    %v509 = vunpack.c.h.b16 %v322
    %v510 = vunpack.c.l.b16 %v323
    %v511 = vunpack.c.h.b16 %v323
    %v512 = vunpack.c.l.b16 %v324
    %v513 = vunpack.c.h.b16 %v324
    %v514 = vunpack.c.l.b16 %v325
    %v515 = vunpack.c.h.b16 %v325
    %v516 = vunpack.c.l.b16 %v326
    %v517 = vunpack.c.h.b16 %v326
    %v518 = vunpack.c.l.b16 %v327
    %v519 = vunpack.c.h.b16 %v327
    %v520 = vunpack.c.l.b16 %v328
    %v521 = vunpack.c.h.b16 %v328
    %v522 = vunpack.c.l.b16 %v329
    %v523 = vunpack.c.h.b16 %v329
    %v524 = vunpack.c.l.b16 %v330
    %v525 = vunpack.c.h.b16 %v330
    %v526 = vunpack.c.l.b16 %v331
    %v527 = vunpack.c.h.b16 %v331
    %v528 = vunpack.c.l.b16 %v332
    %v529 = vunpack.c.h.b16 %v332
    %v530 = vunpack.c.l.b16 %v333
    %v531 = vunpack.c.h.b16 %v333
    %v532 = vunpack.c.l.b16 %v334
    %v533 = vunpack.c.h.b16 %v334
    %v534 = vunpack.c.l.b16 %v335
    %v535 = vunpack.c.h.b16 %v335
    %v536 = vunpack.c.l.b16 %v336
    %v537 = vunpack.c.h.b16 %v336
    %v538 = vunpack.c.l.b16 %v337
    %v539 = vunpack.c.h.b16 %v337
    %v540 = vunpack.c.l.b16 %v338
    %v541 = vunpack.c.h.b16 %v338
    %v542 = vunpack.c.l.b16 %v339
    %v543 = vunpack.c.h.b16 %v339
    %v544 = vunpack.c.l.b16 %v340
    %v545 = vunpack.c.h.b16 %v340
    %v546 = vunpack.c.l.b16 %v341
    %v547 = vunpack.c.h.b16 %v341
    %v548 = vunpack.c.l.b16 %v342
    %v549 = vunpack.c.h.b16 %v342
    %v550 = vunpack.c.l.b16 %v343
    %v551 = vunpack.c.h.b16 %v343
    %v552 = vunpack.c.l.b16 %v344
    %v553 = vunpack.c.h.b16 %v344
    %v554 = vunpack.c.l.b16 %v345
    %v555 = vunpack.c.h.b16 %v345
    %v556 = vunpack.c.l.b16 %v346
    %v557 = vunpack.c.h.b16 %v346
    %v558 = vunpack.c.l.b16 %v347
    %v559 = vunpack.c.h.b16 %v347
    %v560 = vunpack.c.l.b16 %v348
    %v561 = vunpack.c.h.b16 %v348
    %v562 = vunpack.c.l.b16 %v349
    %v563 = vunpack.c.h.b16 %v349
    %v564 = vpack.c.b16 %v440, %v436
    %v565 = vpack.c.b16 %v441, %v437
    %v566 = vpack.c.b16 %v442, %v438
    %v567 = vpack.c.b16 %v443, %v439
    %v568 = vpack.c.b16 %v448, %v444
    %v569 = vpack.c.b16 %v449, %v445
    %v570 = vpack.c.b16 %v450, %v446
    %v571 = vpack.c.b16 %v451, %v447
    %v572 = vpack.c.b16 %v456, %v452
    %v573 = vpack.c.b16 %v457, %v453
    %v574 = vpack.c.b16 %v458, %v454
    %v575 = vpack.c.b16 %v459, %v455
    %v576 = vpack.c.b16 %v464, %v460
    %v577 = vpack.c.b16 %v465, %v461
    %v578 = vpack.c.b16 %v466, %v462
    %v579 = vpack.c.b16 %v467, %v463
    %v580 = vpack.c.b16 %v472, %v468
    %v581 = vpack.c.b16 %v473, %v469
    %v582 = vpack.c.b16 %v474, %v470
    %v583 = vpack.c.b16 %v475, %v471
    %v584 = vpack.c.b16 %v480, %v476
    %v585 = vpack.c.b16 %v481, %v477
    %v586 = vpack.c.b16 %v482, %v478
    %v587 = vpack.c.b16 %v483, %v479
    %v588 = vpack.c.b16 %v488, %v484
    %v589 = vpack.c.b16 %v489, %v485
    %v590 = vpack.c.b16 %v490, %v486
    %v591 = vpack.c.b16 %v491, %v487
    %v592 = vpack.c.b16 %v496, %v492
    %v593 = vpack.c.b16 %v497, %v493
    %v594 = vpack.c.b16 %v498, %v494
    %v595 = vpack.c.b16 %v499, %v495
    %v596 = vpack.c.b16 %v504, %v500
    %v597 = vpack.c.b16 %v505, %v501
    %v598 = vpack.c.b16 %v506, %v502
    %v599 = vpack.c.b16 %v507, %v503
    %v600 = vpack.c.b16 %v512, %v508
    %v601 = vpack.c.b16 %v513, %v509
    %v602 = vpack.c.b16 %v514, %v510
    %v603 = vpack.c.b16 %v515, %v511
    %v604 = vpack.c.b16 %v520, %v516
    %v605 = vpack.c.b16 %v521, %v517
    %v606 = vpack.c.b16 %v522, %v518
    %v607 = vpack.c.b16 %v523, %v519
    %v608 = vpack.c.b16 %v528, %v524
    %v609 = vpack.c.b16 %v529, %v525
    %v610 = vpack.c.b16 %v530, %v526
    %v611 = vpack.c.b16 %v531, %v527
    %v612 = vpack.c.b16 %v536, %v532
    %v613 = vpack.c.b16 %v537, %v533
    %v614 = vpack.c.b16 %v538, %v534
    %v615 = vpack.c.b16 %v539, %v535
    %v616 = vpack.c.b16 %v544, %v540
    %v617 = vpack.c.b16 %v545, %v541
    %v618 = vpack.c.b16 %v546, %v542
    %v619 = vpack.c.b16 %v547, %v543
    %v620 = vpack.c.b16 %v552, %v548
    %v621 = vpack.c.b16 %v553, %v549
    %v622 = vpack.c.b16 %v554, %v550
    %v623 = vpack.c.b16 %v555, %v551
    %v624 = vpack.c.b16 %v560, %v556
    %v625 = vpack.c.b16 %v561, %v557
    %v626 = vpack.c.b16 %v562, %v558
    %v627 = vpack.c.b16 %v563, %v559
    %692 = vmatprep.subr.bf16.mxu0 %v565
    %693 = vmatpush1.bf16.msra.mxu0 %v564
    %694 = vmatprep.subr.bf16.mxu0 %v569
    %695 = vmatpush1.bf16.msra.mxu0 %v568
    %696 = vmatprep.subr.bf16.mxu0 %v573
    %697 = vmatpush1.bf16.msra.mxu0 %v572
    %698 = vmatprep.subr.bf16.mxu0 %v577
    %699 = vmatpush1.bf16.msra.mxu0 %v576
    %700 = vmatprep.subr.bf16.mxu0 %v581
    %701 = vmatpush1.bf16.msra.mxu0 %v580
    %702 = vmatprep.subr.bf16.mxu0 %v585
    %703 = vmatpush1.bf16.msra.mxu0 %v584
    %704 = vmatprep.subr.bf16.mxu0 %v589
    %705 = vmatpush1.bf16.msra.mxu0 %v588
    %706 = vmatprep.subr.bf16.mxu0 %v593
    %707 = vmatpush1.bf16.msra.mxu0 %v592
    %708 = vmatprep.subr.bf16.mxu0 %v597
    %709 = vmatpush1.bf16.msra.mxu0 %v596
    %710 = vmatprep.subr.bf16.mxu0 %v601
    %711 = vmatpush1.bf16.msra.mxu0 %v600
    %712 = vmatprep.subr.bf16.mxu0 %v605
    %713 = vmatpush1.bf16.msra.mxu0 %v604
    %714 = vmatprep.subr.bf16.mxu0 %v609
    %715 = vmatpush1.bf16.msra.mxu0 %v608
    %716 = vmatprep.subr.bf16.mxu0 %v613
    %717 = vmatpush1.bf16.msra.mxu0 %v612
    %718 = vmatprep.subr.bf16.mxu0 %v617
    %719 = vmatpush1.bf16.msra.mxu0 %v616
    %720 = vmatprep.subr.bf16.mxu0 %v621
    %721 = vmatpush1.bf16.msra.mxu0 %v620
    %722 = vmatprep.subr.bf16.mxu0 %v625
    %723 = vmatpush1.bf16.msra.mxu0 %v624
    %724 = vmatprep.mubr.bf16.mxu0 %v285
    %725 = vmatmul.mubr.bf16.gmra.mrb[0].mxu0 %v284
    %v726 = vpop.f32.mrb[0].mxu0
    %v727 = vadd.f32 %v355, %v726
    %v728 = vpop.f32.mrb[0].mxu0
    %v729 = vadd.f32 %v359, %v728
    %v730 = vpop.f32.mrb[0].mxu0
    %v731 = vpop.f32.mrb[0].mxu0
    %732 = vdwg.mxu0
    %733 = vmatprep.subr.bf16.mxu0 %v567
    %734 = vmatpush1.bf16.msra.mxu0 %v566
    %735 = vmatprep.subr.bf16.mxu0 %v571
    %736 = vmatpush1.bf16.msra.mxu0 %v570
    %737 = vmatprep.subr.bf16.mxu0 %v575
    %738 = vmatpush1.bf16.msra.mxu0 %v574
    %739 = vmatprep.subr.bf16.mxu0 %v579
    %740 = vmatpush1.bf16.msra.mxu0 %v578
    %741 = vmatprep.subr.bf16.mxu0 %v583
    %742 = vmatpush1.bf16.msra.mxu0 %v582
    %743 = vmatprep.subr.bf16.mxu0 %v587
    %744 = vmatpush1.bf16.msra.mxu0 %v586
    %745 = vmatprep.subr.bf16.mxu0 %v591
    %746 = vmatpush1.bf16.msra.mxu0 %v590
    %747 = vmatprep.subr.bf16.mxu0 %v595
    %748 = vmatpush1.bf16.msra.mxu0 %v594
    %749 = vmatprep.subr.bf16.mxu0 %v599
    %750 = vmatpush1.bf16.msra.mxu0 %v598
    %751 = vmatprep.subr.bf16.mxu0 %v603
    %752 = vmatpush1.bf16.msra.mxu0 %v602
    %753 = vmatprep.subr.bf16.mxu0 %v607
    %754 = vmatpush1.bf16.msra.mxu0 %v606
    %755 = vmatprep.subr.bf16.mxu0 %v611
    %756 = vmatpush1.bf16.msra.mxu0 %v610
    %757 = vmatprep.subr.bf16.mxu0 %v615
    %758 = vmatpush1.bf16.msra.mxu0 %v614
    %759 = vmatprep.subr.bf16.mxu0 %v619
    %760 = vmatpush1.bf16.msra.mxu0 %v618
    %761 = vmatprep.subr.bf16.mxu0 %v623
    %762 = vmatpush1.bf16.msra.mxu0 %v622
    %763 = vmatprep.subr.bf16.mxu0 %v627
    %764 = vmatpush1.bf16.msra.mxu0 %v626
    %765 = vmatprep.mubr.bf16.mxu0 %v285
    %766 = vmatmul.mubr.bf16.gmra.mrb[0].mxu0 %v284
    %v767 = vpop.f32.mrb[0].mxu0
    %v768 = vadd.f32 %v363, %v767
    %v769 = vpop.f32.mrb[0].mxu0
    %v770 = vadd.f32 %v367, %v769
    %v771 = vpop.f32.mrb[0].mxu0
    %v772 = vpop.f32.mrb[0].mxu0
    %773 = vdwg.mxu0
    %v774 = vpack.c.bf16 %v727, %v727
    %v775 = vpack.c.bf16 %v729, %v729
    %v776 = vpack.c.bf16 %v768, %v768
    %v777 = vpack.c.bf16 %v770, %v770
    %v778 = vld [vmem:[#allocation11] sm:$0xff]
    %v779 = vld [vmem:[#allocation11 + $0x8] sm:$0xff]
    %v780 = vld [vmem:[#allocation11 + $0x10] sm:$0xff]
    %v781 = vld [vmem:[#allocation11 + $0x18] sm:$0xff]
    %v782 = vld [vmem:[#allocation11 + $0x20] sm:$0xff]
    %v783 = vld [vmem:[#allocation11 + $0x28] sm:$0xff]
    %v784 = vld [vmem:[#allocation11 + $0x30] sm:$0xff]
    %v785 = vld [vmem:[#allocation11 + $0x38] sm:$0xff]
    %v786 = vld [vmem:[#allocation11 + $0x40] sm:$0xff]
    %v787 = vld [vmem:[#allocation11 + $0x48] sm:$0xff]
    %v788 = vld [vmem:[#allocation11 + $0x50] sm:$0xff]
    %v789 = vld [vmem:[#allocation11 + $0x58] sm:$0xff]
    %v790 = vld [vmem:[#allocation11 + $0x60] sm:$0xff]
    %v791 = vld [vmem:[#allocation11 + $0x68] sm:$0xff]
    %v792 = vld [vmem:[#allocation11 + $0x70] sm:$0xff]
    %v793 = vld [vmem:[#allocation11 + $0x78] sm:$0xff]
    %v794 = vld [vmem:[#allocation11 + $0x80] sm:$0xff]
    %v795 = vld [vmem:[#allocation11 + $0x88] sm:$0xff]
    %v796 = vld [vmem:[#allocation11 + $0x90] sm:$0xff]
    %v797 = vld [vmem:[#allocation11 + $0x98] sm:$0xff]
    %v798 = vld [vmem:[#allocation11 + $0xa0] sm:$0xff]
    %v799 = vld [vmem:[#allocation11 + $0xa8] sm:$0xff]
    %v800 = vld [vmem:[#allocation11 + $0xb0] sm:$0xff]
    %v801 = vld [vmem:[#allocation11 + $0xb8] sm:$0xff]
    %v802 = vld [vmem:[#allocation11 + $0xc0] sm:$0xff]
    %v803 = vld [vmem:[#allocation11 + $0xc8] sm:$0xff]
    %v804 = vld [vmem:[#allocation11 + $0xd0] sm:$0xff]
    %v805 = vld [vmem:[#allocation11 + $0xd8] sm:$0xff]
    %v806 = vld [vmem:[#allocation11 + $0xe0] sm:$0xff]
    %v807 = vld [vmem:[#allocation11 + $0xe8] sm:$0xff]
    %v808 = vld [vmem:[#allocation11 + $0xf0] sm:$0xff]
    %v809 = vld [vmem:[#allocation11 + $0xf8] sm:$0xff]
    %v810 = vld [vmem:[#allocation11 + $0x100] sm:$0xff]
    %v811 = vld [vmem:[#allocation11 + $0x108] sm:$0xff]
    %v812 = vld [vmem:[#allocation11 + $0x110] sm:$0xff]
    %v813 = vld [vmem:[#allocation11 + $0x118] sm:$0xff]
    %v814 = vld [vmem:[#allocation11 + $0x120] sm:$0xff]
    %v815 = vld [vmem:[#allocation11 + $0x128] sm:$0xff]
    %v816 = vld [vmem:[#allocation11 + $0x130] sm:$0xff]
    %v817 = vld [vmem:[#allocation11 + $0x138] sm:$0xff]
    %v818 = vld [vmem:[#allocation11 + $0x140] sm:$0xff]
    %v819 = vld [vmem:[#allocation11 + $0x148] sm:$0xff]
    %v820 = vld [vmem:[#allocation11 + $0x150] sm:$0xff]
    %v821 = vld [vmem:[#allocation11 + $0x158] sm:$0xff]
    %v822 = vld [vmem:[#allocation11 + $0x160] sm:$0xff]
    %v823 = vld [vmem:[#allocation11 + $0x168] sm:$0xff]
    %v824 = vld [vmem:[#allocation11 + $0x170] sm:$0xff]
    %v825 = vld [vmem:[#allocation11 + $0x178] sm:$0xff]
    %v826 = vld [vmem:[#allocation11 + $0x180] sm:$0xff]
    %v827 = vld [vmem:[#allocation11 + $0x188] sm:$0xff]
    %v828 = vld [vmem:[#allocation11 + $0x190] sm:$0xff]
    %v829 = vld [vmem:[#allocation11 + $0x198] sm:$0xff]
    %v830 = vld [vmem:[#allocation11 + $0x1a0] sm:$0xff]
    %v831 = vld [vmem:[#allocation11 + $0x1a8] sm:$0xff]
    %v832 = vld [vmem:[#allocation11 + $0x1b0] sm:$0xff]
    %v833 = vld [vmem:[#allocation11 + $0x1b8] sm:$0xff]
    %v834 = vld [vmem:[#allocation11 + $0x1c0] sm:$0xff]
    %v835 = vld [vmem:[#allocation11 + $0x1c8] sm:$0xff]
    %v836 = vld [vmem:[#allocation11 + $0x1d0] sm:$0xff]
    %v837 = vld [vmem:[#allocation11 + $0x1d8] sm:$0xff]
    %v838 = vld [vmem:[#allocation11 + $0x1e0] sm:$0xff]
    %v839 = vld [vmem:[#allocation11 + $0x1e8] sm:$0xff]
    %v840 = vld [vmem:[#allocation11 + $0x1f0] sm:$0xff]
    %v841 = vld [vmem:[#allocation11 + $0x1f8] sm:$0xff]
    %v842 = vld [vmem:[#allocation11 + $0x200] sm:$0xff]
    %v843 = vld [vmem:[#allocation11 + $0x208] sm:$0xff]
    %v844 = vld [vmem:[#allocation11 + $0x210] sm:$0xff]
    %v845 = vld [vmem:[#allocation11 + $0x218] sm:$0xff]
    %v846 = vld [vmem:[#allocation11 + $0x220] sm:$0xff]
    %v847 = vld [vmem:[#allocation11 + $0x228] sm:$0xff]
    %v848 = vld [vmem:[#allocation11 + $0x230] sm:$0xff]
    %v849 = vld [vmem:[#allocation11 + $0x238] sm:$0xff]
    %v850 = vld [vmem:[#allocation11 + $0x240] sm:$0xff]
    %v851 = vld [vmem:[#allocation11 + $0x248] sm:$0xff]
    %v852 = vld [vmem:[#allocation11 + $0x250] sm:$0xff]
    %v853 = vld [vmem:[#allocation11 + $0x258] sm:$0xff]
    %v854 = vld [vmem:[#allocation11 + $0x260] sm:$0xff]
    %v855 = vld [vmem:[#allocation11 + $0x268] sm:$0xff]
    %v856 = vld [vmem:[#allocation11 + $0x270] sm:$0xff]
    %v857 = vld [vmem:[#allocation11 + $0x278] sm:$0xff]
    %v858 = vld [vmem:[#allocation11 + $0x280] sm:$0xff]
    %v859 = vld [vmem:[#allocation11 + $0x288] sm:$0xff]
    %v860 = vld [vmem:[#allocation11 + $0x290] sm:$0xff]
    %v861 = vld [vmem:[#allocation11 + $0x298] sm:$0xff]
    %v862 = vld [vmem:[#allocation11 + $0x2a0] sm:$0xff]
    %v863 = vld [vmem:[#allocation11 + $0x2a8] sm:$0xff]
    %v864 = vld [vmem:[#allocation11 + $0x2b0] sm:$0xff]
    %v865 = vld [vmem:[#allocation11 + $0x2b8] sm:$0xff]
    %v866 = vld [vmem:[#allocation11 + $0x2c0] sm:$0xff]
    %v867 = vld [vmem:[#allocation11 + $0x2c8] sm:$0xff]
    %v868 = vld [vmem:[#allocation11 + $0x2d0] sm:$0xff]
    %v869 = vld [vmem:[#allocation11 + $0x2d8] sm:$0xff]
    %v870 = vld [vmem:[#allocation11 + $0x2e0] sm:$0xff]
    %v871 = vld [vmem:[#allocation11 + $0x2e8] sm:$0xff]
    %v872 = vld [vmem:[#allocation11 + $0x2f0] sm:$0xff]
    %v873 = vld [vmem:[#allocation11 + $0x2f8] sm:$0xff]
    %v874 = vld [vmem:[#allocation11 + $0x300] sm:$0xff]
    %v875 = vld [vmem:[#allocation11 + $0x308] sm:$0xff]
    %v876 = vld [vmem:[#allocation11 + $0x310] sm:$0xff]
    %v877 = vld [vmem:[#allocation11 + $0x318] sm:$0xff]
    %v878 = vld [vmem:[#allocation11 + $0x320] sm:$0xff]
    %v879 = vld [vmem:[#allocation11 + $0x328] sm:$0xff]
    %v880 = vld [vmem:[#allocation11 + $0x330] sm:$0xff]
    %v881 = vld [vmem:[#allocation11 + $0x338] sm:$0xff]
    %v882 = vld [vmem:[#allocation11 + $0x340] sm:$0xff]
    %v883 = vld [vmem:[#allocation11 + $0x348] sm:$0xff]
    %v884 = vld [vmem:[#allocation11 + $0x350] sm:$0xff]
    %v885 = vld [vmem:[#allocation11 + $0x358] sm:$0xff]
    %v886 = vld [vmem:[#allocation11 + $0x360] sm:$0xff]
    %v887 = vld [vmem:[#allocation11 + $0x368] sm:$0xff]
    %v888 = vld [vmem:[#allocation11 + $0x370] sm:$0xff]
    %v889 = vld [vmem:[#allocation11 + $0x378] sm:$0xff]
    %v890 = vld [vmem:[#allocation11 + $0x380] sm:$0xff]
    %v891 = vld [vmem:[#allocation11 + $0x388] sm:$0xff]
    %v892 = vld [vmem:[#allocation11 + $0x390] sm:$0xff]
    %v893 = vld [vmem:[#allocation11 + $0x398] sm:$0xff]
    %v894 = vld [vmem:[#allocation11 + $0x3a0] sm:$0xff]
    %v895 = vld [vmem:[#allocation11 + $0x3a8] sm:$0xff]
    %v896 = vld [vmem:[#allocation11 + $0x3b0] sm:$0xff]
    %v897 = vld [vmem:[#allocation11 + $0x3b8] sm:$0xff]
    %v898 = vld [vmem:[#allocation11 + $0x3c0] sm:$0xff]
    %v899 = vld [vmem:[#allocation11 + $0x3c8] sm:$0xff]
    %v900 = vld [vmem:[#allocation11 + $0x3d0] sm:$0xff]
    %v901 = vld [vmem:[#allocation11 + $0x3d8] sm:$0xff]
    %v902 = vld [vmem:[#allocation11 + $0x3e0] sm:$0xff]
    %v903 = vld [vmem:[#allocation11 + $0x3e8] sm:$0xff]
    %v904 = vld [vmem:[#allocation11 + $0x3f0] sm:$0xff]
    %v905 = vld [vmem:[#allocation11 + $0x3f8] sm:$0xff]
    %v906 = vld [vmem:[#allocation13] sm:$0xf]
    %v908 = vlaneseq
    %v909 = vshrl.u32 %v908, 7
    %v910 = vsub.s32 0, %v909
    %v911 = vrot.slane %v906, %v910
    %v912 = vlaneseq
    %v913 = vshrl.u32 %v912, 7
    %v914 = vsub.s32 1, %v913
    %v915 = vrot.slane %v906, %v914
    %v916 = vlaneseq
    %v917 = vshrl.u32 %v916, 7
    %v918 = vsub.s32 2, %v917
    %v919 = vrot.slane %v906, %v918
    %v920 = vlaneseq
    %v921 = vshrl.u32 %v920, 7
    %v922 = vsub.s32 3, %v921
    %v923 = vrot.slane %v906, %v922
    %v1056 = vunpack.c.l.b16 %v778
    %v1057 = vunpack.c.h.b16 %v778
    %v1058 = vunpack.c.l.b16 %v779
    %v1059 = vunpack.c.h.b16 %v779
    %v1060 = vunpack.c.l.b16 %v780
    %v1061 = vunpack.c.h.b16 %v780
    %v1062 = vunpack.c.l.b16 %v781
    %v1063 = vunpack.c.h.b16 %v781
    %v1064 = vunpack.c.l.b16 %v782
    %v1065 = vunpack.c.h.b16 %v782
    %v1066 = vunpack.c.l.b16 %v783
    %v1067 = vunpack.c.h.b16 %v783
    %v1068 = vunpack.c.l.b16 %v784
    %v1069 = vunpack.c.h.b16 %v784
    %v1070 = vunpack.c.l.b16 %v785
    %v1071 = vunpack.c.h.b16 %v785
    %v1072 = vunpack.c.l.b16 %v786
    %v1073 = vunpack.c.h.b16 %v786
    %v1074 = vunpack.c.l.b16 %v787
    %v1075 = vunpack.c.h.b16 %v787
    %v1076 = vunpack.c.l.b16 %v788
    %v1077 = vunpack.c.h.b16 %v788
    %v1078 = vunpack.c.l.b16 %v789
    %v1079 = vunpack.c.h.b16 %v789
    %v1080 = vunpack.c.l.b16 %v790
    %v1081 = vunpack.c.h.b16 %v790
    %v1082 = vunpack.c.l.b16 %v791
    %v1083 = vunpack.c.h.b16 %v791
    %v1084 = vunpack.c.l.b16 %v792
    %v1085 = vunpack.c.h.b16 %v792
    %v1086 = vunpack.c.l.b16 %v793
    %v1087 = vunpack.c.h.b16 %v793
    %v1088 = vunpack.c.l.b16 %v794
    %v1089 = vunpack.c.h.b16 %v794
    %v1090 = vunpack.c.l.b16 %v795
    %v1091 = vunpack.c.h.b16 %v795
    %v1092 = vunpack.c.l.b16 %v796
    %v1093 = vunpack.c.h.b16 %v796
    %v1094 = vunpack.c.l.b16 %v797
    %v1095 = vunpack.c.h.b16 %v797
    %v1096 = vunpack.c.l.b16 %v798
    %v1097 = vunpack.c.h.b16 %v798
    %v1098 = vunpack.c.l.b16 %v799
    %v1099 = vunpack.c.h.b16 %v799
    %v1100 = vunpack.c.l.b16 %v800
    %v1101 = vunpack.c.h.b16 %v800
    %v1102 = vunpack.c.l.b16 %v801
    %v1103 = vunpack.c.h.b16 %v801
    %v1104 = vunpack.c.l.b16 %v802
    %v1105 = vunpack.c.h.b16 %v802
    %v1106 = vunpack.c.l.b16 %v803
    %v1107 = vunpack.c.h.b16 %v803
    %v1108 = vunpack.c.l.b16 %v804
    %v1109 = vunpack.c.h.b16 %v804
    %v1110 = vunpack.c.l.b16 %v805
    %v1111 = vunpack.c.h.b16 %v805
    %v1112 = vunpack.c.l.b16 %v806
    %v1113 = vunpack.c.h.b16 %v806
    %v1114 = vunpack.c.l.b16 %v807
    %v1115 = vunpack.c.h.b16 %v807
    %v1116 = vunpack.c.l.b16 %v808
    %v1117 = vunpack.c.h.b16 %v808
    %v1118 = vunpack.c.l.b16 %v809
    %v1119 = vunpack.c.h.b16 %v809
    %v1120 = vunpack.c.l.b16 %v810
    %v1121 = vunpack.c.h.b16 %v810
    %v1122 = vunpack.c.l.b16 %v811
    %v1123 = vunpack.c.h.b16 %v811
    %v1124 = vunpack.c.l.b16 %v812
    %v1125 = vunpack.c.h.b16 %v812
    %v1126 = vunpack.c.l.b16 %v813
    %v1127 = vunpack.c.h.b16 %v813
    %v1128 = vunpack.c.l.b16 %v814
    %v1129 = vunpack.c.h.b16 %v814
    %v1130 = vunpack.c.l.b16 %v815
    %v1131 = vunpack.c.h.b16 %v815
    %v1132 = vunpack.c.l.b16 %v816
    %v1133 = vunpack.c.h.b16 %v816
    %v1134 = vunpack.c.l.b16 %v817
    %v1135 = vunpack.c.h.b16 %v817
    %v1136 = vunpack.c.l.b16 %v818
    %v1137 = vunpack.c.h.b16 %v818
    %v1138 = vunpack.c.l.b16 %v819
    %v1139 = vunpack.c.h.b16 %v819
    %v1140 = vunpack.c.l.b16 %v820
    %v1141 = vunpack.c.h.b16 %v820
    %v1142 = vunpack.c.l.b16 %v821
    %v1143 = vunpack.c.h.b16 %v821
    %v1144 = vunpack.c.l.b16 %v822
    %v1145 = vunpack.c.h.b16 %v822
    %v1146 = vunpack.c.l.b16 %v823
    %v1147 = vunpack.c.h.b16 %v823
    %v1148 = vunpack.c.l.b16 %v824
    %v1149 = vunpack.c.h.b16 %v824
    %v1150 = vunpack.c.l.b16 %v825
    %v1151 = vunpack.c.h.b16 %v825
    %v1152 = vunpack.c.l.b16 %v826
    %v1153 = vunpack.c.h.b16 %v826
    %v1154 = vunpack.c.l.b16 %v827
    %v1155 = vunpack.c.h.b16 %v827
    %v1156 = vunpack.c.l.b16 %v828
    %v1157 = vunpack.c.h.b16 %v828
    %v1158 = vunpack.c.l.b16 %v829
    %v1159 = vunpack.c.h.b16 %v829
    %v1160 = vunpack.c.l.b16 %v830
    %v1161 = vunpack.c.h.b16 %v830
    %v1162 = vunpack.c.l.b16 %v831
    %v1163 = vunpack.c.h.b16 %v831
    %v1164 = vunpack.c.l.b16 %v832
    %v1165 = vunpack.c.h.b16 %v832
    %v1166 = vunpack.c.l.b16 %v833
    %v1167 = vunpack.c.h.b16 %v833
    %v1168 = vunpack.c.l.b16 %v834
    %v1169 = vunpack.c.h.b16 %v834
    %v1170 = vunpack.c.l.b16 %v835
    %v1171 = vunpack.c.h.b16 %v835
    %v1172 = vunpack.c.l.b16 %v836
    %v1173 = vunpack.c.h.b16 %v836
    %v1174 = vunpack.c.l.b16 %v837
    %v1175 = vunpack.c.h.b16 %v837
    %v1176 = vunpack.c.l.b16 %v838
    %v1177 = vunpack.c.h.b16 %v838
    %v1178 = vunpack.c.l.b16 %v839
    %v1179 = vunpack.c.h.b16 %v839
    %v1180 = vunpack.c.l.b16 %v840
    %v1181 = vunpack.c.h.b16 %v840
    %v1182 = vunpack.c.l.b16 %v841
    %v1183 = vunpack.c.h.b16 %v841
    %v1184 = vunpack.c.l.b16 %v842
    %v1185 = vunpack.c.h.b16 %v842
    %v1186 = vunpack.c.l.b16 %v843
    %v1187 = vunpack.c.h.b16 %v843
    %v1188 = vunpack.c.l.b16 %v844
    %v1189 = vunpack.c.h.b16 %v844
    %v1190 = vunpack.c.l.b16 %v845
    %v1191 = vunpack.c.h.b16 %v845
    %v1192 = vunpack.c.l.b16 %v846
    %v1193 = vunpack.c.h.b16 %v846
    %v1194 = vunpack.c.l.b16 %v847
    %v1195 = vunpack.c.h.b16 %v847
    %v1196 = vunpack.c.l.b16 %v848
    %v1197 = vunpack.c.h.b16 %v848
    %v1198 = vunpack.c.l.b16 %v849
    %v1199 = vunpack.c.h.b16 %v849
    %v1200 = vunpack.c.l.b16 %v850
    %v1201 = vunpack.c.h.b16 %v850
    %v1202 = vunpack.c.l.b16 %v851
    %v1203 = vunpack.c.h.b16 %v851
    %v1204 = vunpack.c.l.b16 %v852
    %v1205 = vunpack.c.h.b16 %v852
    %v1206 = vunpack.c.l.b16 %v853
    %v1207 = vunpack.c.h.b16 %v853
    %v1208 = vunpack.c.l.b16 %v854
    %v1209 = vunpack.c.h.b16 %v854
    %v1210 = vunpack.c.l.b16 %v855
    %v1211 = vunpack.c.h.b16 %v855
    %v1212 = vunpack.c.l.b16 %v856
    %v1213 = vunpack.c.h.b16 %v856
    %v1214 = vunpack.c.l.b16 %v857
    %v1215 = vunpack.c.h.b16 %v857
    %v1216 = vunpack.c.l.b16 %v858
    %v1217 = vunpack.c.h.b16 %v858
    %v1218 = vunpack.c.l.b16 %v859
    %v1219 = vunpack.c.h.b16 %v859
    %v1220 = vunpack.c.l.b16 %v860
    %v1221 = vunpack.c.h.b16 %v860
    %v1222 = vunpack.c.l.b16 %v861
    %v1223 = vunpack.c.h.b16 %v861
    %v1224 = vunpack.c.l.b16 %v862
    %v1225 = vunpack.c.h.b16 %v862
    %v1226 = vunpack.c.l.b16 %v863
    %v1227 = vunpack.c.h.b16 %v863
    %v1228 = vunpack.c.l.b16 %v864
    %v1229 = vunpack.c.h.b16 %v864
    %v1230 = vunpack.c.l.b16 %v865
    %v1231 = vunpack.c.h.b16 %v865
    %v1232 = vunpack.c.l.b16 %v866
    %v1233 = vunpack.c.h.b16 %v866
    %v1234 = vunpack.c.l.b16 %v867
    %v1235 = vunpack.c.h.b16 %v867
    %v1236 = vunpack.c.l.b16 %v868
    %v1237 = vunpack.c.h.b16 %v868
    %v1238 = vunpack.c.l.b16 %v869
    %v1239 = vunpack.c.h.b16 %v869
    %v1240 = vunpack.c.l.b16 %v870
    %v1241 = vunpack.c.h.b16 %v870
    %v1242 = vunpack.c.l.b16 %v871
    %v1243 = vunpack.c.h.b16 %v871
    %v1244 = vunpack.c.l.b16 %v872
    %v1245 = vunpack.c.h.b16 %v872
    %v1246 = vunpack.c.l.b16 %v873
    %v1247 = vunpack.c.h.b16 %v873
    %v1248 = vunpack.c.l.b16 %v874
    %v1249 = vunpack.c.h.b16 %v874
    %v1250 = vunpack.c.l.b16 %v875
    %v1251 = vunpack.c.h.b16 %v875
    %v1252 = vunpack.c.l.b16 %v876
    %v1253 = vunpack.c.h.b16 %v876
    %v1254 = vunpack.c.l.b16 %v877
    %v1255 = vunpack.c.h.b16 %v877
    %v1256 = vunpack.c.l.b16 %v878
    %v1257 = vunpack.c.h.b16 %v878
    %v1258 = vunpack.c.l.b16 %v879
    %v1259 = vunpack.c.h.b16 %v879
    %v1260 = vunpack.c.l.b16 %v880
    %v1261 = vunpack.c.h.b16 %v880
    %v1262 = vunpack.c.l.b16 %v881
    %v1263 = vunpack.c.h.b16 %v881
    %v1264 = vunpack.c.l.b16 %v882
    %v1265 = vunpack.c.h.b16 %v882
    %v1266 = vunpack.c.l.b16 %v883
    %v1267 = vunpack.c.h.b16 %v883
    %v1268 = vunpack.c.l.b16 %v884
    %v1269 = vunpack.c.h.b16 %v884
    %v1270 = vunpack.c.l.b16 %v885
    %v1271 = vunpack.c.h.b16 %v885
    %v1272 = vunpack.c.l.b16 %v886
    %v1273 = vunpack.c.h.b16 %v886
    %v1274 = vunpack.c.l.b16 %v887
    %v1275 = vunpack.c.h.b16 %v887
    %v1276 = vunpack.c.l.b16 %v888
    %v1277 = vunpack.c.h.b16 %v888
    %v1278 = vunpack.c.l.b16 %v889
    %v1279 = vunpack.c.h.b16 %v889
    %v1280 = vunpack.c.l.b16 %v890
    %v1281 = vunpack.c.h.b16 %v890
    %v1282 = vunpack.c.l.b16 %v891
    %v1283 = vunpack.c.h.b16 %v891
    %v1284 = vunpack.c.l.b16 %v892
    %v1285 = vunpack.c.h.b16 %v892
    %v1286 = vunpack.c.l.b16 %v893
    %v1287 = vunpack.c.h.b16 %v893
    %v1288 = vunpack.c.l.b16 %v894
    %v1289 = vunpack.c.h.b16 %v894
    %v1290 = vunpack.c.l.b16 %v895
    %v1291 = vunpack.c.h.b16 %v895
    %v1292 = vunpack.c.l.b16 %v896
    %v1293 = vunpack.c.h.b16 %v896
    %v1294 = vunpack.c.l.b16 %v897
    %v1295 = vunpack.c.h.b16 %v897
    %v1296 = vunpack.c.l.b16 %v898
    %v1297 = vunpack.c.h.b16 %v898
    %v1298 = vunpack.c.l.b16 %v899
    %v1299 = vunpack.c.h.b16 %v899
    %v1300 = vunpack.c.l.b16 %v900
    %v1301 = vunpack.c.h.b16 %v900
    %v1302 = vunpack.c.l.b16 %v901
    %v1303 = vunpack.c.h.b16 %v901
    %v1304 = vunpack.c.l.b16 %v902
    %v1305 = vunpack.c.h.b16 %v902
    %v1306 = vunpack.c.l.b16 %v903
    %v1307 = vunpack.c.h.b16 %v903
    %v1308 = vunpack.c.l.b16 %v904
    %v1309 = vunpack.c.h.b16 %v904
    %v1310 = vunpack.c.l.b16 %v905
    %v1311 = vunpack.c.h.b16 %v905
    %v1312 = vpack.c.b16 %v1060, %v1056
    %v1313 = vpack.c.b16 %v1061, %v1057
    %v1314 = vpack.c.b16 %v1062, %v1058
    %v1315 = vpack.c.b16 %v1063, %v1059
    %v1316 = vpack.c.b16 %v1068, %v1064
    %v1317 = vpack.c.b16 %v1069, %v1065
    %v1318 = vpack.c.b16 %v1070, %v1066
    %v1319 = vpack.c.b16 %v1071, %v1067
    %v1320 = vpack.c.b16 %v1076, %v1072
    %v1321 = vpack.c.b16 %v1077, %v1073
    %v1322 = vpack.c.b16 %v1078, %v1074
    %v1323 = vpack.c.b16 %v1079, %v1075
    %v1324 = vpack.c.b16 %v1084, %v1080
    %v1325 = vpack.c.b16 %v1085, %v1081
    %v1326 = vpack.c.b16 %v1086, %v1082
    %v1327 = vpack.c.b16 %v1087, %v1083
    %v1328 = vpack.c.b16 %v1092, %v1088
    %v1329 = vpack.c.b16 %v1093, %v1089
    %v1330 = vpack.c.b16 %v1094, %v1090
    %v1331 = vpack.c.b16 %v1095, %v1091
    %v1332 = vpack.c.b16 %v1100, %v1096
    %v1333 = vpack.c.b16 %v1101, %v1097
    %v1334 = vpack.c.b16 %v1102, %v1098
    %v1335 = vpack.c.b16 %v1103, %v1099
    %v1336 = vpack.c.b16 %v1108, %v1104
    %v1337 = vpack.c.b16 %v1109, %v1105
    %v1338 = vpack.c.b16 %v1110, %v1106
    %v1339 = vpack.c.b16 %v1111, %v1107
    %v1340 = vpack.c.b16 %v1116, %v1112
    %v1341 = vpack.c.b16 %v1117, %v1113
    %v1342 = vpack.c.b16 %v1118, %v1114
    %v1343 = vpack.c.b16 %v1119, %v1115
    %v1344 = vpack.c.b16 %v1124, %v1120
    %v1345 = vpack.c.b16 %v1125, %v1121
    %v1346 = vpack.c.b16 %v1126, %v1122
    %v1347 = vpack.c.b16 %v1127, %v1123
    %v1348 = vpack.c.b16 %v1132, %v1128
    %v1349 = vpack.c.b16 %v1133, %v1129
    %v1350 = vpack.c.b16 %v1134, %v1130
    %v1351 = vpack.c.b16 %v1135, %v1131
    %v1352 = vpack.c.b16 %v1140, %v1136
    %v1353 = vpack.c.b16 %v1141, %v1137
    %v1354 = vpack.c.b16 %v1142, %v1138
    %v1355 = vpack.c.b16 %v1143, %v1139
    %v1356 = vpack.c.b16 %v1148, %v1144
    %v1357 = vpack.c.b16 %v1149, %v1145
    %v1358 = vpack.c.b16 %v1150, %v1146
    %v1359 = vpack.c.b16 %v1151, %v1147
    %v1360 = vpack.c.b16 %v1156, %v1152
    %v1361 = vpack.c.b16 %v1157, %v1153
    %v1362 = vpack.c.b16 %v1158, %v1154
    %v1363 = vpack.c.b16 %v1159, %v1155
    %v1364 = vpack.c.b16 %v1164, %v1160
    %v1365 = vpack.c.b16 %v1165, %v1161
    %v1366 = vpack.c.b16 %v1166, %v1162
    %v1367 = vpack.c.b16 %v1167, %v1163
    %v1368 = vpack.c.b16 %v1172, %v1168
    %v1369 = vpack.c.b16 %v1173, %v1169
    %v1370 = vpack.c.b16 %v1174, %v1170
    %v1371 = vpack.c.b16 %v1175, %v1171
    %v1372 = vpack.c.b16 %v1180, %v1176
    %v1373 = vpack.c.b16 %v1181, %v1177
    %v1374 = vpack.c.b16 %v1182, %v1178
    %v1375 = vpack.c.b16 %v1183, %v1179
    %v1376 = vpack.c.b16 %v1188, %v1184
    %v1377 = vpack.c.b16 %v1189, %v1185
    %v1378 = vpack.c.b16 %v1190, %v1186
    %v1379 = vpack.c.b16 %v1191, %v1187
    %v1380 = vpack.c.b16 %v1196, %v1192
    %v1381 = vpack.c.b16 %v1197, %v1193
    %v1382 = vpack.c.b16 %v1198, %v1194
    %v1383 = vpack.c.b16 %v1199, %v1195
    %v1384 = vpack.c.b16 %v1204, %v1200
    %v1385 = vpack.c.b16 %v1205, %v1201
    %v1386 = vpack.c.b16 %v1206, %v1202
    %v1387 = vpack.c.b16 %v1207, %v1203
    %v1388 = vpack.c.b16 %v1212, %v1208
    %v1389 = vpack.c.b16 %v1213, %v1209
    %v1390 = vpack.c.b16 %v1214, %v1210
    %v1391 = vpack.c.b16 %v1215, %v1211
    %v1392 = vpack.c.b16 %v1220, %v1216
    %v1393 = vpack.c.b16 %v1221, %v1217
    %v1394 = vpack.c.b16 %v1222, %v1218
    %v1395 = vpack.c.b16 %v1223, %v1219
    %v1396 = vpack.c.b16 %v1228, %v1224
    %v1397 = vpack.c.b16 %v1229, %v1225
    %v1398 = vpack.c.b16 %v1230, %v1226
    %v1399 = vpack.c.b16 %v1231, %v1227
    %v1400 = vpack.c.b16 %v1236, %v1232
    %v1401 = vpack.c.b16 %v1237, %v1233
    %v1402 = vpack.c.b16 %v1238, %v1234
    %v1403 = vpack.c.b16 %v1239, %v1235
    %v1404 = vpack.c.b16 %v1244, %v1240
    %v1405 = vpack.c.b16 %v1245, %v1241
    %v1406 = vpack.c.b16 %v1246, %v1242
    %v1407 = vpack.c.b16 %v1247, %v1243
    %v1408 = vpack.c.b16 %v1252, %v1248
    %v1409 = vpack.c.b16 %v1253, %v1249
    %v1410 = vpack.c.b16 %v1254, %v1250
    %v1411 = vpack.c.b16 %v1255, %v1251
    %v1412 = vpack.c.b16 %v1260, %v1256
    %v1413 = vpack.c.b16 %v1261, %v1257
    %v1414 = vpack.c.b16 %v1262, %v1258
    %v1415 = vpack.c.b16 %v1263, %v1259
    %v1416 = vpack.c.b16 %v1268, %v1264
    %v1417 = vpack.c.b16 %v1269, %v1265
    %v1418 = vpack.c.b16 %v1270, %v1266
    %v1419 = vpack.c.b16 %v1271, %v1267
    %v1420 = vpack.c.b16 %v1276, %v1272
    %v1421 = vpack.c.b16 %v1277, %v1273
    %v1422 = vpack.c.b16 %v1278, %v1274
    %v1423 = vpack.c.b16 %v1279, %v1275
    %v1424 = vpack.c.b16 %v1284, %v1280
    %v1425 = vpack.c.b16 %v1285, %v1281
    %v1426 = vpack.c.b16 %v1286, %v1282
    %v1427 = vpack.c.b16 %v1287, %v1283
    %v1428 = vpack.c.b16 %v1292, %v1288
    %v1429 = vpack.c.b16 %v1293, %v1289
    %v1430 = vpack.c.b16 %v1294, %v1290
    %v1431 = vpack.c.b16 %v1295, %v1291
    %v1432 = vpack.c.b16 %v1300, %v1296
    %v1433 = vpack.c.b16 %v1301, %v1297
    %v1434 = vpack.c.b16 %v1302, %v1298
    %v1435 = vpack.c.b16 %v1303, %v1299
    %v1436 = vpack.c.b16 %v1308, %v1304
    %v1437 = vpack.c.b16 %v1309, %v1305
    %v1438 = vpack.c.b16 %v1310, %v1306
    %v1439 = vpack.c.b16 %v1311, %v1307
    %1568 = vmatprep.subr.bf16.mxu0 %v1313
    %1569 = vmatpush1.bf16.msra.mxu0 %v1312
    %1570 = vmatprep.subr.bf16.mxu0 %v1317
    %1571 = vmatpush1.bf16.msra.mxu0 %v1316
    %1572 = vmatprep.subr.bf16.mxu0 %v1321
    %1573 = vmatpush1.bf16.msra.mxu0 %v1320
    %1574 = vmatprep.subr.bf16.mxu0 %v1325
    %1575 = vmatpush1.bf16.msra.mxu0 %v1324
    %1576 = vmatprep.subr.bf16.mxu0 %v1329
    %1577 = vmatpush1.bf16.msra.mxu0 %v1328
    %1578 = vmatprep.subr.bf16.mxu0 %v1333
    %1579 = vmatpush1.bf16.msra.mxu0 %v1332
    %1580 = vmatprep.subr.bf16.mxu0 %v1337
    %1581 = vmatpush1.bf16.msra.mxu0 %v1336
    %1582 = vmatprep.subr.bf16.mxu0 %v1341
    %1583 = vmatpush1.bf16.msra.mxu0 %v1340
    %1584 = vmatprep.subr.bf16.mxu0 %v1345
    %1585 = vmatpush1.bf16.msra.mxu0 %v1344
    %1586 = vmatprep.subr.bf16.mxu0 %v1349
    %1587 = vmatpush1.bf16.msra.mxu0 %v1348
    %1588 = vmatprep.subr.bf16.mxu0 %v1353
    %1589 = vmatpush1.bf16.msra.mxu0 %v1352
    %1590 = vmatprep.subr.bf16.mxu0 %v1357
    %1591 = vmatpush1.bf16.msra.mxu0 %v1356
    %1592 = vmatprep.subr.bf16.mxu0 %v1361
    %1593 = vmatpush1.bf16.msra.mxu0 %v1360
    %1594 = vmatprep.subr.bf16.mxu0 %v1365
    %1595 = vmatpush1.bf16.msra.mxu0 %v1364
    %1596 = vmatprep.subr.bf16.mxu0 %v1369
    %1597 = vmatpush1.bf16.msra.mxu0 %v1368
    %1598 = vmatprep.subr.bf16.mxu0 %v1373
    %1599 = vmatpush1.bf16.msra.mxu0 %v1372
    %1600 = vmatprep.mubr.bf16.mxu0 %v775
    %1601 = vmatmul.mubr.bf16.gmra.mrb[0].mxu0 %v774
    %v1602 = vpop.f32.mrb[0].mxu0
    %v1603 = vadd.f32 %v911, %v1602
    %v1604 = vpop.f32.mrb[0].mxu0
    %v1605 = vadd.f32 %v915, %v1604
    %v1606 = vpop.f32.mrb[0].mxu0
    %v1607 = vpop.f32.mrb[0].mxu0
    %1608 = vdwg.mxu0
    %1609 = vmatprep.subr.bf16.mxu0 %v1377
    %1610 = vmatpush1.bf16.msra.mxu0 %v1376
    %1611 = vmatprep.subr.bf16.mxu0 %v1381
    %1612 = vmatpush1.bf16.msra.mxu0 %v1380
    %1613 = vmatprep.subr.bf16.mxu0 %v1385
    %1614 = vmatpush1.bf16.msra.mxu0 %v1384
    %1615 = vmatprep.subr.bf16.mxu0 %v1389
    %1616 = vmatpush1.bf16.msra.mxu0 %v1388
    %1617 = vmatprep.subr.bf16.mxu0 %v1393
    %1618 = vmatpush1.bf16.msra.mxu0 %v1392
    %1619 = vmatprep.subr.bf16.mxu0 %v1397
    %1620 = vmatpush1.bf16.msra.mxu0 %v1396
    %1621 = vmatprep.subr.bf16.mxu0 %v1401
    %1622 = vmatpush1.bf16.msra.mxu0 %v1400
    %1623 = vmatprep.subr.bf16.mxu0 %v1405
    %1624 = vmatpush1.bf16.msra.mxu0 %v1404
    %1625 = vmatprep.subr.bf16.mxu0 %v1409
    %1626 = vmatpush1.bf16.msra.mxu0 %v1408
    %1627 = vmatprep.subr.bf16.mxu0 %v1413
    %1628 = vmatpush1.bf16.msra.mxu0 %v1412
    %1629 = vmatprep.subr.bf16.mxu0 %v1417
    %1630 = vmatpush1.bf16.msra.mxu0 %v1416
    %1631 = vmatprep.subr.bf16.mxu0 %v1421
    %1632 = vmatpush1.bf16.msra.mxu0 %v1420
    %1633 = vmatprep.subr.bf16.mxu0 %v1425
    %1634 = vmatpush1.bf16.msra.mxu0 %v1424
    %1635 = vmatprep.subr.bf16.mxu0 %v1429
    %1636 = vmatpush1.bf16.msra.mxu0 %v1428
    %1637 = vmatprep.subr.bf16.mxu0 %v1433
    %1638 = vmatpush1.bf16.msra.mxu0 %v1432
    %1639 = vmatprep.subr.bf16.mxu0 %v1437
    %1640 = vmatpush1.bf16.msra.mxu0 %v1436
    %1641 = vmatprep.mubr.bf16.mxu0 %v777
    %1642 = vmatmul.mubr.bf16.gmra.mrb[0].mxu0 %v776
    %v1643 = vpop.f32.mrb[0].mxu0
    %v1644 = vadd.f32 %v1603, %v1643
    %v1645 = vpop.f32.mrb[0].mxu0
    %v1646 = vadd.f32 %v1605, %v1645
    %v1647 = vpop.f32.mrb[0].mxu0
    %v1648 = vpop.f32.mrb[0].mxu0
    %1649 = vdwg.mxu0
    %1650 = vmatprep.subr.bf16.mxu0 %v1315
    %1651 = vmatpush1.bf16.msra.mxu0 %v1314
    %1652 = vmatprep.subr.bf16.mxu0 %v1319
    %1653 = vmatpush1.bf16.msra.mxu0 %v1318
    %1654 = vmatprep.subr.bf16.mxu0 %v1323
    %1655 = vmatpush1.bf16.msra.mxu0 %v1322
    %1656 = vmatprep.subr.bf16.mxu0 %v1327
    %1657 = vmatpush1.bf16.msra.mxu0 %v1326
    %1658 = vmatprep.subr.bf16.mxu0 %v1331
    %1659 = vmatpush1.bf16.msra.mxu0 %v1330
    %1660 = vmatprep.subr.bf16.mxu0 %v1335
    %1661 = vmatpush1.bf16.msra.mxu0 %v1334
    %1662 = vmatprep.subr.bf16.mxu0 %v1339
    %1663 = vmatpush1.bf16.msra.mxu0 %v1338
    %1664 = vmatprep.subr.bf16.mxu0 %v1343
    %1665 = vmatpush1.bf16.msra.mxu0 %v1342
    %1666 = vmatprep.subr.bf16.mxu0 %v1347
    %1667 = vmatpush1.bf16.msra.mxu0 %v1346
    %1668 = vmatprep.subr.bf16.mxu0 %v1351
    %1669 = vmatpush1.bf16.msra.mxu0 %v1350
    %1670 = vmatprep.subr.bf16.mxu0 %v1355
    %1671 = vmatpush1.bf16.msra.mxu0 %v1354
    %1672 = vmatprep.subr.bf16.mxu0 %v1359
    %1673 = vmatpush1.bf16.msra.mxu0 %v1358
    %1674 = vmatprep.subr.bf16.mxu0 %v1363
    %1675 = vmatpush1.bf16.msra.mxu0 %v1362
    %1676 = vmatprep.subr.bf16.mxu0 %v1367
    %1677 = vmatpush1.bf16.msra.mxu0 %v1366
    %1678 = vmatprep.subr.bf16.mxu0 %v1371
    %1679 = vmatpush1.bf16.msra.mxu0 %v1370
    %1680 = vmatprep.subr.bf16.mxu0 %v1375
    %1681 = vmatpush1.bf16.msra.mxu0 %v1374
    %1682 = vmatprep.mubr.bf16.mxu0 %v775
    %1683 = vmatmul.mubr.bf16.gmra.mrb[0].mxu0 %v774
    %v1684 = vpop.f32.mrb[0].mxu0
    %v1685 = vadd.f32 %v919, %v1684
    %v1686 = vpop.f32.mrb[0].mxu0
    %v1687 = vadd.f32 %v923, %v1686
    %v1688 = vpop.f32.mrb[0].mxu0
    %v1689 = vpop.f32.mrb[0].mxu0
    %1690 = vdwg.mxu0
    %1691 = vmatprep.subr.bf16.mxu0 %v1379
    %1692 = vmatpush1.bf16.msra.mxu0 %v1378
    %1693 = vmatprep.subr.bf16.mxu0 %v1383
    %1694 = vmatpush1.bf16.msra.mxu0 %v1382
    %1695 = vmatprep.subr.bf16.mxu0 %v1387
    %1696 = vmatpush1.bf16.msra.mxu0 %v1386
    %1697 = vmatprep.subr.bf16.mxu0 %v1391
    %1698 = vmatpush1.bf16.msra.mxu0 %v1390
    %1699 = vmatprep.subr.bf16.mxu0 %v1395
    %1700 = vmatpush1.bf16.msra.mxu0 %v1394
    %1701 = vmatprep.subr.bf16.mxu0 %v1399
    %1702 = vmatpush1.bf16.msra.mxu0 %v1398
    %1703 = vmatprep.subr.bf16.mxu0 %v1403
    %1704 = vmatpush1.bf16.msra.mxu0 %v1402
    %1705 = vmatprep.subr.bf16.mxu0 %v1407
    %1706 = vmatpush1.bf16.msra.mxu0 %v1406
    %1707 = vmatprep.subr.bf16.mxu0 %v1411
    %1708 = vmatpush1.bf16.msra.mxu0 %v1410
    %1709 = vmatprep.subr.bf16.mxu0 %v1415
    %1710 = vmatpush1.bf16.msra.mxu0 %v1414
    %1711 = vmatprep.subr.bf16.mxu0 %v1419
    %1712 = vmatpush1.bf16.msra.mxu0 %v1418
    %1713 = vmatprep.subr.bf16.mxu0 %v1423
    %1714 = vmatpush1.bf16.msra.mxu0 %v1422
    %1715 = vmatprep.subr.bf16.mxu0 %v1427
    %1716 = vmatpush1.bf16.msra.mxu0 %v1426
    %1717 = vmatprep.subr.bf16.mxu0 %v1431
    %1718 = vmatpush1.bf16.msra.mxu0 %v1430
    %1719 = vmatprep.subr.bf16.mxu0 %v1435
    %1720 = vmatpush1.bf16.msra.mxu0 %v1434
    %1721 = vmatprep.subr.bf16.mxu0 %v1439
    %1722 = vmatpush1.bf16.msra.mxu0 %v1438
    %1723 = vmatprep.mubr.bf16.mxu0 %v777
    %1724 = vmatmul.mubr.bf16.gmra.mrb[0].mxu0 %v776
    %v1725 = vpop.f32.mrb[0].mxu0
    %v1726 = vadd.f32 %v1685, %v1725
    %v1727 = vpop.f32.mrb[0].mxu0
    %v1728 = vadd.f32 %v1687, %v1727
    %v1729 = vpop.f32.mrb[0].mxu0
    %v1730 = vpop.f32.mrb[0].mxu0
    %1731 = vdwg.mxu0
    %v1732 = vpack.c.bf16 %v1644, %v1644
    %v1733 = vpack.c.bf16 %v1646, %v1646
    %v1734 = vpack.c.bf16 %v1726, %v1726
    %v1735 = vpack.c.bf16 %v1728, %v1728
    %v1736 = vld [vmem:[#allocation14] sm:$0xff]
    %v1737 = vld [vmem:[#allocation14 + $0x8] sm:$0xff]
    %v1738 = vld [vmem:[#allocation14 + $0x10] sm:$0xff]
    %v1739 = vld [vmem:[#allocation14 + $0x18] sm:$0xff]
    %v1740 = vld [vmem:[#allocation14 + $0x20] sm:$0xff]
    %v1741 = vld [vmem:[#allocation14 + $0x28] sm:$0xff]
    %v1742 = vld [vmem:[#allocation14 + $0x30] sm:$0xff]
    %v1743 = vld [vmem:[#allocation14 + $0x38] sm:$0xff]
    %v1744 = vld [vmem:[#allocation14 + $0x40] sm:$0xff]
    %v1745 = vld [vmem:[#allocation14 + $0x48] sm:$0xff]
    %v1746 = vld [vmem:[#allocation14 + $0x50] sm:$0xff]
    %v1747 = vld [vmem:[#allocation14 + $0x58] sm:$0xff]
    %v1748 = vld [vmem:[#allocation14 + $0x60] sm:$0xff]
    %v1749 = vld [vmem:[#allocation14 + $0x68] sm:$0xff]
    %v1750 = vld [vmem:[#allocation14 + $0x70] sm:$0xff]
    %v1751 = vld [vmem:[#allocation14 + $0x78] sm:$0xff]
    %v1752 = vld [vmem:[#allocation14 + $0x80] sm:$0xff]
    %v1753 = vld [vmem:[#allocation14 + $0x88] sm:$0xff]
    %v1754 = vld [vmem:[#allocation14 + $0x90] sm:$0xff]
    %v1755 = vld [vmem:[#allocation14 + $0x98] sm:$0xff]
    %v1756 = vld [vmem:[#allocation14 + $0xa0] sm:$0xff]
    %v1757 = vld [vmem:[#allocation14 + $0xa8] sm:$0xff]
    %v1758 = vld [vmem:[#allocation14 + $0xb0] sm:$0xff]
    %v1759 = vld [vmem:[#allocation14 + $0xb8] sm:$0xff]
    %v1760 = vld [vmem:[#allocation14 + $0xc0] sm:$0xff]
    %v1761 = vld [vmem:[#allocation14 + $0xc8] sm:$0xff]
    %v1762 = vld [vmem:[#allocation14 + $0xd0] sm:$0xff]
    %v1763 = vld [vmem:[#allocation14 + $0xd8] sm:$0xff]
    %v1764 = vld [vmem:[#allocation14 + $0xe0] sm:$0xff]
    %v1765 = vld [vmem:[#allocation14 + $0xe8] sm:$0xff]
    %v1766 = vld [vmem:[#allocation14 + $0xf0] sm:$0xff]
    %v1767 = vld [vmem:[#allocation14 + $0xf8] sm:$0xff]
    %v1768 = vld [vmem:[#allocation14 + $0x100] sm:$0xff]
    %v1769 = vld [vmem:[#allocation14 + $0x108] sm:$0xff]
    %v1770 = vld [vmem:[#allocation14 + $0x110] sm:$0xff]
    %v1771 = vld [vmem:[#allocation14 + $0x118] sm:$0xff]
    %v1772 = vld [vmem:[#allocation14 + $0x120] sm:$0xff]
    %v1773 = vld [vmem:[#allocation14 + $0x128] sm:$0xff]
    %v1774 = vld [vmem:[#allocation14 + $0x130] sm:$0xff]
    %v1775 = vld [vmem:[#allocation14 + $0x138] sm:$0xff]
    %v1776 = vld [vmem:[#allocation14 + $0x140] sm:$0xff]
    %v1777 = vld [vmem:[#allocation14 + $0x148] sm:$0xff]
    %v1778 = vld [vmem:[#allocation14 + $0x150] sm:$0xff]
    %v1779 = vld [vmem:[#allocation14 + $0x158] sm:$0xff]
    %v1780 = vld [vmem:[#allocation14 + $0x160] sm:$0xff]
    %v1781 = vld [vmem:[#allocation14 + $0x168] sm:$0xff]
    %v1782 = vld [vmem:[#allocation14 + $0x170] sm:$0xff]
    %v1783 = vld [vmem:[#allocation14 + $0x178] sm:$0xff]
    %v1784 = vld [vmem:[#allocation14 + $0x180] sm:$0xff]
    %v1785 = vld [vmem:[#allocation14 + $0x188] sm:$0xff]
    %v1786 = vld [vmem:[#allocation14 + $0x190] sm:$0xff]
    %v1787 = vld [vmem:[#allocation14 + $0x198] sm:$0xff]
    %v1788 = vld [vmem:[#allocation14 + $0x1a0] sm:$0xff]
    %v1789 = vld [vmem:[#allocation14 + $0x1a8] sm:$0xff]
    %v1790 = vld [vmem:[#allocation14 + $0x1b0] sm:$0xff]
    %v1791 = vld [vmem:[#allocation14 + $0x1b8] sm:$0xff]
    %v1792 = vld [vmem:[#allocation14 + $0x1c0] sm:$0xff]
    %v1793 = vld [vmem:[#allocation14 + $0x1c8] sm:$0xff]
    %v1794 = vld [vmem:[#allocation14 + $0x1d0] sm:$0xff]
    %v1795 = vld [vmem:[#allocation14 + $0x1d8] sm:$0xff]
    %v1796 = vld [vmem:[#allocation14 + $0x1e0] sm:$0xff]
    %v1797 = vld [vmem:[#allocation14 + $0x1e8] sm:$0xff]
    %v1798 = vld [vmem:[#allocation14 + $0x1f0] sm:$0xff]
    %v1799 = vld [vmem:[#allocation14 + $0x1f8] sm:$0xff]
    %v1800 = vld [vmem:[#allocation16] sm:$0x3]
    %v1802 = vlaneseq
    %v1803 = vshrl.u32 %v1802, 7
    %v1804 = vsub.s32 0, %v1803
    %v1805 = vrot.slane %v1800, %v1804
    %v1806 = vlaneseq
    %v1807 = vshrl.u32 %v1806, 7
    %v1808 = vsub.s32 1, %v1807
    %v1809 = vrot.slane %v1800, %v1808
    %v1876 = vunpack.c.l.b16 %v1736
    %v1877 = vunpack.c.h.b16 %v1736
    %v1878 = vunpack.c.l.b16 %v1737
    %v1879 = vunpack.c.h.b16 %v1737
    %v1880 = vunpack.c.l.b16 %v1738
    %v1881 = vunpack.c.h.b16 %v1738
    %v1882 = vunpack.c.l.b16 %v1739
    %v1883 = vunpack.c.h.b16 %v1739
    %v1884 = vunpack.c.l.b16 %v1740
    %v1885 = vunpack.c.h.b16 %v1740
    %v1886 = vunpack.c.l.b16 %v1741
    %v1887 = vunpack.c.h.b16 %v1741
    %v1888 = vunpack.c.l.b16 %v1742
    %v1889 = vunpack.c.h.b16 %v1742
    %v1890 = vunpack.c.l.b16 %v1743
    %v1891 = vunpack.c.h.b16 %v1743
    %v1892 = vunpack.c.l.b16 %v1744
    %v1893 = vunpack.c.h.b16 %v1744
    %v1894 = vunpack.c.l.b16 %v1745
    %v1895 = vunpack.c.h.b16 %v1745
    %v1896 = vunpack.c.l.b16 %v1746
    %v1897 = vunpack.c.h.b16 %v1746
    %v1898 = vunpack.c.l.b16 %v1747
    %v1899 = vunpack.c.h.b16 %v1747
    %v1900 = vunpack.c.l.b16 %v1748
    %v1901 = vunpack.c.h.b16 %v1748
    %v1902 = vunpack.c.l.b16 %v1749
    %v1903 = vunpack.c.h.b16 %v1749
    %v1904 = vunpack.c.l.b16 %v1750
    %v1905 = vunpack.c.h.b16 %v1750
    %v1906 = vunpack.c.l.b16 %v1751
    %v1907 = vunpack.c.h.b16 %v1751
    %v1908 = vunpack.c.l.b16 %v1752
    %v1909 = vunpack.c.h.b16 %v1752
    %v1910 = vunpack.c.l.b16 %v1753
    %v1911 = vunpack.c.h.b16 %v1753
    %v1912 = vunpack.c.l.b16 %v1754
    %v1913 = vunpack.c.h.b16 %v1754
    %v1914 = vunpack.c.l.b16 %v1755
    %v1915 = vunpack.c.h.b16 %v1755
    %v1916 = vunpack.c.l.b16 %v1756
    %v1917 = vunpack.c.h.b16 %v1756
    %v1918 = vunpack.c.l.b16 %v1757
    %v1919 = vunpack.c.h.b16 %v1757
    %v1920 = vunpack.c.l.b16 %v1758
    %v1921 = vunpack.c.h.b16 %v1758
    %v1922 = vunpack.c.l.b16 %v1759
    %v1923 = vunpack.c.h.b16 %v1759
    %v1924 = vunpack.c.l.b16 %v1760
    %v1925 = vunpack.c.h.b16 %v1760
    %v1926 = vunpack.c.l.b16 %v1761
    %v1927 = vunpack.c.h.b16 %v1761
    %v1928 = vunpack.c.l.b16 %v1762
    %v1929 = vunpack.c.h.b16 %v1762
    %v1930 = vunpack.c.l.b16 %v1763
    %v1931 = vunpack.c.h.b16 %v1763
    %v1932 = vunpack.c.l.b16 %v1764
    %v1933 = vunpack.c.h.b16 %v1764
    %v1934 = vunpack.c.l.b16 %v1765
    %v1935 = vunpack.c.h.b16 %v1765
    %v1936 = vunpack.c.l.b16 %v1766
    %v1937 = vunpack.c.h.b16 %v1766
    %v1938 = vunpack.c.l.b16 %v1767
    %v1939 = vunpack.c.h.b16 %v1767
    %v1940 = vunpack.c.l.b16 %v1768
    %v1941 = vunpack.c.h.b16 %v1768
    %v1942 = vunpack.c.l.b16 %v1769
    %v1943 = vunpack.c.h.b16 %v1769
    %v1944 = vunpack.c.l.b16 %v1770
    %v1945 = vunpack.c.h.b16 %v1770
    %v1946 = vunpack.c.l.b16 %v1771
    %v1947 = vunpack.c.h.b16 %v1771
    %v1948 = vunpack.c.l.b16 %v1772
    %v1949 = vunpack.c.h.b16 %v1772
    %v1950 = vunpack.c.l.b16 %v1773
    %v1951 = vunpack.c.h.b16 %v1773
    %v1952 = vunpack.c.l.b16 %v1774
    %v1953 = vunpack.c.h.b16 %v1774
    %v1954 = vunpack.c.l.b16 %v1775
    %v1955 = vunpack.c.h.b16 %v1775
    %v1956 = vunpack.c.l.b16 %v1776
    %v1957 = vunpack.c.h.b16 %v1776
    %v1958 = vunpack.c.l.b16 %v1777
    %v1959 = vunpack.c.h.b16 %v1777
    %v1960 = vunpack.c.l.b16 %v1778
    %v1961 = vunpack.c.h.b16 %v1778
    %v1962 = vunpack.c.l.b16 %v1779
    %v1963 = vunpack.c.h.b16 %v1779
    %v1964 = vunpack.c.l.b16 %v1780
    %v1965 = vunpack.c.h.b16 %v1780
    %v1966 = vunpack.c.l.b16 %v1781
    %v1967 = vunpack.c.h.b16 %v1781
    %v1968 = vunpack.c.l.b16 %v1782
    %v1969 = vunpack.c.h.b16 %v1782
    %v1970 = vunpack.c.l.b16 %v1783
    %v1971 = vunpack.c.h.b16 %v1783
    %v1972 = vunpack.c.l.b16 %v1784
    %v1973 = vunpack.c.h.b16 %v1784
    %v1974 = vunpack.c.l.b16 %v1785
    %v1975 = vunpack.c.h.b16 %v1785
    %v1976 = vunpack.c.l.b16 %v1786
    %v1977 = vunpack.c.h.b16 %v1786
    %v1978 = vunpack.c.l.b16 %v1787
    %v1979 = vunpack.c.h.b16 %v1787
    %v1980 = vunpack.c.l.b16 %v1788
    %v1981 = vunpack.c.h.b16 %v1788
    %v1982 = vunpack.c.l.b16 %v1789
    %v1983 = vunpack.c.h.b16 %v1789
    %v1984 = vunpack.c.l.b16 %v1790
    %v1985 = vunpack.c.h.b16 %v1790
    %v1986 = vunpack.c.l.b16 %v1791
    %v1987 = vunpack.c.h.b16 %v1791
    %v1988 = vunpack.c.l.b16 %v1792
    %v1989 = vunpack.c.h.b16 %v1792
    %v1990 = vunpack.c.l.b16 %v1793
    %v1991 = vunpack.c.h.b16 %v1793
    %v1992 = vunpack.c.l.b16 %v1794
    %v1993 = vunpack.c.h.b16 %v1794
    %v1994 = vunpack.c.l.b16 %v1795
    %v1995 = vunpack.c.h.b16 %v1795
    %v1996 = vunpack.c.l.b16 %v1796
    %v1997 = vunpack.c.h.b16 %v1796
    %v1998 = vunpack.c.l.b16 %v1797
    %v1999 = vunpack.c.h.b16 %v1797
    %v2000 = vunpack.c.l.b16 %v1798
    %v2001 = vunpack.c.h.b16 %v1798
    %v2002 = vunpack.c.l.b16 %v1799
    %v2003 = vunpack.c.h.b16 %v1799
    %v2004 = vpack.c.b16 %v1878, %v1876
    %v2005 = vpack.c.b16 %v1879, %v1877
    %v2006 = vpack.c.b16 %v1882, %v1880
    %v2007 = vpack.c.b16 %v1883, %v1881
    %v2008 = vpack.c.b16 %v1886, %v1884
    %v2009 = vpack.c.b16 %v1887, %v1885
    %v2010 = vpack.c.b16 %v1890, %v1888
    %v2011 = vpack.c.b16 %v1891, %v1889
    %v2012 = vpack.c.b16 %v1894, %v1892
    %v2013 = vpack.c.b16 %v1895, %v1893
    %v2014 = vpack.c.b16 %v1898, %v1896
    %v2015 = vpack.c.b16 %v1899, %v1897
    %v2016 = vpack.c.b16 %v1902, %v1900
    %v2017 = vpack.c.b16 %v1903, %v1901
    %v2018 = vpack.c.b16 %v1906, %v1904
    %v2019 = vpack.c.b16 %v1907, %v1905
    %v2020 = vpack.c.b16 %v1910, %v1908
    %v2021 = vpack.c.b16 %v1911, %v1909
    %v2022 = vpack.c.b16 %v1914, %v1912
    %v2023 = vpack.c.b16 %v1915, %v1913
    %v2024 = vpack.c.b16 %v1918, %v1916
    %v2025 = vpack.c.b16 %v1919, %v1917
    %v2026 = vpack.c.b16 %v1922, %v1920
    %v2027 = vpack.c.b16 %v1923, %v1921
    %v2028 = vpack.c.b16 %v1926, %v1924
    %v2029 = vpack.c.b16 %v1927, %v1925
    %v2030 = vpack.c.b16 %v1930, %v1928
    %v2031 = vpack.c.b16 %v1931, %v1929
    %v2032 = vpack.c.b16 %v1934, %v1932
    %v2033 = vpack.c.b16 %v1935, %v1933
    %v2034 = vpack.c.b16 %v1938, %v1936
    %v2035 = vpack.c.b16 %v1939, %v1937
    %v2036 = vpack.c.b16 %v1942, %v1940
    %v2037 = vpack.c.b16 %v1943, %v1941
    %v2038 = vpack.c.b16 %v1946, %v1944
    %v2039 = vpack.c.b16 %v1947, %v1945
    %v2040 = vpack.c.b16 %v1950, %v1948
    %v2041 = vpack.c.b16 %v1951, %v1949
    %v2042 = vpack.c.b16 %v1954, %v1952
    %v2043 = vpack.c.b16 %v1955, %v1953
    %v2044 = vpack.c.b16 %v1958, %v1956
    %v2045 = vpack.c.b16 %v1959, %v1957
    %v2046 = vpack.c.b16 %v1962, %v1960
    %v2047 = vpack.c.b16 %v1963, %v1961
    %v2048 = vpack.c.b16 %v1966, %v1964
    %v2049 = vpack.c.b16 %v1967, %v1965
    %v2050 = vpack.c.b16 %v1970, %v1968
    %v2051 = vpack.c.b16 %v1971, %v1969
    %v2052 = vpack.c.b16 %v1974, %v1972
    %v2053 = vpack.c.b16 %v1975, %v1973
    %v2054 = vpack.c.b16 %v1978, %v1976
    %v2055 = vpack.c.b16 %v1979, %v1977
    %v2056 = vpack.c.b16 %v1982, %v1980
    %v2057 = vpack.c.b16 %v1983, %v1981
    %v2058 = vpack.c.b16 %v1986, %v1984
    %v2059 = vpack.c.b16 %v1987, %v1985
    %v2060 = vpack.c.b16 %v1990, %v1988
    %v2061 = vpack.c.b16 %v1991, %v1989
    %v2062 = vpack.c.b16 %v1994, %v1992
    %v2063 = vpack.c.b16 %v1995, %v1993
    %v2064 = vpack.c.b16 %v1998, %v1996
    %v2065 = vpack.c.b16 %v1999, %v1997
    %v2066 = vpack.c.b16 %v2002, %v2000
    %v2067 = vpack.c.b16 %v2003, %v2001
    %2132 = vmatprep.subr.bf16.mxu0 %v2005
    %2133 = vmatpush1.bf16.msra.mxu0 %v2004
    %2134 = vmatprep.subr.bf16.mxu0 %v2007
    %2135 = vmatpush1.bf16.msra.mxu0 %v2006
    %2136 = vmatprep.subr.bf16.mxu0 %v2009
    %2137 = vmatpush1.bf16.msra.mxu0 %v2008
    %2138 = vmatprep.subr.bf16.mxu0 %v2011
    %2139 = vmatpush1.bf16.msra.mxu0 %v2010
    %2140 = vmatprep.subr.bf16.mxu0 %v2013
    %2141 = vmatpush1.bf16.msra.mxu0 %v2012
    %2142 = vmatprep.subr.bf16.mxu0 %v2015
    %2143 = vmatpush1.bf16.msra.mxu0 %v2014
    %2144 = vmatprep.subr.bf16.mxu0 %v2017
    %2145 = vmatpush1.bf16.msra.mxu0 %v2016
    %2146 = vmatprep.subr.bf16.mxu0 %v2019
    %2147 = vmatpush1.bf16.msra.mxu0 %v2018
    %2148 = vmatprep.subr.bf16.mxu0 %v2021
    %2149 = vmatpush1.bf16.msra.mxu0 %v2020
    %2150 = vmatprep.subr.bf16.mxu0 %v2023
    %2151 = vmatpush1.bf16.msra.mxu0 %v2022
    %2152 = vmatprep.subr.bf16.mxu0 %v2025
    %2153 = vmatpush1.bf16.msra.mxu0 %v2024
    %2154 = vmatprep.subr.bf16.mxu0 %v2027
    %2155 = vmatpush1.bf16.msra.mxu0 %v2026
    %2156 = vmatprep.subr.bf16.mxu0 %v2029
    %2157 = vmatpush1.bf16.msra.mxu0 %v2028
    %2158 = vmatprep.subr.bf16.mxu0 %v2031
    %2159 = vmatpush1.bf16.msra.mxu0 %v2030
    %2160 = vmatprep.subr.bf16.mxu0 %v2033
    %2161 = vmatpush1.bf16.msra.mxu0 %v2032
    %2162 = vmatprep.subr.bf16.mxu0 %v2035
    %2163 = vmatpush1.bf16.msra.mxu0 %v2034
    %2164 = vmatprep.mubr.bf16.mxu0 %v1733
    %2165 = vmatmul.mubr.bf16.gmra.mrb[0].mxu0 %v1732
    %v2166 = vpop.f32.mrb[0].mxu0
    %v2167 = vadd.f32 %v1805, %v2166
    %v2168 = vpop.f32.mrb[0].mxu0
    %v2169 = vadd.f32 %v1809, %v2168
    %v2170 = vpop.f32.mrb[0].mxu0
    %v2171 = vpop.f32.mrb[0].mxu0
    %2172 = vdwg.mxu0
    %2173 = vmatprep.subr.bf16.mxu0 %v2037
    %2174 = vmatpush1.bf16.msra.mxu0 %v2036
    %2175 = vmatprep.subr.bf16.mxu0 %v2039
    %2176 = vmatpush1.bf16.msra.mxu0 %v2038
    %2177 = vmatprep.subr.bf16.mxu0 %v2041
    %2178 = vmatpush1.bf16.msra.mxu0 %v2040
    %2179 = vmatprep.subr.bf16.mxu0 %v2043
    %2180 = vmatpush1.bf16.msra.mxu0 %v2042
    %2181 = vmatprep.subr.bf16.mxu0 %v2045
    %2182 = vmatpush1.bf16.msra.mxu0 %v2044
    %2183 = vmatprep.subr.bf16.mxu0 %v2047
    %2184 = vmatpush1.bf16.msra.mxu0 %v2046
    %2185 = vmatprep.subr.bf16.mxu0 %v2049
    %2186 = vmatpush1.bf16.msra.mxu0 %v2048
    %2187 = vmatprep.subr.bf16.mxu0 %v2051
    %2188 = vmatpush1.bf16.msra.mxu0 %v2050
    %2189 = vmatprep.subr.bf16.mxu0 %v2053
    %2190 = vmatpush1.bf16.msra.mxu0 %v2052
    %2191 = vmatprep.subr.bf16.mxu0 %v2055
    %2192 = vmatpush1.bf16.msra.mxu0 %v2054
    %2193 = vmatprep.subr.bf16.mxu0 %v2057
    %2194 = vmatpush1.bf16.msra.mxu0 %v2056
    %2195 = vmatprep.subr.bf16.mxu0 %v2059
    %2196 = vmatpush1.bf16.msra.mxu0 %v2058
    %2197 = vmatprep.subr.bf16.mxu0 %v2061
    %2198 = vmatpush1.bf16.msra.mxu0 %v2060
    %2199 = vmatprep.subr.bf16.mxu0 %v2063
    %2200 = vmatpush1.bf16.msra.mxu0 %v2062
    %2201 = vmatprep.subr.bf16.mxu0 %v2065
    %2202 = vmatpush1.bf16.msra.mxu0 %v2064
    %2203 = vmatprep.subr.bf16.mxu0 %v2067
    %2204 = vmatpush1.bf16.msra.mxu0 %v2066
    %2205 = vmatprep.mubr.bf16.mxu0 %v1735
    %2206 = vmatmul.mubr.bf16.gmra.mrb[0].mxu0 %v1734
    %v2207 = vpop.f32.mrb[0].mxu0
    %v2208 = vadd.f32 %v2167, %v2207
    %v2209 = vpop.f32.mrb[0].mxu0
    %v2210 = vadd.f32 %v2169, %v2209
    %v2211 = vpop.f32.mrb[0].mxu0
    %v2212 = vpop.f32.mrb[0].mxu0
    %2213 = vdwg.mxu0
    %v2214 = vpack.c.bf16 %v2208, %v2208
    %v2215 = vpack.c.bf16 %v2210, %v2210
    %v2216 = vld [vmem:[#allocation17] sm:$0xf]
    %v2217 = vld [vmem:[#allocation17 + $0x4] sm:$0xf]
    %v2218 = vld [vmem:[#allocation17 + $0x8] sm:$0xf]
    %v2219 = vld [vmem:[#allocation17 + $0xc] sm:$0xf]
    %v2220 = vld [vmem:[#allocation17 + $0x10] sm:$0xf]
    %v2221 = vld [vmem:[#allocation17 + $0x14] sm:$0xf]
    %v2222 = vld [vmem:[#allocation17 + $0x18] sm:$0xf]
    %v2223 = vld [vmem:[#allocation17 + $0x1c] sm:$0xf]
    %v2224 = vld [vmem:[#allocation17 + $0x20] sm:$0xf]
    %v2225 = vld [vmem:[#allocation17 + $0x24] sm:$0xf]
    %v2226 = vld [vmem:[#allocation17 + $0x28] sm:$0xf]
    %v2227 = vld [vmem:[#allocation17 + $0x2c] sm:$0xf]
    %v2228 = vld [vmem:[#allocation17 + $0x30] sm:$0xf]
    %v2229 = vld [vmem:[#allocation17 + $0x34] sm:$0xf]
    %v2230 = vld [vmem:[#allocation17 + $0x38] sm:$0xf]
    %v2231 = vld [vmem:[#allocation17 + $0x3c] sm:$0xf]
    %v2232 = vld [vmem:[#allocation17 + $0x40] sm:$0xf]
    %v2233 = vld [vmem:[#allocation17 + $0x44] sm:$0xf]
    %v2234 = vld [vmem:[#allocation17 + $0x48] sm:$0xf]
    %v2235 = vld [vmem:[#allocation17 + $0x4c] sm:$0xf]
    %v2236 = vld [vmem:[#allocation17 + $0x50] sm:$0xf]
    %v2237 = vld [vmem:[#allocation17 + $0x54] sm:$0xf]
    %v2238 = vld [vmem:[#allocation17 + $0x58] sm:$0xf]
    %v2239 = vld [vmem:[#allocation17 + $0x5c] sm:$0xf]
    %v2240 = vld [vmem:[#allocation17 + $0x60] sm:$0xf]
    %v2241 = vld [vmem:[#allocation17 + $0x64] sm:$0xf]
    %v2242 = vld [vmem:[#allocation17 + $0x68] sm:$0xf]
    %v2243 = vld [vmem:[#allocation17 + $0x6c] sm:$0xf]
    %v2244 = vld [vmem:[#allocation17 + $0x70] sm:$0xf]
    %v2245 = vld [vmem:[#allocation17 + $0x74] sm:$0xf]
    %v2246 = vld [vmem:[#allocation17 + $0x78] sm:$0xf]
    %v2247 = vld [vmem:[#allocation17 + $0x7c] sm:$0xf]
    %v2248 = vld [vmem:[#allocation19] sm:$0x1]
    %v2250 = vlaneseq
    %v2251 = vshrl.u32 %v2250, 7
    %v2252 = vsub.s32 0, %v2251
    %v2253 = vrot.slane %v2248, %v2252
    %v2287 = vunpack.c.l.b16 %v2216
    %v2288 = vunpack.c.l.b16 %v2217
    %v2289 = vunpack.c.l.b16 %v2218
    %v2290 = vunpack.c.l.b16 %v2219
    %v2291 = vunpack.c.l.b16 %v2220
    %v2292 = vunpack.c.l.b16 %v2221
    %v2293 = vunpack.c.l.b16 %v2222
    %v2294 = vunpack.c.l.b16 %v2223
    %v2295 = vunpack.c.l.b16 %v2224
    %v2296 = vunpack.c.l.b16 %v2225
    %v2297 = vunpack.c.l.b16 %v2226
    %v2298 = vunpack.c.l.b16 %v2227
    %v2299 = vunpack.c.l.b16 %v2228
    %v2300 = vunpack.c.l.b16 %v2229
    %v2301 = vunpack.c.l.b16 %v2230
    %v2302 = vunpack.c.l.b16 %v2231
    %v2303 = vunpack.c.l.b16 %v2232
    %v2304 = vunpack.c.l.b16 %v2233
    %v2305 = vunpack.c.l.b16 %v2234
    %v2306 = vunpack.c.l.b16 %v2235
    %v2307 = vunpack.c.l.b16 %v2236
    %v2308 = vunpack.c.l.b16 %v2237
    %v2309 = vunpack.c.l.b16 %v2238
    %v2310 = vunpack.c.l.b16 %v2239
    %v2311 = vunpack.c.l.b16 %v2240
    %v2312 = vunpack.c.l.b16 %v2241
    %v2313 = vunpack.c.l.b16 %v2242
    %v2314 = vunpack.c.l.b16 %v2243
    %v2315 = vunpack.c.l.b16 %v2244
    %v2316 = vunpack.c.l.b16 %v2245
    %v2317 = vunpack.c.l.b16 %v2246
    %v2318 = vunpack.c.l.b16 %v2247
    %v2319 = vpack.c.b16 %v2288, %v2287
    %v2320 = vpack.c.b16 %v2290, %v2289
    %v2321 = vpack.c.b16 %v2292, %v2291
    %v2322 = vpack.c.b16 %v2294, %v2293
    %v2323 = vpack.c.b16 %v2296, %v2295
    %v2324 = vpack.c.b16 %v2298, %v2297
    %v2325 = vpack.c.b16 %v2300, %v2299
    %v2326 = vpack.c.b16 %v2302, %v2301
    %v2327 = vpack.c.b16 %v2304, %v2303
    %v2328 = vpack.c.b16 %v2306, %v2305
    %v2329 = vpack.c.b16 %v2308, %v2307
    %v2330 = vpack.c.b16 %v2310, %v2309
    %v2331 = vpack.c.b16 %v2312, %v2311
    %v2332 = vpack.c.b16 %v2314, %v2313
    %v2333 = vpack.c.b16 %v2316, %v2315
    %v2334 = vpack.c.b16 %v2318, %v2317
    %2351 = vmatprep.subr.bf16.mxu0 0
    %2352 = vmatpush1.bf16.msra.mxu0 %v2319
    %2353 = vmatprep.subr.bf16.mxu0 0
    %2354 = vmatpush1.bf16.msra.mxu0 %v2320
    %2355 = vmatprep.subr.bf16.mxu0 0
    %2356 = vmatpush1.bf16.msra.mxu0 %v2321
    %2357 = vmatprep.subr.bf16.mxu0 0
    %2358 = vmatpush1.bf16.msra.mxu0 %v2322
    %2359 = vmatprep.subr.bf16.mxu0 0
    %2360 = vmatpush1.bf16.msra.mxu0 %v2323
    %2361 = vmatprep.subr.bf16.mxu0 0
    %2362 = vmatpush1.bf16.msra.mxu0 %v2324
    %2363 = vmatprep.subr.bf16.mxu0 0
    %2364 = vmatpush1.bf16.msra.mxu0 %v2325
    %2365 = vmatprep.subr.bf16.mxu0 0
    %2366 = vmatpush1.bf16.msra.mxu0 %v2326
    %2367 = vmatprep.subr.bf16.mxu0 0
    %2368 = vmatpush1.bf16.msra.mxu0 %v2327
    %2369 = vmatprep.subr.bf16.mxu0 0
    %2370 = vmatpush1.bf16.msra.mxu0 %v2328
    %2371 = vmatprep.subr.bf16.mxu0 0
    %2372 = vmatpush1.bf16.msra.mxu0 %v2329
    %2373 = vmatprep.subr.bf16.mxu0 0
    %2374 = vmatpush1.bf16.msra.mxu0 %v2330
    %2375 = vmatprep.subr.bf16.mxu0 0
    %2376 = vmatpush1.bf16.msra.mxu0 %v2331
    %2377 = vmatprep.subr.bf16.mxu0 0
    %2378 = vmatpush1.bf16.msra.mxu0 %v2332
    %2379 = vmatprep.subr.bf16.mxu0 0
    %2380 = vmatpush1.bf16.msra.mxu0 %v2333
    %2381 = vmatprep.subr.bf16.mxu0 0
    %2382 = vmatpush1.bf16.msra.mxu0 %v2334
    %2383 = vmatprep.mubr.bf16.mxu0 %v2215
    %2384 = vmatmul.mubr.bf16.gmra.mrb[0].mxu0 %v2214
    %v2385 = vpop.f32.mrb[0].mxu0
    %v2386 = vadd.f32 %v2253, %v2385
    %v2387 = vpop.f32.mrb[0].mxu0
    %v2388 = vpop.f32.mrb[0].mxu0
    %v2389 = vpop.f32.mrb[0].mxu0
    %2390 = vdwg.mxu0
    %vm2391 = vcmask 517120
    %2392 = vst.msk [vmem:[#allocation20] sm:$0x3] %vm2391, %v2386
    // Predicated region
    $region90: #{_forward.1} parent=1 // pred_check
      _
    $region91: #{_forward.1} parent=1 // pred_check_branch
      %2394 = sbr.rel (0) target = $region93
    $region92: #{_forward.1} parent=1 // pred_region
      %s2396 = ssub.s32 32, 32
      %2397 = vsyncadd [#allocation4], %s2396
      %s2399 = sshll.u32 [#allocation20], 4
      %s2400 = int_to_ptr.vmem [resolvable:$true] %s2399
      %2402 = dma.vmem_to_hbm [thread:$0]  %s2400, 32, %s11, [#allocation4]
    $region93: #{_forward.1} parent=1 // pred_fallthru
      _
    // Predicated region
    $region94: #{_forward.1} parent=1 // pred_check
      _
    $region95: #{_forward.1} parent=1 // pred_check_branch
      %2404 = sbr.rel (0) target = $region97
    $region96: #{_forward.1} parent=1 // pred_region
      %2405 = dma.done [#allocation4], 32
    $region97: #{_forward.1} parent=1 // pred_fallthru
      _
    %2406 = vsyncpa [#allocation3], 1
    %2407 = vsyncpa [#allocation6], 1
    %2408 = vsyncpa [#allocation9], 1
    %2409 = vsyncpa [#allocation12], 1
    %2410 = vsyncpa [#allocation15], 1
    %2411 = vsyncpa [#allocation18], 1
    %2412 = vsyncpa [#allocation4], 1

// kernel: _forward.1
$region0: #{_forward.1}
  #allocation0 [shape = 'u32[]', space=smem, size = 0x4, offset = 0x4, fixed_abs, tag = 'smem constant byte address 0x4 - core index']
  #allocation1 [shape = 'u32[144,128]{1,0:T(1,128)}', space=vmem, size = 0x12000, scoped, tag = 'internal scratch']
  %s0 = inlined_call_operand.hbm [shape: f32[2,64], index: 0, kind: input, shape index: {}]
  %s1 = inlined_call_operand.hbm [shape: bf16[64,256], index: 1, kind: input, shape index: {}]
  %s2 = inlined_call_operand.hbm [shape: f32[1,256], index: 2, kind: input, shape index: {}]
  %s3 = inlined_call_operand.hbm [shape: bf16[256,512], index: 3, kind: input, shape index: {}]
  %s4 = inlined_call_operand.hbm [shape: f32[1,512], index: 4, kind: input, shape index: {}]
  %s5 = inlined_call_operand.hbm [shape: bf16[512,512], index: 5, kind: input, shape index: {}]
  %s6 = inlined_call_operand.hbm [shape: f32[1,512], index: 6, kind: input, shape index: {}]
  %s7 = inlined_call_operand.hbm [shape: bf16[512,256], index: 7, kind: input, shape index: {}]
  %s8 = inlined_call_operand.hbm [shape: f32[1,256], index: 8, kind: input, shape index: {}]
  %s9 = inlined_call_operand.hbm [shape: bf16[256,64], index: 9, kind: input, shape index: {}]
  %s10 = inlined_call_operand.hbm [shape: f32[1,64], index: 10, kind: input, shape index: {}]
  %s11 = inlined_call_operand.hbm [shape: f32[2,64], index: 11, kind: output, shape index: {}]
  %s12 = sld [smem:[#allocation0]]
  $region98: #{_forward.1} parent=0
    _
  %s14 = ssub.s32 1, %s12
  %s15 = scalar_select 0, %s14, %s12
  $region1: #{_forward.1} parent=0
    #allocation2 [shape = 'u8[1024]{0}', space=vmem, size = 0x400, scoped, tag = 'input window, operand 0, single buffered']
    #allocation3 [shape = 's32[1]{0}', space=sflag, size = 0x4, scoped, tag = 'scoped memory for _forward.1']
    #allocation4 [shape = 's32[1]{0}', space=sflag, size = 0x4, scoped, tag = 'scoped memory for _forward.1']
    #allocation5 [shape = 'u8[32768]{0}', space=vmem, size = 0x8000, scoped, tag = 'input window, operand 1, single buffered']
    #allocation6 [shape = 's32[1]{0}', space=sflag, size = 0x4, scoped, tag = 'scoped memory for _forward.1']
    #allocation7 [shape = 'u8[1024]{0}', space=vmem, size = 0x400, scoped, tag = 'input window, operand 2, single buffered']
    #allocation8 [shape = 'u8[262144]{0}', space=vmem, size = 0x40000, scoped, tag = 'input window, operand 3, single buffered']
    #allocation9 [shape = 's32[1]{0}', space=sflag, size = 0x4, scoped, tag = 'scoped memory for _forward.1']
    #allocation10 [shape = 'u8[2048]{0}', space=vmem, size = 0x800, scoped, tag = 'input window, operand 4, single buffered']
    #allocation11 [shape = 'u8[524288]{0}', space=vmem, size = 0x80000, scoped, tag = 'input window, operand 5, single buffered']
    #allocation12 [shape = 's32[1]{0}', space=sflag, size = 0x4, scoped, tag = 'scoped memory for _forward.1']
    #allocation13 [shape = 'u8[2048]{0}', space=vmem, size = 0x800, scoped, tag = 'input window, operand 6, single buffered']
    #allocation14 [shape = 'u8[262144]{0}', space=vmem, size = 0x40000, scoped, tag = 'input window, operand 7, single buffered']
    #allocation15 [shape = 's32[1]{0}', space=sflag, size = 0x4, scoped, tag = 'scoped memory for _forward.1']
    #allocation16 [shape = 'u8[1024]{0}', space=vmem, size = 0x400, scoped, tag = 'input window, operand 8, single buffered']
    #allocation17 [shape = 'u8[65536]{0}', space=vmem, size = 0x10000, scoped, tag = 'input window, operand 9, single buffered']
    #allocation18 [shape = 's32[1]{0}', space=sflag, size = 0x4, scoped, tag = 'scoped memory for _forward.1']
    #allocation19 [shape = 'u8[512]{0}', space=vmem, size = 0x400, scoped, tag = 'input window, operand 10, single buffered']
    #allocation20 [shape = 'u8[1024]{0}', space=vmem, size = 0x400, scoped, tag = 'output window, operand 0, single buffered']
    %16 = vsyncpa [#allocation3], 0
    %17 = vsyncpa [#allocation6], 0
    %18 = vsyncpa [#allocation9], 0
    %19 = vsyncpa [#allocation12], 0
    %20 = vsyncpa [#allocation15], 0
    %21 = vsyncpa [#allocation18], 0
    %22 = vsyncpa [#allocation4], 0
    // Predicated region
    $region2: #{_forward.1} parent=1 // pred_check
      _
    $region3: #{_forward.1} parent=1 // pred_check_branch
      %24 = sbr.rel (0) target = $region5
    $region4: #{_forward.1} parent=1 // pred_region
      %s26 = ssub.s32 32, 32
      %27 = vsyncadd [#allocation3], %s26
      %s29 = sshll.u32 [#allocation2], 4
      %s30 = int_to_ptr.vmem [resolvable:$true] %s29
      %32 = dma.hbm_to_vmem [thread:$0]  %s0, 32, %s30, [#allocation3]
    $region5: #{_forward.1} parent=1 // pred_fallthru
      _
    // Predicated region
    $region6: #{_forward.1} parent=1 // pred_check
      _
    $region7: #{_forward.1} parent=1 // pred_check_branch
      %34 = sbr.rel (0) target = $region9
    $region8: #{_forward.1} parent=1 // pred_region
      %s36 = ssub.s32 1024, 1024
      %37 = vsyncadd [#allocation6], %s36
      %s38 = sshll.u32 [#allocation5], 4
      %s39 = int_to_ptr.vmem [resolvable:$true] %s38
      %44 = dma.hbm_to_vmem [thread:$0]  %s1, 1024, %s39, [#allocation6], 128, 128, 8
    $region9: #{_forward.1} parent=1 // pred_fallthru
      _
    // Predicated region
    $region10: #{_forward.1} parent=1 // pred_check
      _
    $region11: #{_forward.1} parent=1 // pred_check_branch
      %46 = sbr.rel (0) target = $region13
    $region12: #{_forward.1} parent=1 // pred_region
      %s48 = ssub.s32 32, 32
      %49 = vsyncadd [#allocation6], %s48
      %s51 = sshll.u32 [#allocation7], 4
      %s52 = int_to_ptr.vmem [resolvable:$true] %s51
      %54 = dma.hbm_to_vmem [thread:$0]  %s2, 32, %s52, [#allocation6]
    $region13: #{_forward.1} parent=1 // pred_fallthru
      _
    // Predicated region
    $region14: #{_forward.1} parent=1 // pred_check
      _
    $region15: #{_forward.1} parent=1 // pred_check_branch
      %56 = sbr.rel (0) target = $region17
    $region16: #{_forward.1} parent=1 // pred_region
      %s58 = ssub.s32 8192, 8192
      %59 = vsyncadd [#allocation9], %s58
      %s60 = sshll.u32 [#allocation8], 4
      %s61 = int_to_ptr.vmem [resolvable:$true] %s60
      %66 = dma.hbm_to_vmem [thread:$0]  %s3, 8192, %s61, [#allocation9], 256, 256, 16
    $region17: #{_forward.1} parent=1 // pred_fallthru
      _
    // Predicated region
    $region18: #{_forward.1} parent=1 // pred_check
      _
    $region19: #{_forward.1} parent=1 // pred_check_branch
      %68 = sbr.rel (0) target = $region21
    $region20: #{_forward.1} parent=1 // pred_region
      %s70 = ssub.s32 64, 64
      %71 = vsyncadd [#allocation9], %s70
      %s73 = sshll.u32 [#allocation10], 4
      %s74 = int_to_ptr.vmem [resolvable:$true] %s73
      %76 = dma.hbm_to_vmem [thread:$0]  %s4, 64, %s74, [#allocation9]
    $region21: #{_forward.1} parent=1 // pred_fallthru
      _
    // Predicated region
    $region22: #{_forward.1} parent=1 // pred_check
      _
    $region23: #{_forward.1} parent=1 // pred_check_branch
      %78 = sbr.rel (0) target = $region25
    $region24: #{_forward.1} parent=1 // pred_region
      %s80 = ssub.s32 16384, 16384
      %81 = vsyncadd [#allocation12], %s80
      %s82 = sshll.u32 [#allocation11], 4
      %s83 = int_to_ptr.vmem [resolvable:$true] %s82
      %88 = dma.hbm_to_vmem [thread:$0]  %s5, 16384, %s83, [#allocation12], 256, 256, 16
    $region25: #{_forward.1} parent=1 // pred_fallthru
      _
    // Predicated region
    $region26: #{_forward.1} parent=1 // pred_check
      _
    $region27: #{_forward.1} parent=1 // pred_check_branch
      %90 = sbr.rel (0) target = $region29
    $region28: #{_forward.1} parent=1 // pred_region
      %s92 = ssub.s32 64, 64
      %93 = vsyncadd [#allocation12], %s92
      %s95 = sshll.u32 [#allocation13], 4
      %s96 = int_to_ptr.vmem [resolvable:$true] %s95
      %98 = dma.hbm_to_vmem [thread:$0]  %s6, 64, %s96, [#allocation12]
    $region29: #{_forward.1} parent=1 // pred_fallthru
      _
    // Predicated region
    $region30: #{_forward.1} parent=1 // pred_check
      _
    $region31: #{_forward.1} parent=1 // pred_check_branch
      %100 = sbr.rel (0) target = $region33
    $region32: #{_forward.1} parent=1 // pred_region
      %s102 = ssub.s32 8192, 8192
      %103 = vsyncadd [#allocation15], %s102
      %s104 = sshll.u32 [#allocation14], 4
      %s105 = int_to_ptr.vmem [resolvable:$true] %s104
      %110 = dma.hbm_to_vmem [thread:$0]  %s7, 8192, %s105, [#allocation15], 128, 128, 8
    $region33: #{_forward.1} parent=1 // pred_fallthru
      _
    // Predicated region
    $region34: #{_forward.1} parent=1 // pred_check
      _
    $region35: #{_forward.1} parent=1 // pred_check_branch
      %112 = sbr.rel (0) target = $region37
    $region36: #{_forward.1} parent=1 // pred_region
      %s114 = ssub.s32 32, 32
      %115 = vsyncadd [#allocation15], %s114
      %s117 = sshll.u32 [#allocation16], 4
      %s118 = int_to_ptr.vmem [resolvable:$true] %s117
      %120 = dma.hbm_to_vmem [thread:$0]  %s8, 32, %s118, [#allocation15]
    $region37: #{_forward.1} parent=1 // pred_fallthru
      _
    // Predicated region
    $region38: #{_forward.1} parent=1 // pred_check
      _
    $region39: #{_forward.1} parent=1 // pred_check_branch
      %122 = sbr.rel (0) target = $region41
    $region40: #{_forward.1} parent=1 // pred_region
      %s124 = ssub.s32 2048, 2048
      %125 = vsyncadd [#allocation18], %s124
      %s126 = sshll.u32 [#allocation17], 4
      %s127 = int_to_ptr.vmem [resolvable:$true] %s126
      %132 = dma.hbm_to_vmem [thread:$0]  %s9, 2048, %s127, [#allocation18], 64, 64, 4
    $region41: #{_forward.1} parent=1 // pred_fallthru
      _
    // Predicated region
    $region42: #{_forward.1} parent=1 // pred_check
      _
    $region43: #{_forward.1} parent=1 // pred_check_branch
      %134 = sbr.rel (0) target = $region45
    $region44: #{_forward.1} parent=1 // pred_region
      %s136 = ssub.s32 16, 16
      %137 = vsyncadd [#allocation18], %s136
      %s139 = sshll.u32 [#allocation19], 4
      %s140 = int_to_ptr.vmem [resolvable:$true] %s139
      %142 = dma.hbm_to_vmem [thread:$0]  %s10, 16, %s140, [#allocation18]
    $region45: #{_forward.1} parent=1 // pred_fallthru
      _
    // Predicated region
    $region46: #{_forward.1} parent=1 // pred_check
      _
    $region47: #{_forward.1} parent=1 // pred_check_branch
      %144 = sbr.rel (0) target = $region49
    $region48: #{_forward.1} parent=1 // pred_region
      %145 = dma.done [#allocation3], 32
    $region49: #{_forward.1} parent=1 // pred_fallthru
      _
    // Predicated region
    $region50: #{_forward.1} parent=1 // pred_check
      _
    $region51: #{_forward.1} parent=1 // pred_check_branch
      %147 = sbr.rel (0) target = $region53
    $region52: #{_forward.1} parent=1 // pred_region
      %148 = dma.done [#allocation6], 1024
    $region53: #{_forward.1} parent=1 // pred_fallthru
      _
    // Predicated region
    $region54: #{_forward.1} parent=1 // pred_check
      _
    $region55: #{_forward.1} parent=1 // pred_check_branch
      %150 = sbr.rel (0) target = $region57
    $region56: #{_forward.1} parent=1 // pred_region
      %151 = dma.done [#allocation6], 32
    $region57: #{_forward.1} parent=1 // pred_fallthru
      _
    // Predicated region
    $region58: #{_forward.1} parent=1 // pred_check
      _
    $region59: #{_forward.1} parent=1 // pred_check_branch
      %153 = sbr.rel (0) target = $region61
    $region60: #{_forward.1} parent=1 // pred_region
      %154 = dma.done [#allocation9], 8192
    $region61: #{_forward.1} parent=1 // pred_fallthru
      _
    // Predicated region
    $region62: #{_forward.1} parent=1 // pred_check
      _
    $region63: #{_forward.1} parent=1 // pred_check_branch
      %156 = sbr.rel (0) target = $region65
    $region64: #{_forward.1} parent=1 // pred_region
      %157 = dma.done [#allocation9], 64
    $region65: #{_forward.1} parent=1 // pred_fallthru
      _
    // Predicated region
    $region66: #{_forward.1} parent=1 // pred_check
      _
    $region67: #{_forward.1} parent=1 // pred_check_branch
      %159 = sbr.rel (0) target = $region69
    $region68: #{_forward.1} parent=1 // pred_region
      %160 = dma.done [#allocation12], 16384
    $region69: #{_forward.1} parent=1 // pred_fallthru
      _
    // Predicated region
    $region70: #{_forward.1} parent=1 // pred_check
      _
    $region71: #{_forward.1} parent=1 // pred_check_branch
      %162 = sbr.rel (0) target = $region73
    $region72: #{_forward.1} parent=1 // pred_region
      %163 = dma.done [#allocation12], 64
    $region73: #{_forward.1} parent=1 // pred_fallthru
      _
    // Predicated region
    $region74: #{_forward.1} parent=1 // pred_check
      _
    $region75: #{_forward.1} parent=1 // pred_check_branch
      %165 = sbr.rel (0) target = $region77
    $region76: #{_forward.1} parent=1 // pred_region
      %166 = dma.done [#allocation15], 8192
    $region77: #{_forward.1} parent=1 // pred_fallthru
      _
    // Predicated region
    $region78: #{_forward.1} parent=1 // pred_check
      _
    $region79: #{_forward.1} parent=1 // pred_check_branch
      %168 = sbr.rel (0) target = $region81
    $region80: #{_forward.1} parent=1 // pred_region
      %169 = dma.done [#allocation15], 32
    $region81: #{_forward.1} parent=1 // pred_fallthru
      _
    // Predicated region
    $region82: #{_forward.1} parent=1 // pred_check
      _
    $region83: #{_forward.1} parent=1 // pred_check_branch
      %171 = sbr.rel (0) target = $region85
    $region84: #{_forward.1} parent=1 // pred_region
      %172 = dma.done [#allocation18], 2048
    $region85: #{_forward.1} parent=1 // pred_fallthru
      _
    // Predicated region
    $region86: #{_forward.1} parent=1 // pred_check
      _
    $region87: #{_forward.1} parent=1 // pred_check_branch
      %174 = sbr.rel (0) target = $region89
    $region88: #{_forward.1} parent=1 // pred_region
      %175 = dma.done [#allocation18], 16
    $region89: #{_forward.1} parent=1 // pred_fallthru
      _
    %v177 = vld [vmem:[#allocation2] sm:$0x3]
    %v178 = vpack.c.bf16 %v177, %v177
    %v179 = vld [vmem:[#allocation5] sm:$0xff]
    %v180 = vld [vmem:[#allocation5 + $0x8] sm:$0xff]
    %v181 = vld [vmem:[#allocation5 + $0x10] sm:$0xff]
    %v182 = vld [vmem:[#allocation5 + $0x18] sm:$0xff]
    %v183 = vld [vmem:[#allocation5 + $0x20] sm:$0xff]
    %v184 = vld [vmem:[#allocation5 + $0x28] sm:$0xff]
    %v185 = vld [vmem:[#allocation5 + $0x30] sm:$0xff]
    %v186 = vld [vmem:[#allocation5 + $0x38] sm:$0xff]
    %v187 = vld [vmem:[#allocation7] sm:$0x3]
    %v189 = vlaneseq
    %v190 = vshrl.u32 %v189, 7
    %v191 = vsub.s32 0, %v190
    %v192 = vrot.slane %v187, %v191
    %v193 = vlaneseq
    %v194 = vshrl.u32 %v193, 7
    %v195 = vsub.s32 1, %v194
    %v196 = vrot.slane %v187, %v195
    %v207 = vunpack.c.l.b16 %v179
    %v208 = vunpack.c.h.b16 %v179
    %v209 = vunpack.c.l.b16 %v180
    %v210 = vunpack.c.h.b16 %v180
    %v211 = vunpack.c.l.b16 %v181
    %v212 = vunpack.c.h.b16 %v181
    %v213 = vunpack.c.l.b16 %v182
    %v214 = vunpack.c.h.b16 %v182
    %v215 = vunpack.c.l.b16 %v183
    %v216 = vunpack.c.h.b16 %v183
    %v217 = vunpack.c.l.b16 %v184
    %v218 = vunpack.c.h.b16 %v184
    %v219 = vunpack.c.l.b16 %v185
    %v220 = vunpack.c.h.b16 %v185
    %v221 = vunpack.c.l.b16 %v186
    %v222 = vunpack.c.h.b16 %v186
    %v223 = vpack.c.b16 %v209, %v207
    %v224 = vpack.c.b16 %v210, %v208
    %v225 = vpack.c.b16 %v213, %v211
    %v226 = vpack.c.b16 %v214, %v212
    %v227 = vpack.c.b16 %v217, %v215
    %v228 = vpack.c.b16 %v218, %v216
    %v229 = vpack.c.b16 %v221, %v219
    %v230 = vpack.c.b16 %v222, %v220
    %vm239 = vcmask 523264
    %v241 = vsel %vm239, %v178, 0
    %243 = vmatprep.subr.bf16.mxu0 %v224
    %244 = vmatpush1.bf16.msra.mxu0 %v223
    %245 = vmatprep.subr.bf16.mxu0 %v226
    %246 = vmatpush1.bf16.msra.mxu0 %v225
    %247 = vmatprep.subr.bf16.mxu0 %v228
    %248 = vmatpush1.bf16.msra.mxu0 %v227
    %249 = vmatprep.subr.bf16.mxu0 %v230
    %250 = vmatpush1.bf16.msra.mxu0 %v229
    %251 = vmatprep.subr.bf16.mxu0 0
    %252 = vmatpush1.bf16.msra.mxu0 0
    %253 = vmatprep.subr.bf16.mxu0 0
    %254 = vmatpush1.bf16.msra.mxu0 0
    %255 = vmatprep.subr.bf16.mxu0 0
    %256 = vmatpush1.bf16.msra.mxu0 0
    %257 = vmatprep.subr.bf16.mxu0 0
    %258 = vmatpush1.bf16.msra.mxu0 0
    %259 = vmatprep.subr.bf16.mxu0 0
    %260 = vmatpush1.bf16.msra.mxu0 0
    %261 = vmatprep.subr.bf16.mxu0 0
    %262 = vmatpush1.bf16.msra.mxu0 0
    %263 = vmatprep.subr.bf16.mxu0 0
    %264 = vmatpush1.bf16.msra.mxu0 0
    %265 = vmatprep.subr.bf16.mxu0 0
    %266 = vmatpush1.bf16.msra.mxu0 0
    %267 = vmatprep.subr.bf16.mxu0 0
    %268 = vmatpush1.bf16.msra.mxu0 0
    %269 = vmatprep.subr.bf16.mxu0 0
    %270 = vmatpush1.bf16.msra.mxu0 0
    %271 = vmatprep.subr.bf16.mxu0 0
    %272 = vmatpush1.bf16.msra.mxu0 0
    %273 = vmatprep.subr.bf16.mxu0 0
    %274 = vmatpush1.bf16.msra.mxu0 0
    %275 = vmatprep.mubr.bf16.mxu0 0
    %276 = vmatmul.mubr.bf16.gmra.mrb[0].mxu0 %v241
    %v277 = vpop.f32.mrb[0].mxu0
    %v278 = vadd.f32 %v192, %v277
    %v279 = vpop.f32.mrb[0].mxu0
    %v280 = vadd.f32 %v196, %v279
    %v281 = vpop.f32.mrb[0].mxu0
    %v282 = vpop.f32.mrb[0].mxu0
    %283 = vdwg.mxu0
    %v284 = vpack.c.bf16 %v278, %v278
    %v285 = vpack.c.bf16 %v280, %v280
    %v286 = vld [vmem:[#allocation8] sm:$0xff]
    %v287 = vld [vmem:[#allocation8 + $0x8] sm:$0xff]
    %v288 = vld [vmem:[#allocation8 + $0x10] sm:$0xff]
    %v289 = vld [vmem:[#allocation8 + $0x18] sm:$0xff]
    %v290 = vld [vmem:[#allocation8 + $0x20] sm:$0xff]
    %v291 = vld [vmem:[#allocation8 + $0x28] sm:$0xff]
    %v292 = vld [vmem:[#allocation8 + $0x30] sm:$0xff]
    %v293 = vld [vmem:[#allocation8 + $0x38] sm:$0xff]
    %v294 = vld [vmem:[#allocation8 + $0x40] sm:$0xff]
    %v295 = vld [vmem:[#allocation8 + $0x48] sm:$0xff]
    %v296 = vld [vmem:[#allocation8 + $0x50] sm:$0xff]
    %v297 = vld [vmem:[#allocation8 + $0x58] sm:$0xff]
    %v298 = vld [vmem:[#allocation8 + $0x60] sm:$0xff]
    %v299 = vld [vmem:[#allocation8 + $0x68] sm:$0xff]
    %v300 = vld [vmem:[#allocation8 + $0x70] sm:$0xff]
    %v301 = vld [vmem:[#allocation8 + $0x78] sm:$0xff]
    %v302 = vld [vmem:[#allocation8 + $0x80] sm:$0xff]
    %v303 = vld [vmem:[#allocation8 + $0x88] sm:$0xff]
    %v304 = vld [vmem:[#allocation8 + $0x90] sm:$0xff]
    %v305 = vld [vmem:[#allocation8 + $0x98] sm:$0xff]
    %v306 = vld [vmem:[#allocation8 + $0xa0] sm:$0xff]
    %v307 = vld [vmem:[#allocation8 + $0xa8] sm:$0xff]
    %v308 = vld [vmem:[#allocation8 + $0xb0] sm:$0xff]
    %v309 = vld [vmem:[#allocation8 + $0xb8] sm:$0xff]
    %v310 = vld [vmem:[#allocation8 + $0xc0] sm:$0xff]
    %v311 = vld [vmem:[#allocation8 + $0xc8] sm:$0xff]
    %v312 = vld [vmem:[#allocation8 + $0xd0] sm:$0xff]
    %v313 = vld [vmem:[#allocation8 + $0xd8] sm:$0xff]
    %v314 = vld [vmem:[#allocation8 + $0xe0] sm:$0xff]
    %v315 = vld [vmem:[#allocation8 + $0xe8] sm:$0xff]
    %v316 = vld [vmem:[#allocation8 + $0xf0] sm:$0xff]
    %v317 = vld [vmem:[#allocation8 + $0xf8] sm:$0xff]
    %v318 = vld [vmem:[#allocation8 + $0x100] sm:$0xff]
    %v319 = vld [vmem:[#allocation8 + $0x108] sm:$0xff]
    %v320 = vld [vmem:[#allocation8 + $0x110] sm:$0xff]
    %v321 = vld [vmem:[#allocation8 + $0x118] sm:$0xff]
    %v322 = vld [vmem:[#allocation8 + $0x120] sm:$0xff]
    %v323 = vld [vmem:[#allocation8 + $0x128] sm:$0xff]
    %v324 = vld [vmem:[#allocation8 + $0x130] sm:$0xff]
    %v325 = vld [vmem:[#allocation8 + $0x138] sm:$0xff]
    %v326 = vld [vmem:[#allocation8 + $0x140] sm:$0xff]
    %v327 = vld [vmem:[#allocation8 + $0x148] sm:$0xff]
    %v328 = vld [vmem:[#allocation8 + $0x150] sm:$0xff]
    %v329 = vld [vmem:[#allocation8 + $0x158] sm:$0xff]
    %v330 = vld [vmem:[#allocation8 + $0x160] sm:$0xff]
    %v331 = vld [vmem:[#allocation8 + $0x168] sm:$0xff]
    %v332 = vld [vmem:[#allocation8 + $0x170] sm:$0xff]
    %v333 = vld [vmem:[#allocation8 + $0x178] sm:$0xff]
    %v334 = vld [vmem:[#allocation8 + $0x180] sm:$0xff]
    %v335 = vld [vmem:[#allocation8 + $0x188] sm:$0xff]
    %v336 = vld [vmem:[#allocation8 + $0x190] sm:$0xff]
    %v337 = vld [vmem:[#allocation8 + $0x198] sm:$0xff]
    %v338 = vld [vmem:[#allocation8 + $0x1a0] sm:$0xff]
    %v339 = vld [vmem:[#allocation8 + $0x1a8] sm:$0xff]
    %v340 = vld [vmem:[#allocation8 + $0x1b0] sm:$0xff]
    %v341 = vld [vmem:[#allocation8 + $0x1b8] sm:$0xff]
    %v342 = vld [vmem:[#allocation8 + $0x1c0] sm:$0xff]
    %v343 = vld [vmem:[#allocation8 + $0x1c8] sm:$0xff]
    %v344 = vld [vmem:[#allocation8 + $0x1d0] sm:$0xff]
    %v345 = vld [vmem:[#allocation8 + $0x1d8] sm:$0xff]
    %v346 = vld [vmem:[#allocation8 + $0x1e0] sm:$0xff]
    %v347 = vld [vmem:[#allocation8 + $0x1e8] sm:$0xff]
    %v348 = vld [vmem:[#allocation8 + $0x1f0] sm:$0xff]
    %v349 = vld [vmem:[#allocation8 + $0x1f8] sm:$0xff]
    %v350 = vld [vmem:[#allocation10] sm:$0xf]
    %v352 = vlaneseq
    %v353 = vshrl.u32 %v352, 7
    %v354 = vsub.s32 0, %v353
    %v355 = vrot.slane %v350, %v354
    %v356 = vlaneseq
    %v357 = vshrl.u32 %v356, 7
    %v358 = vsub.s32 1, %v357
    %v359 = vrot.slane %v350, %v358
    %v360 = vlaneseq
    %v361 = vshrl.u32 %v360, 7
    %v362 = vsub.s32 2, %v361
    %v363 = vrot.slane %v350, %v362
    %v364 = vlaneseq
    %v365 = vshrl.u32 %v364, 7
    %v366 = vsub.s32 3, %v365
    %v367 = vrot.slane %v350, %v366
    %v436 = vunpack.c.l.b16 %v286
    %v437 = vunpack.c.h.b16 %v286
    %v438 = vunpack.c.l.b16 %v287
    %v439 = vunpack.c.h.b16 %v287
    %v440 = vunpack.c.l.b16 %v288
    %v441 = vunpack.c.h.b16 %v288
    %v442 = vunpack.c.l.b16 %v289
    %v443 = vunpack.c.h.b16 %v289
    %v444 = vunpack.c.l.b16 %v290
    %v445 = vunpack.c.h.b16 %v290
    %v446 = vunpack.c.l.b16 %v291
    %v447 = vunpack.c.h.b16 %v291
    %v448 = vunpack.c.l.b16 %v292
    %v449 = vunpack.c.h.b16 %v292
    %v450 = vunpack.c.l.b16 %v293
    %v451 = vunpack.c.h.b16 %v293
    %v452 = vunpack.c.l.b16 %v294
    %v453 = vunpack.c.h.b16 %v294
    %v454 = vunpack.c.l.b16 %v295
    %v455 = vunpack.c.h.b16 %v295
    %v456 = vunpack.c.l.b16 %v296
    %v457 = vunpack.c.h.b16 %v296
    %v458 = vunpack.c.l.b16 %v297
    %v459 = vunpack.c.h.b16 %v297
    %v460 = vunpack.c.l.b16 %v298
    %v461 = vunpack.c.h.b16 %v298
    %v462 = vunpack.c.l.b16 %v299
    %v463 = vunpack.c.h.b16 %v299
    %v464 = vunpack.c.l.b16 %v300
    %v465 = vunpack.c.h.b16 %v300
    %v466 = vunpack.c.l.b16 %v301
    %v467 = vunpack.c.h.b16 %v301
    %v468 = vunpack.c.l.b16 %v302
    %v469 = vunpack.c.h.b16 %v302
    %v470 = vunpack.c.l.b16 %v303
    %v471 = vunpack.c.h.b16 %v303
    %v472 = vunpack.c.l.b16 %v304
    %v473 = vunpack.c.h.b16 %v304
    %v474 = vunpack.c.l.b16 %v305
    %v475 = vunpack.c.h.b16 %v305
    %v476 = vunpack.c.l.b16 %v306
    %v477 = vunpack.c.h.b16 %v306
    %v478 = vunpack.c.l.b16 %v307
    %v479 = vunpack.c.h.b16 %v307
    %v480 = vunpack.c.l.b16 %v308
    %v481 = vunpack.c.h.b16 %v308
    %v482 = vunpack.c.l.b16 %v309
    %v483 = vunpack.c.h.b16 %v309
    %v484 = vunpack.c.l.b16 %v310
    %v485 = vunpack.c.h.b16 %v310
    %v486 = vunpack.c.l.b16 %v311
    %v487 = vunpack.c.h.b16 %v311
    %v488 = vunpack.c.l.b16 %v312
    %v489 = vunpack.c.h.b16 %v312
    %v490 = vunpack.c.l.b16 %v313
    %v491 = vunpack.c.h.b16 %v313
    %v492 = vunpack.c.l.b16 %v314
    %v493 = vunpack.c.h.b16 %v314
    %v494 = vunpack.c.l.b16 %v315
    %v495 = vunpack.c.h.b16 %v315
    %v496 = vunpack.c.l.b16 %v316
    %v497 = vunpack.c.h.b16 %v316
    %v498 = vunpack.c.l.b16 %v317
    %v499 = vunpack.c.h.b16 %v317
    %v500 = vunpack.c.l.b16 %v318
    %v501 = vunpack.c.h.b16 %v318
    %v502 = vunpack.c.l.b16 %v319
    %v503 = vunpack.c.h.b16 %v319
    %v504 = vunpack.c.l.b16 %v320
    %v505 = vunpack.c.h.b16 %v320
    %v506 = vunpack.c.l.b16 %v321
    %v507 = vunpack.c.h.b16 %v321
    %v508 = vunpack.c.l.b16 %v322
    %v509 = vunpack.c.h.b16 %v322
    %v510 = vunpack.c.l.b16 %v323
    %v511 = vunpack.c.h.b16 %v323
    %v512 = vunpack.c.l.b16 %v324
    %v513 = vunpack.c.h.b16 %v324
    %v514 = vunpack.c.l.b16 %v325
    %v515 = vunpack.c.h.b16 %v325
    %v516 = vunpack.c.l.b16 %v326
    %v517 = vunpack.c.h.b16 %v326
    %v518 = vunpack.c.l.b16 %v327
    %v519 = vunpack.c.h.b16 %v327
    %v520 = vunpack.c.l.b16 %v328
    %v521 = vunpack.c.h.b16 %v328
    %v522 = vunpack.c.l.b16 %v329
    %v523 = vunpack.c.h.b16 %v329
    %v524 = vunpack.c.l.b16 %v330
    %v525 = vunpack.c.h.b16 %v330
    %v526 = vunpack.c.l.b16 %v331
    %v527 = vunpack.c.h.b16 %v331
    %v528 = vunpack.c.l.b16 %v332
    %v529 = vunpack.c.h.b16 %v332
    %v530 = vunpack.c.l.b16 %v333
    %v531 = vunpack.c.h.b16 %v333
    %v532 = vunpack.c.l.b16 %v334
    %v533 = vunpack.c.h.b16 %v334
    %v534 = vunpack.c.l.b16 %v335
    %v535 = vunpack.c.h.b16 %v335
    %v536 = vunpack.c.l.b16 %v336
    %v537 = vunpack.c.h.b16 %v336
    %v538 = vunpack.c.l.b16 %v337
    %v539 = vunpack.c.h.b16 %v337
    %v540 = vunpack.c.l.b16 %v338
    %v541 = vunpack.c.h.b16 %v338
    %v542 = vunpack.c.l.b16 %v339
    %v543 = vunpack.c.h.b16 %v339
    %v544 = vunpack.c.l.b16 %v340
    %v545 = vunpack.c.h.b16 %v340
    %v546 = vunpack.c.l.b16 %v341
    %v547 = vunpack.c.h.b16 %v341
    %v548 = vunpack.c.l.b16 %v342
    %v549 = vunpack.c.h.b16 %v342
    %v550 = vunpack.c.l.b16 %v343
    %v551 = vunpack.c.h.b16 %v343
    %v552 = vunpack.c.l.b16 %v344
    %v553 = vunpack.c.h.b16 %v344
    %v554 = vunpack.c.l.b16 %v345
    %v555 = vunpack.c.h.b16 %v345
    %v556 = vunpack.c.l.b16 %v346
    %v557 = vunpack.c.h.b16 %v346
    %v558 = vunpack.c.l.b16 %v347
    %v559 = vunpack.c.h.b16 %v347
    %v560 = vunpack.c.l.b16 %v348
    %v561 = vunpack.c.h.b16 %v348
    %v562 = vunpack.c.l.b16 %v349
    %v563 = vunpack.c.h.b16 %v349
    %v564 = vpack.c.b16 %v440, %v436
    %v565 = vpack.c.b16 %v441, %v437
    %v566 = vpack.c.b16 %v442, %v438
    %v567 = vpack.c.b16 %v443, %v439
    %v568 = vpack.c.b16 %v448, %v444
    %v569 = vpack.c.b16 %v449, %v445
    %v570 = vpack.c.b16 %v450, %v446
    %v571 = vpack.c.b16 %v451, %v447
    %v572 = vpack.c.b16 %v456, %v452
    %v573 = vpack.c.b16 %v457, %v453
    %v574 = vpack.c.b16 %v458, %v454
    %v575 = vpack.c.b16 %v459, %v455
    %v576 = vpack.c.b16 %v464, %v460
    %v577 = vpack.c.b16 %v465, %v461
    %v578 = vpack.c.b16 %v466, %v462
    %v579 = vpack.c.b16 %v467, %v463
    %v580 = vpack.c.b16 %v472, %v468
    %v581 = vpack.c.b16 %v473, %v469
    %v582 = vpack.c.b16 %v474, %v470
    %v583 = vpack.c.b16 %v475, %v471
    %v584 = vpack.c.b16 %v480, %v476
    %v585 = vpack.c.b16 %v481, %v477
    %v586 = vpack.c.b16 %v482, %v478
    %v587 = vpack.c.b16 %v483, %v479
    %v588 = vpack.c.b16 %v488, %v484
    %v589 = vpack.c.b16 %v489, %v485
    %v590 = vpack.c.b16 %v490, %v486
    %v591 = vpack.c.b16 %v491, %v487
    %v592 = vpack.c.b16 %v496, %v492
    %v593 = vpack.c.b16 %v497, %v493
    %v594 = vpack.c.b16 %v498, %v494
    %v595 = vpack.c.b16 %v499, %v495
    %v596 = vpack.c.b16 %v504, %v500
    %v597 = vpack.c.b16 %v505, %v501
    %v598 = vpack.c.b16 %v506, %v502
    %v599 = vpack.c.b16 %v507, %v503
    %v600 = vpack.c.b16 %v512, %v508
    %v601 = vpack.c.b16 %v513, %v509
    %v602 = vpack.c.b16 %v514, %v510
    %v603 = vpack.c.b16 %v515, %v511
    %v604 = vpack.c.b16 %v520, %v516
    %v605 = vpack.c.b16 %v521, %v517
    %v606 = vpack.c.b16 %v522, %v518
    %v607 = vpack.c.b16 %v523, %v519
    %v608 = vpack.c.b16 %v528, %v524
    %v609 = vpack.c.b16 %v529, %v525
    %v610 = vpack.c.b16 %v530, %v526
    %v611 = vpack.c.b16 %v531, %v527
    %v612 = vpack.c.b16 %v536, %v532
    %v613 = vpack.c.b16 %v537, %v533
    %v614 = vpack.c.b16 %v538, %v534
    %v615 = vpack.c.b16 %v539, %v535
    %v616 = vpack.c.b16 %v544, %v540
    %v617 = vpack.c.b16 %v545, %v541
    %v618 = vpack.c.b16 %v546, %v542
    %v619 = vpack.c.b16 %v547, %v543
    %v620 = vpack.c.b16 %v552, %v548
    %v621 = vpack.c.b16 %v553, %v549
    %v622 = vpack.c.b16 %v554, %v550
    %v623 = vpack.c.b16 %v555, %v551
    %v624 = vpack.c.b16 %v560, %v556
    %v625 = vpack.c.b16 %v561, %v557
    %v626 = vpack.c.b16 %v562, %v558
    %v627 = vpack.c.b16 %v563, %v559
    %692 = vmatprep.subr.bf16.mxu0 %v565
    %693 = vmatpush1.bf16.msra.mxu0 %v564
    %694 = vmatprep.subr.bf16.mxu0 %v569
    %695 = vmatpush1.bf16.msra.mxu0 %v568
    %696 = vmatprep.subr.bf16.mxu0 %v573
    %697 = vmatpush1.bf16.msra.mxu0 %v572
    %698 = vmatprep.subr.bf16.mxu0 %v577
    %699 = vmatpush1.bf16.msra.mxu0 %v576
    %700 = vmatprep.subr.bf16.mxu0 %v581
    %701 = vmatpush1.bf16.msra.mxu0 %v580
    %702 = vmatprep.subr.bf16.mxu0 %v585
    %703 = vmatpush1.bf16.msra.mxu0 %v584
    %704 = vmatprep.subr.bf16.mxu0 %v589
    %705 = vmatpush1.bf16.msra.mxu0 %v588
    %706 = vmatprep.subr.bf16.mxu0 %v593
    %707 = vmatpush1.bf16.msra.mxu0 %v592
    %708 = vmatprep.subr.bf16.mxu0 %v597
    %709 = vmatpush1.bf16.msra.mxu0 %v596
    %710 = vmatprep.subr.bf16.mxu0 %v601
    %711 = vmatpush1.bf16.msra.mxu0 %v600
    %712 = vmatprep.subr.bf16.mxu0 %v605
    %713 = vmatpush1.bf16.msra.mxu0 %v604
    %714 = vmatprep.subr.bf16.mxu0 %v609
    %715 = vmatpush1.bf16.msra.mxu0 %v608
    %716 = vmatprep.subr.bf16.mxu0 %v613
    %717 = vmatpush1.bf16.msra.mxu0 %v612
    %718 = vmatprep.subr.bf16.mxu0 %v617
    %719 = vmatpush1.bf16.msra.mxu0 %v616
    %720 = vmatprep.subr.bf16.mxu0 %v621
    %721 = vmatpush1.bf16.msra.mxu0 %v620
    %722 = vmatprep.subr.bf16.mxu0 %v625
    %723 = vmatpush1.bf16.msra.mxu0 %v624
    %724 = vmatprep.mubr.bf16.mxu0 %v285
    %725 = vmatmul.mubr.bf16.gmra.mrb[0].mxu0 %v284
    %v726 = vpop.f32.mrb[0].mxu0
    %v727 = vadd.f32 %v355, %v726
    %v728 = vpop.f32.mrb[0].mxu0
    %v729 = vadd.f32 %v359, %v728
    %v730 = vpop.f32.mrb[0].mxu0
    %v731 = vpop.f32.mrb[0].mxu0
    %732 = vdwg.mxu0
    %733 = vmatprep.subr.bf16.mxu0 %v567
    %734 = vmatpush1.bf16.msra.mxu0 %v566
    %735 = vmatprep.subr.bf16.mxu0 %v571
    %736 = vmatpush1.bf16.msra.mxu0 %v570
    %737 = vmatprep.subr.bf16.mxu0 %v575
    %738 = vmatpush1.bf16.msra.mxu0 %v574
    %739 = vmatprep.subr.bf16.mxu0 %v579
    %740 = vmatpush1.bf16.msra.mxu0 %v578
    %741 = vmatprep.subr.bf16.mxu0 %v583
    %742 = vmatpush1.bf16.msra.mxu0 %v582
    %743 = vmatprep.subr.bf16.mxu0 %v587
    %744 = vmatpush1.bf16.msra.mxu0 %v586
    %745 = vmatprep.subr.bf16.mxu0 %v591
    %746 = vmatpush1.bf16.msra.mxu0 %v590
    %747 = vmatprep.subr.bf16.mxu0 %v595
    %748 = vmatpush1.bf16.msra.mxu0 %v594
    %749 = vmatprep.subr.bf16.mxu0 %v599
    %750 = vmatpush1.bf16.msra.mxu0 %v598
    %751 = vmatprep.subr.bf16.mxu0 %v603
    %752 = vmatpush1.bf16.msra.mxu0 %v602
    %753 = vmatprep.subr.bf16.mxu0 %v607
    %754 = vmatpush1.bf16.msra.mxu0 %v606
    %755 = vmatprep.subr.bf16.mxu0 %v611
    %756 = vmatpush1.bf16.msra.mxu0 %v610
    %757 = vmatprep.subr.bf16.mxu0 %v615
    %758 = vmatpush1.bf16.msra.mxu0 %v614
    %759 = vmatprep.subr.bf16.mxu0 %v619
    %760 = vmatpush1.bf16.msra.mxu0 %v618
    %761 = vmatprep.subr.bf16.mxu0 %v623
    %762 = vmatpush1.bf16.msra.mxu0 %v622
    %763 = vmatprep.subr.bf16.mxu0 %v627
    %764 = vmatpush1.bf16.msra.mxu0 %v626
    %765 = vmatprep.mubr.bf16.mxu0 %v285
    %766 = vmatmul.mubr.bf16.gmra.mrb[0].mxu0 %v284
    %v767 = vpop.f32.mrb[0].mxu0
    %v768 = vadd.f32 %v363, %v767
    %v769 = vpop.f32.mrb[0].mxu0
    %v770 = vadd.f32 %v367, %v769
    %v771 = vpop.f32.mrb[0].mxu0
    %v772 = vpop.f32.mrb[0].mxu0
    %773 = vdwg.mxu0
    %v774 = vpack.c.bf16 %v727, %v727
    %v775 = vpack.c.bf16 %v729, %v729
    %v776 = vpack.c.bf16 %v768, %v768
    %v777 = vpack.c.bf16 %v770, %v770
    %v778 = vld [vmem:[#allocation11] sm:$0xff]
    %v779 = vld [vmem:[#allocation11 + $0x8] sm:$0xff]
    %v780 = vld [vmem:[#allocation11 + $0x10] sm:$0xff]
    %v781 = vld [vmem:[#allocation11 + $0x18] sm:$0xff]
    %v782 = vld [vmem:[#allocation11 + $0x20] sm:$0xff]
    %v783 = vld [vmem:[#allocation11 + $0x28] sm:$0xff]
    %v784 = vld [vmem:[#allocation11 + $0x30] sm:$0xff]
    %v785 = vld [vmem:[#allocation11 + $0x38] sm:$0xff]
    %v786 = vld [vmem:[#allocation11 + $0x40] sm:$0xff]
    %v787 = vld [vmem:[#allocation11 + $0x48] sm:$0xff]
    %v788 = vld [vmem:[#allocation11 + $0x50] sm:$0xff]
    %v789 = vld [vmem:[#allocation11 + $0x58] sm:$0xff]
    %v790 = vld [vmem:[#allocation11 + $0x60] sm:$0xff]
    %v791 = vld [vmem:[#allocation11 + $0x68] sm:$0xff]
    %v792 = vld [vmem:[#allocation11 + $0x70] sm:$0xff]
    %v793 = vld [vmem:[#allocation11 + $0x78] sm:$0xff]
    %v794 = vld [vmem:[#allocation11 + $0x80] sm:$0xff]
    %v795 = vld [vmem:[#allocation11 + $0x88] sm:$0xff]
    %v796 = vld [vmem:[#allocation11 + $0x90] sm:$0xff]
    %v797 = vld [vmem:[#allocation11 + $0x98] sm:$0xff]
    %v798 = vld [vmem:[#allocation11 + $0xa0] sm:$0xff]
    %v799 = vld [vmem:[#allocation11 + $0xa8] sm:$0xff]
    %v800 = vld [vmem:[#allocation11 + $0xb0] sm:$0xff]
    %v801 = vld [vmem:[#allocation11 + $0xb8] sm:$0xff]
    %v802 = vld [vmem:[#allocation11 + $0xc0] sm:$0xff]
    %v803 = vld [vmem:[#allocation11 + $0xc8] sm:$0xff]
    %v804 = vld [vmem:[#allocation11 + $0xd0] sm:$0xff]
    %v805 = vld [vmem:[#allocation11 + $0xd8] sm:$0xff]
    %v806 = vld [vmem:[#allocation11 + $0xe0] sm:$0xff]
    %v807 = vld [vmem:[#allocation11 + $0xe8] sm:$0xff]
    %v808 = vld [vmem:[#allocation11 + $0xf0] sm:$0xff]
    %v809 = vld [vmem:[#allocation11 + $0xf8] sm:$0xff]
    %v810 = vld [vmem:[#allocation11 + $0x100] sm:$0xff]
    %v811 = vld [vmem:[#allocation11 + $0x108] sm:$0xff]
    %v812 = vld [vmem:[#allocation11 + $0x110] sm:$0xff]
    %v813 = vld [vmem:[#allocation11 + $0x118] sm:$0xff]
    %v814 = vld [vmem:[#allocation11 + $0x120] sm:$0xff]
    %v815 = vld [vmem:[#allocation11 + $0x128] sm:$0xff]
    %v816 = vld [vmem:[#allocation11 + $0x130] sm:$0xff]
    %v817 = vld [vmem:[#allocation11 + $0x138] sm:$0xff]
    %v818 = vld [vmem:[#allocation11 + $0x140] sm:$0xff]
    %v819 = vld [vmem:[#allocation11 + $0x148] sm:$0xff]
    %v820 = vld [vmem:[#allocation11 + $0x150] sm:$0xff]
    %v821 = vld [vmem:[#allocation11 + $0x158] sm:$0xff]
    %v822 = vld [vmem:[#allocation11 + $0x160] sm:$0xff]
    %v823 = vld [vmem:[#allocation11 + $0x168] sm:$0xff]
    %v824 = vld [vmem:[#allocation11 + $0x170] sm:$0xff]
    %v825 = vld [vmem:[#allocation11 + $0x178] sm:$0xff]
    %v826 = vld [vmem:[#allocation11 + $0x180] sm:$0xff]
    %v827 = vld [vmem:[#allocation11 + $0x188] sm:$0xff]
    %v828 = vld [vmem:[#allocation11 + $0x190] sm:$0xff]
    %v829 = vld [vmem:[#allocation11 + $0x198] sm:$0xff]
    %v830 = vld [vmem:[#allocation11 + $0x1a0] sm:$0xff]
    %v831 = vld [vmem:[#allocation11 + $0x1a8] sm:$0xff]
    %v832 = vld [vmem:[#allocation11 + $0x1b0] sm:$0xff]
    %v833 = vld [vmem:[#allocation11 + $0x1b8] sm:$0xff]
    %v834 = vld [vmem:[#allocation11 + $0x1c0] sm:$0xff]
    %v835 = vld [vmem:[#allocation11 + $0x1c8] sm:$0xff]
    %v836 = vld [vmem:[#allocation11 + $0x1d0] sm:$0xff]
    %v837 = vld [vmem:[#allocation11 + $0x1d8] sm:$0xff]
    %v838 = vld [vmem:[#allocation11 + $0x1e0] sm:$0xff]
    %v839 = vld [vmem:[#allocation11 + $0x1e8] sm:$0xff]
    %v840 = vld [vmem:[#allocation11 + $0x1f0] sm:$0xff]
    %v841 = vld [vmem:[#allocation11 + $0x1f8] sm:$0xff]
    %v842 = vld [vmem:[#allocation11 + $0x200] sm:$0xff]
    %v843 = vld [vmem:[#allocation11 + $0x208] sm:$0xff]
    %v844 = vld [vmem:[#allocation11 + $0x210] sm:$0xff]
    %v845 = vld [vmem:[#allocation11 + $0x218] sm:$0xff]
    %v846 = vld [vmem:[#allocation11 + $0x220] sm:$0xff]
    %v847 = vld [vmem:[#allocation11 + $0x228] sm:$0xff]
    %v848 = vld [vmem:[#allocation11 + $0x230] sm:$0xff]
    %v849 = vld [vmem:[#allocation11 + $0x238] sm:$0xff]
    %v850 = vld [vmem:[#allocation11 + $0x240] sm:$0xff]
    %v851 = vld [vmem:[#allocation11 + $0x248] sm:$0xff]
    %v852 = vld [vmem:[#allocation11 + $0x250] sm:$0xff]
    %v853 = vld [vmem:[#allocation11 + $0x258] sm:$0xff]
    %v854 = vld [vmem:[#allocation11 + $0x260] sm:$0xff]
    %v855 = vld [vmem:[#allocation11 + $0x268] sm:$0xff]
    %v856 = vld [vmem:[#allocation11 + $0x270] sm:$0xff]
    %v857 = vld [vmem:[#allocation11 + $0x278] sm:$0xff]
    %v858 = vld [vmem:[#allocation11 + $0x280] sm:$0xff]
    %v859 = vld [vmem:[#allocation11 + $0x288] sm:$0xff]
    %v860 = vld [vmem:[#allocation11 + $0x290] sm:$0xff]
    %v861 = vld [vmem:[#allocation11 + $0x298] sm:$0xff]
    %v862 = vld [vmem:[#allocation11 + $0x2a0] sm:$0xff]
    %v863 = vld [vmem:[#allocation11 + $0x2a8] sm:$0xff]
    %v864 = vld [vmem:[#allocation11 + $0x2b0] sm:$0xff]
    %v865 = vld [vmem:[#allocation11 + $0x2b8] sm:$0xff]
    %v866 = vld [vmem:[#allocation11 + $0x2c0] sm:$0xff]
    %v867 = vld [vmem:[#allocation11 + $0x2c8] sm:$0xff]
    %v868 = vld [vmem:[#allocation11 + $0x2d0] sm:$0xff]
    %v869 = vld [vmem:[#allocation11 + $0x2d8] sm:$0xff]
    %v870 = vld [vmem:[#allocation11 + $0x2e0] sm:$0xff]
    %v871 = vld [vmem:[#allocation11 + $0x2e8] sm:$0xff]
    %v872 = vld [vmem:[#allocation11 + $0x2f0] sm:$0xff]
    %v873 = vld [vmem:[#allocation11 + $0x2f8] sm:$0xff]
    %v874 = vld [vmem:[#allocation11 + $0x300] sm:$0xff]
    %v875 = vld [vmem:[#allocation11 + $0x308] sm:$0xff]
    %v876 = vld [vmem:[#allocation11 + $0x310] sm:$0xff]
    %v877 = vld [vmem:[#allocation11 + $0x318] sm:$0xff]
    %v878 = vld [vmem:[#allocation11 + $0x320] sm:$0xff]
    %v879 = vld [vmem:[#allocation11 + $0x328] sm:$0xff]
    %v880 = vld [vmem:[#allocation11 + $0x330] sm:$0xff]
    %v881 = vld [vmem:[#allocation11 + $0x338] sm:$0xff]
    %v882 = vld [vmem:[#allocation11 + $0x340] sm:$0xff]
    %v883 = vld [vmem:[#allocation11 + $0x348] sm:$0xff]
    %v884 = vld [vmem:[#allocation11 + $0x350] sm:$0xff]
    %v885 = vld [vmem:[#allocation11 + $0x358] sm:$0xff]
    %v886 = vld [vmem:[#allocation11 + $0x360] sm:$0xff]
    %v887 = vld [vmem:[#allocation11 + $0x368] sm:$0xff]
    %v888 = vld [vmem:[#allocation11 + $0x370] sm:$0xff]
    %v889 = vld [vmem:[#allocation11 + $0x378] sm:$0xff]
    %v890 = vld [vmem:[#allocation11 + $0x380] sm:$0xff]
    %v891 = vld [vmem:[#allocation11 + $0x388] sm:$0xff]
    %v892 = vld [vmem:[#allocation11 + $0x390] sm:$0xff]
    %v893 = vld [vmem:[#allocation11 + $0x398] sm:$0xff]
    %v894 = vld [vmem:[#allocation11 + $0x3a0] sm:$0xff]
    %v895 = vld [vmem:[#allocation11 + $0x3a8] sm:$0xff]
    %v896 = vld [vmem:[#allocation11 + $0x3b0] sm:$0xff]
    %v897 = vld [vmem:[#allocation11 + $0x3b8] sm:$0xff]
    %v898 = vld [vmem:[#allocation11 + $0x3c0] sm:$0xff]
    %v899 = vld [vmem:[#allocation11 + $0x3c8] sm:$0xff]
    %v900 = vld [vmem:[#allocation11 + $0x3d0] sm:$0xff]
    %v901 = vld [vmem:[#allocation11 + $0x3d8] sm:$0xff]
    %v902 = vld [vmem:[#allocation11 + $0x3e0] sm:$0xff]
    %v903 = vld [vmem:[#allocation11 + $0x3e8] sm:$0xff]
    %v904 = vld [vmem:[#allocation11 + $0x3f0] sm:$0xff]
    %v905 = vld [vmem:[#allocation11 + $0x3f8] sm:$0xff]
    %v906 = vld [vmem:[#allocation13] sm:$0xf]
    %v908 = vlaneseq
    %v909 = vshrl.u32 %v908, 7
    %v910 = vsub.s32 0, %v909
    %v911 = vrot.slane %v906, %v910
    %v912 = vlaneseq
    %v913 = vshrl.u32 %v912, 7
    %v914 = vsub.s32 1, %v913
    %v915 = vrot.slane %v906, %v914
    %v916 = vlaneseq
    %v917 = vshrl.u32 %v916, 7
    %v918 = vsub.s32 2, %v917
    %v919 = vrot.slane %v906, %v918
    %v920 = vlaneseq
    %v921 = vshrl.u32 %v920, 7
    %v922 = vsub.s32 3, %v921
    %v923 = vrot.slane %v906, %v922
    %v1056 = vunpack.c.l.b16 %v778
    %v1057 = vunpack.c.h.b16 %v778
    %v1058 = vunpack.c.l.b16 %v779
    %v1059 = vunpack.c.h.b16 %v779
    %v1060 = vunpack.c.l.b16 %v780
    %v1061 = vunpack.c.h.b16 %v780
    %v1062 = vunpack.c.l.b16 %v781
    %v1063 = vunpack.c.h.b16 %v781
    %v1064 = vunpack.c.l.b16 %v782
    %v1065 = vunpack.c.h.b16 %v782
    %v1066 = vunpack.c.l.b16 %v783
    %v1067 = vunpack.c.h.b16 %v783
    %v1068 = vunpack.c.l.b16 %v784
    %v1069 = vunpack.c.h.b16 %v784
    %v1070 = vunpack.c.l.b16 %v785
    %v1071 = vunpack.c.h.b16 %v785
    %v1072 = vunpack.c.l.b16 %v786
    %v1073 = vunpack.c.h.b16 %v786
    %v1074 = vunpack.c.l.b16 %v787
    %v1075 = vunpack.c.h.b16 %v787
    %v1076 = vunpack.c.l.b16 %v788
    %v1077 = vunpack.c.h.b16 %v788
    %v1078 = vunpack.c.l.b16 %v789
    %v1079 = vunpack.c.h.b16 %v789
    %v1080 = vunpack.c.l.b16 %v790
    %v1081 = vunpack.c.h.b16 %v790
    %v1082 = vunpack.c.l.b16 %v791
    %v1083 = vunpack.c.h.b16 %v791
    %v1084 = vunpack.c.l.b16 %v792
    %v1085 = vunpack.c.h.b16 %v792
    %v1086 = vunpack.c.l.b16 %v793
    %v1087 = vunpack.c.h.b16 %v793
    %v1088 = vunpack.c.l.b16 %v794
    %v1089 = vunpack.c.h.b16 %v794
    %v1090 = vunpack.c.l.b16 %v795
    %v1091 = vunpack.c.h.b16 %v795
    %v1092 = vunpack.c.l.b16 %v796
    %v1093 = vunpack.c.h.b16 %v796
    %v1094 = vunpack.c.l.b16 %v797
    %v1095 = vunpack.c.h.b16 %v797
    %v1096 = vunpack.c.l.b16 %v798
    %v1097 = vunpack.c.h.b16 %v798
    %v1098 = vunpack.c.l.b16 %v799
    %v1099 = vunpack.c.h.b16 %v799
    %v1100 = vunpack.c.l.b16 %v800
    %v1101 = vunpack.c.h.b16 %v800
    %v1102 = vunpack.c.l.b16 %v801
    %v1103 = vunpack.c.h.b16 %v801
    %v1104 = vunpack.c.l.b16 %v802
    %v1105 = vunpack.c.h.b16 %v802
    %v1106 = vunpack.c.l.b16 %v803
    %v1107 = vunpack.c.h.b16 %v803
    %v1108 = vunpack.c.l.b16 %v804
    %v1109 = vunpack.c.h.b16 %v804
    %v1110 = vunpack.c.l.b16 %v805
    %v1111 = vunpack.c.h.b16 %v805
    %v1112 = vunpack.c.l.b16 %v806
    %v1113 = vunpack.c.h.b16 %v806
    %v1114 = vunpack.c.l.b16 %v807
    %v1115 = vunpack.c.h.b16 %v807
    %v1116 = vunpack.c.l.b16 %v808
    %v1117 = vunpack.c.h.b16 %v808
    %v1118 = vunpack.c.l.b16 %v809
    %v1119 = vunpack.c.h.b16 %v809
    %v1120 = vunpack.c.l.b16 %v810
    %v1121 = vunpack.c.h.b16 %v810
    %v1122 = vunpack.c.l.b16 %v811
    %v1123 = vunpack.c.h.b16 %v811
    %v1124 = vunpack.c.l.b16 %v812
    %v1125 = vunpack.c.h.b16 %v812
    %v1126 = vunpack.c.l.b16 %v813
    %v1127 = vunpack.c.h.b16 %v813
    %v1128 = vunpack.c.l.b16 %v814
    %v1129 = vunpack.c.h.b16 %v814
    %v1130 = vunpack.c.l.b16 %v815
    %v1131 = vunpack.c.h.b16 %v815
    %v1132 = vunpack.c.l.b16 %v816
    %v1133 = vunpack.c.h.b16 %v816
    %v1134 = vunpack.c.l.b16 %v817
    %v1135 = vunpack.c.h.b16 %v817
    %v1136 = vunpack.c.l.b16 %v818
    %v1137 = vunpack.c.h.b16 %v818
    %v1138 = vunpack.c.l.b16 %v819
    %v1139 = vunpack.c.h.b16 %v819
    %v1140 = vunpack.c.l.b16 %v820
    %v1141 = vunpack.c.h.b16 %v820
    %v1142 = vunpack.c.l.b16 %v821
    %v1143 = vunpack.c.h.b16 %v821
    %v1144 = vunpack.c.l.b16 %v822
    %v1145 = vunpack.c.h.b16 %v822
    %v1146 = vunpack.c.l.b16 %v823
    %v1147 = vunpack.c.h.b16 %v823
    %v1148 = vunpack.c.l.b16 %v824
    %v1149 = vunpack.c.h.b16 %v824
    %v1150 = vunpack.c.l.b16 %v825
    %v1151 = vunpack.c.h.b16 %v825
    %v1152 = vunpack.c.l.b16 %v826
    %v1153 = vunpack.c.h.b16 %v826
    %v1154 = vunpack.c.l.b16 %v827
    %v1155 = vunpack.c.h.b16 %v827
    %v1156 = vunpack.c.l.b16 %v828
    %v1157 = vunpack.c.h.b16 %v828
    %v1158 = vunpack.c.l.b16 %v829
    %v1159 = vunpack.c.h.b16 %v829
    %v1160 = vunpack.c.l.b16 %v830
    %v1161 = vunpack.c.h.b16 %v830
    %v1162 = vunpack.c.l.b16 %v831
    %v1163 = vunpack.c.h.b16 %v831
    %v1164 = vunpack.c.l.b16 %v832
    %v1165 = vunpack.c.h.b16 %v832
    %v1166 = vunpack.c.l.b16 %v833
    %v1167 = vunpack.c.h.b16 %v833
    %v1168 = vunpack.c.l.b16 %v834
    %v1169 = vunpack.c.h.b16 %v834
    %v1170 = vunpack.c.l.b16 %v835
    %v1171 = vunpack.c.h.b16 %v835
    %v1172 = vunpack.c.l.b16 %v836
    %v1173 = vunpack.c.h.b16 %v836
    %v1174 = vunpack.c.l.b16 %v837
    %v1175 = vunpack.c.h.b16 %v837
    %v1176 = vunpack.c.l.b16 %v838
    %v1177 = vunpack.c.h.b16 %v838
    %v1178 = vunpack.c.l.b16 %v839
    %v1179 = vunpack.c.h.b16 %v839
    %v1180 = vunpack.c.l.b16 %v840
    %v1181 = vunpack.c.h.b16 %v840
    %v1182 = vunpack.c.l.b16 %v841
    %v1183 = vunpack.c.h.b16 %v841
    %v1184 = vunpack.c.l.b16 %v842
    %v1185 = vunpack.c.h.b16 %v842
    %v1186 = vunpack.c.l.b16 %v843
    %v1187 = vunpack.c.h.b16 %v843
    %v1188 = vunpack.c.l.b16 %v844
    %v1189 = vunpack.c.h.b16 %v844
    %v1190 = vunpack.c.l.b16 %v845
    %v1191 = vunpack.c.h.b16 %v845
    %v1192 = vunpack.c.l.b16 %v846
    %v1193 = vunpack.c.h.b16 %v846
    %v1194 = vunpack.c.l.b16 %v847
    %v1195 = vunpack.c.h.b16 %v847
    %v1196 = vunpack.c.l.b16 %v848
    %v1197 = vunpack.c.h.b16 %v848
    %v1198 = vunpack.c.l.b16 %v849
    %v1199 = vunpack.c.h.b16 %v849
    %v1200 = vunpack.c.l.b16 %v850
    %v1201 = vunpack.c.h.b16 %v850
    %v1202 = vunpack.c.l.b16 %v851
    %v1203 = vunpack.c.h.b16 %v851
    %v1204 = vunpack.c.l.b16 %v852
    %v1205 = vunpack.c.h.b16 %v852
    %v1206 = vunpack.c.l.b16 %v853
    %v1207 = vunpack.c.h.b16 %v853
    %v1208 = vunpack.c.l.b16 %v854
    %v1209 = vunpack.c.h.b16 %v854
    %v1210 = vunpack.c.l.b16 %v855
    %v1211 = vunpack.c.h.b16 %v855
    %v1212 = vunpack.c.l.b16 %v856
    %v1213 = vunpack.c.h.b16 %v856
    %v1214 = vunpack.c.l.b16 %v857
    %v1215 = vunpack.c.h.b16 %v857
    %v1216 = vunpack.c.l.b16 %v858
    %v1217 = vunpack.c.h.b16 %v858
    %v1218 = vunpack.c.l.b16 %v859
    %v1219 = vunpack.c.h.b16 %v859
    %v1220 = vunpack.c.l.b16 %v860
    %v1221 = vunpack.c.h.b16 %v860
    %v1222 = vunpack.c.l.b16 %v861
    %v1223 = vunpack.c.h.b16 %v861
    %v1224 = vunpack.c.l.b16 %v862
    %v1225 = vunpack.c.h.b16 %v862
    %v1226 = vunpack.c.l.b16 %v863
    %v1227 = vunpack.c.h.b16 %v863
    %v1228 = vunpack.c.l.b16 %v864
    %v1229 = vunpack.c.h.b16 %v864
    %v1230 = vunpack.c.l.b16 %v865
    %v1231 = vunpack.c.h.b16 %v865
    %v1232 = vunpack.c.l.b16 %v866
    %v1233 = vunpack.c.h.b16 %v866
    %v1234 = vunpack.c.l.b16 %v867
    %v1235 = vunpack.c.h.b16 %v867
    %v1236 = vunpack.c.l.b16 %v868
    %v1237 = vunpack.c.h.b16 %v868
    %v1238 = vunpack.c.l.b16 %v869
    %v1239 = vunpack.c.h.b16 %v869
    %v1240 = vunpack.c.l.b16 %v870
    %v1241 = vunpack.c.h.b16 %v870
    %v1242 = vunpack.c.l.b16 %v871
    %v1243 = vunpack.c.h.b16 %v871
    %v1244 = vunpack.c.l.b16 %v872
    %v1245 = vunpack.c.h.b16 %v872
    %v1246 = vunpack.c.l.b16 %v873
    %v1247 = vunpack.c.h.b16 %v873
    %v1248 = vunpack.c.l.b16 %v874
    %v1249 = vunpack.c.h.b16 %v874
    %v1250 = vunpack.c.l.b16 %v875
    %v1251 = vunpack.c.h.b16 %v875
    %v1252 = vunpack.c.l.b16 %v876
    %v1253 = vunpack.c.h.b16 %v876
    %v1254 = vunpack.c.l.b16 %v877
    %v1255 = vunpack.c.h.b16 %v877
    %v1256 = vunpack.c.l.b16 %v878
    %v1257 = vunpack.c.h.b16 %v878
    %v1258 = vunpack.c.l.b16 %v879
    %v1259 = vunpack.c.h.b16 %v879
    %v1260 = vunpack.c.l.b16 %v880
    %v1261 = vunpack.c.h.b16 %v880
    %v1262 = vunpack.c.l.b16 %v881
    %v1263 = vunpack.c.h.b16 %v881
    %v1264 = vunpack.c.l.b16 %v882
    %v1265 = vunpack.c.h.b16 %v882
    %v1266 = vunpack.c.l.b16 %v883
    %v1267 = vunpack.c.h.b16 %v883
    %v1268 = vunpack.c.l.b16 %v884
    %v1269 = vunpack.c.h.b16 %v884
    %v1270 = vunpack.c.l.b16 %v885
    %v1271 = vunpack.c.h.b16 %v885
    %v1272 = vunpack.c.l.b16 %v886
    %v1273 = vunpack.c.h.b16 %v886
    %v1274 = vunpack.c.l.b16 %v887
    %v1275 = vunpack.c.h.b16 %v887
    %v1276 = vunpack.c.l.b16 %v888
    %v1277 = vunpack.c.h.b16 %v888
    %v1278 = vunpack.c.l.b16 %v889
    %v1279 = vunpack.c.h.b16 %v889
    %v1280 = vunpack.c.l.b16 %v890
    %v1281 = vunpack.c.h.b16 %v890
    %v1282 = vunpack.c.l.b16 %v891
    %v1283 = vunpack.c.h.b16 %v891
    %v1284 = vunpack.c.l.b16 %v892
    %v1285 = vunpack.c.h.b16 %v892
    %v1286 = vunpack.c.l.b16 %v893
    %v1287 = vunpack.c.h.b16 %v893
    %v1288 = vunpack.c.l.b16 %v894
    %v1289 = vunpack.c.h.b16 %v894
    %v1290 = vunpack.c.l.b16 %v895
    %v1291 = vunpack.c.h.b16 %v895
    %v1292 = vunpack.c.l.b16 %v896
    %v1293 = vunpack.c.h.b16 %v896
    %v1294 = vunpack.c.l.b16 %v897
    %v1295 = vunpack.c.h.b16 %v897
    %v1296 = vunpack.c.l.b16 %v898
    %v1297 = vunpack.c.h.b16 %v898
    %v1298 = vunpack.c.l.b16 %v899
    %v1299 = vunpack.c.h.b16 %v899
    %v1300 = vunpack.c.l.b16 %v900
    %v1301 = vunpack.c.h.b16 %v900
    %v1302 = vunpack.c.l.b16 %v901
    %v1303 = vunpack.c.h.b16 %v901
    %v1304 = vunpack.c.l.b16 %v902
    %v1305 = vunpack.c.h.b16 %v902
    %v1306 = vunpack.c.l.b16 %v903
    %v1307 = vunpack.c.h.b16 %v903
    %v1308 = vunpack.c.l.b16 %v904
    %v1309 = vunpack.c.h.b16 %v904
    %v1310 = vunpack.c.l.b16 %v905
    %v1311 = vunpack.c.h.b16 %v905
    %v1312 = vpack.c.b16 %v1060, %v1056
    %v1313 = vpack.c.b16 %v1061, %v1057
    %v1314 = vpack.c.b16 %v1062, %v1058
    %v1315 = vpack.c.b16 %v1063, %v1059
    %v1316 = vpack.c.b16 %v1068, %v1064
    %v1317 = vpack.c.b16 %v1069, %v1065
    %v1318 = vpack.c.b16 %v1070, %v1066
    %v1319 = vpack.c.b16 %v1071, %v1067
    %v1320 = vpack.c.b16 %v1076, %v1072
    %v1321 = vpack.c.b16 %v1077, %v1073
    %v1322 = vpack.c.b16 %v1078, %v1074
    %v1323 = vpack.c.b16 %v1079, %v1075
    %v1324 = vpack.c.b16 %v1084, %v1080
    %v1325 = vpack.c.b16 %v1085, %v1081
    %v1326 = vpack.c.b16 %v1086, %v1082
    %v1327 = vpack.c.b16 %v1087, %v1083
    %v1328 = vpack.c.b16 %v1092, %v1088
    %v1329 = vpack.c.b16 %v1093, %v1089
    %v1330 = vpack.c.b16 %v1094, %v1090
    %v1331 = vpack.c.b16 %v1095, %v1091
    %v1332 = vpack.c.b16 %v1100, %v1096
    %v1333 = vpack.c.b16 %v1101, %v1097
    %v1334 = vpack.c.b16 %v1102, %v1098
    %v1335 = vpack.c.b16 %v1103, %v1099
    %v1336 = vpack.c.b16 %v1108, %v1104
    %v1337 = vpack.c.b16 %v1109, %v1105
    %v1338 = vpack.c.b16 %v1110, %v1106
    %v1339 = vpack.c.b16 %v1111, %v1107
    %v1340 = vpack.c.b16 %v1116, %v1112
    %v1341 = vpack.c.b16 %v1117, %v1113
    %v1342 = vpack.c.b16 %v1118, %v1114
    %v1343 = vpack.c.b16 %v1119, %v1115
    %v1344 = vpack.c.b16 %v1124, %v1120
    %v1345 = vpack.c.b16 %v1125, %v1121
    %v1346 = vpack.c.b16 %v1126, %v1122
    %v1347 = vpack.c.b16 %v1127, %v1123
    %v1348 = vpack.c.b16 %v1132, %v1128
    %v1349 = vpack.c.b16 %v1133, %v1129
    %v1350 = vpack.c.b16 %v1134, %v1130
    %v1351 = vpack.c.b16 %v1135, %v1131
    %v1352 = vpack.c.b16 %v1140, %v1136
    %v1353 = vpack.c.b16 %v1141, %v1137
    %v1354 = vpack.c.b16 %v1142, %v1138
    %v1355 = vpack.c.b16 %v1143, %v1139
    %v1356 = vpack.c.b16 %v1148, %v1144
    %v1357 = vpack.c.b16 %v1149, %v1145
    %v1358 = vpack.c.b16 %v1150, %v1146
    %v1359 = vpack.c.b16 %v1151, %v1147
    %v1360 = vpack.c.b16 %v1156, %v1152
    %v1361 = vpack.c.b16 %v1157, %v1153
    %v1362 = vpack.c.b16 %v1158, %v1154
    %v1363 = vpack.c.b16 %v1159, %v1155
    %v1364 = vpack.c.b16 %v1164, %v1160
    %v1365 = vpack.c.b16 %v1165, %v1161
    %v1366 = vpack.c.b16 %v1166, %v1162
    %v1367 = vpack.c.b16 %v1167, %v1163
    %v1368 = vpack.c.b16 %v1172, %v1168
    %v1369 = vpack.c.b16 %v1173, %v1169
    %v1370 = vpack.c.b16 %v1174, %v1170
    %v1371 = vpack.c.b16 %v1175, %v1171
    %v1372 = vpack.c.b16 %v1180, %v1176
    %v1373 = vpack.c.b16 %v1181, %v1177
    %v1374 = vpack.c.b16 %v1182, %v1178
    %v1375 = vpack.c.b16 %v1183, %v1179
    %v1376 = vpack.c.b16 %v1188, %v1184
    %v1377 = vpack.c.b16 %v1189, %v1185
    %v1378 = vpack.c.b16 %v1190, %v1186
    %v1379 = vpack.c.b16 %v1191, %v1187
    %v1380 = vpack.c.b16 %v1196, %v1192
    %v1381 = vpack.c.b16 %v1197, %v1193
    %v1382 = vpack.c.b16 %v1198, %v1194
    %v1383 = vpack.c.b16 %v1199, %v1195
    %v1384 = vpack.c.b16 %v1204, %v1200
    %v1385 = vpack.c.b16 %v1205, %v1201
    %v1386 = vpack.c.b16 %v1206, %v1202
    %v1387 = vpack.c.b16 %v1207, %v1203
    %v1388 = vpack.c.b16 %v1212, %v1208
    %v1389 = vpack.c.b16 %v1213, %v1209
    %v1390 = vpack.c.b16 %v1214, %v1210
    %v1391 = vpack.c.b16 %v1215, %v1211
    %v1392 = vpack.c.b16 %v1220, %v1216
    %v1393 = vpack.c.b16 %v1221, %v1217
    %v1394 = vpack.c.b16 %v1222, %v1218
    %v1395 = vpack.c.b16 %v1223, %v1219
    %v1396 = vpack.c.b16 %v1228, %v1224
    %v1397 = vpack.c.b16 %v1229, %v1225
    %v1398 = vpack.c.b16 %v1230, %v1226
    %v1399 = vpack.c.b16 %v1231, %v1227
    %v1400 = vpack.c.b16 %v1236, %v1232
    %v1401 = vpack.c.b16 %v1237, %v1233
    %v1402 = vpack.c.b16 %v1238, %v1234
    %v1403 = vpack.c.b16 %v1239, %v1235
    %v1404 = vpack.c.b16 %v1244, %v1240
    %v1405 = vpack.c.b16 %v1245, %v1241
    %v1406 = vpack.c.b16 %v1246, %v1242
    %v1407 = vpack.c.b16 %v1247, %v1243
    %v1408 = vpack.c.b16 %v1252, %v1248
    %v1409 = vpack.c.b16 %v1253, %v1249
    %v1410 = vpack.c.b16 %v1254, %v1250
    %v1411 = vpack.c.b16 %v1255, %v1251
    %v1412 = vpack.c.b16 %v1260, %v1256
    %v1413 = vpack.c.b16 %v1261, %v1257
    %v1414 = vpack.c.b16 %v1262, %v1258
    %v1415 = vpack.c.b16 %v1263, %v1259
    %v1416 = vpack.c.b16 %v1268, %v1264
    %v1417 = vpack.c.b16 %v1269, %v1265
    %v1418 = vpack.c.b16 %v1270, %v1266
    %v1419 = vpack.c.b16 %v1271, %v1267
    %v1420 = vpack.c.b16 %v1276, %v1272
    %v1421 = vpack.c.b16 %v1277, %v1273
    %v1422 = vpack.c.b16 %v1278, %v1274
    %v1423 = vpack.c.b16 %v1279, %v1275
    %v1424 = vpack.c.b16 %v1284, %v1280
    %v1425 = vpack.c.b16 %v1285, %v1281
    %v1426 = vpack.c.b16 %v1286, %v1282
    %v1427 = vpack.c.b16 %v1287, %v1283
    %v1428 = vpack.c.b16 %v1292, %v1288
    %v1429 = vpack.c.b16 %v1293, %v1289
    %v1430 = vpack.c.b16 %v1294, %v1290
    %v1431 = vpack.c.b16 %v1295, %v1291
    %v1432 = vpack.c.b16 %v1300, %v1296
    %v1433 = vpack.c.b16 %v1301, %v1297
    %v1434 = vpack.c.b16 %v1302, %v1298
    %v1435 = vpack.c.b16 %v1303, %v1299
    %v1436 = vpack.c.b16 %v1308, %v1304
    %v1437 = vpack.c.b16 %v1309, %v1305
    %v1438 = vpack.c.b16 %v1310, %v1306
    %v1439 = vpack.c.b16 %v1311, %v1307
    %1568 = vmatprep.subr.bf16.mxu0 %v1313
    %1569 = vmatpush1.bf16.msra.mxu0 %v1312
    %1570 = vmatprep.subr.bf16.mxu0 %v1317
    %1571 = vmatpush1.bf16.msra.mxu0 %v1316
    %1572 = vmatprep.subr.bf16.mxu0 %v1321
    %1573 = vmatpush1.bf16.msra.mxu0 %v1320
    %1574 = vmatprep.subr.bf16.mxu0 %v1325
    %1575 = vmatpush1.bf16.msra.mxu0 %v1324
    %1576 = vmatprep.subr.bf16.mxu0 %v1329
    %1577 = vmatpush1.bf16.msra.mxu0 %v1328
    %1578 = vmatprep.subr.bf16.mxu0 %v1333
    %1579 = vmatpush1.bf16.msra.mxu0 %v1332
    %1580 = vmatprep.subr.bf16.mxu0 %v1337
    %1581 = vmatpush1.bf16.msra.mxu0 %v1336
    %1582 = vmatprep.subr.bf16.mxu0 %v1341
    %1583 = vmatpush1.bf16.msra.mxu0 %v1340
    %1584 = vmatprep.subr.bf16.mxu0 %v1345
    %1585 = vmatpush1.bf16.msra.mxu0 %v1344
    %1586 = vmatprep.subr.bf16.mxu0 %v1349
    %1587 = vmatpush1.bf16.msra.mxu0 %v1348
    %1588 = vmatprep.subr.bf16.mxu0 %v1353
    %1589 = vmatpush1.bf16.msra.mxu0 %v1352
    %1590 = vmatprep.subr.bf16.mxu0 %v1357
    %1591 = vmatpush1.bf16.msra.mxu0 %v1356
    %1592 = vmatprep.subr.bf16.mxu0 %v1361
    %1593 = vmatpush1.bf16.msra.mxu0 %v1360
    %1594 = vmatprep.subr.bf16.mxu0 %v1365
    %1595 = vmatpush1.bf16.msra.mxu0 %v1364
    %1596 = vmatprep.subr.bf16.mxu0 %v1369
    %1597 = vmatpush1.bf16.msra.mxu0 %v1368
    %1598 = vmatprep.subr.bf16.mxu0 %v1373
    %1599 = vmatpush1.bf16.msra.mxu0 %v1372
    %1600 = vmatprep.mubr.bf16.mxu0 %v775
    %1601 = vmatmul.mubr.bf16.gmra.mrb[0].mxu0 %v774
    %v1602 = vpop.f32.mrb[0].mxu0
    %v1603 = vadd.f32 %v911, %v1602
    %v1604 = vpop.f32.mrb[0].mxu0
    %v1605 = vadd.f32 %v915, %v1604
    %v1606 = vpop.f32.mrb[0].mxu0
    %v1607 = vpop.f32.mrb[0].mxu0
    %1608 = vdwg.mxu0
    %1609 = vmatprep.subr.bf16.mxu0 %v1377
    %1610 = vmatpush1.bf16.msra.mxu0 %v1376
    %1611 = vmatprep.subr.bf16.mxu0 %v1381
    %1612 = vmatpush1.bf16.msra.mxu0 %v1380
    %1613 = vmatprep.subr.bf16.mxu0 %v1385
    %1614 = vmatpush1.bf16.msra.mxu0 %v1384
    %1615 = vmatprep.subr.bf16.mxu0 %v1389
    %1616 = vmatpush1.bf16.msra.mxu0 %v1388
    %1617 = vmatprep.subr.bf16.mxu0 %v1393
    %1618 = vmatpush1.bf16.msra.mxu0 %v1392
    %1619 = vmatprep.subr.bf16.mxu0 %v1397
    %1620 = vmatpush1.bf16.msra.mxu0 %v1396
    %1621 = vmatprep.subr.bf16.mxu0 %v1401
    %1622 = vmatpush1.bf16.msra.mxu0 %v1400
    %1623 = vmatprep.subr.bf16.mxu0 %v1405
    %1624 = vmatpush1.bf16.msra.mxu0 %v1404
    %1625 = vmatprep.subr.bf16.mxu0 %v1409
    %1626 = vmatpush1.bf16.msra.mxu0 %v1408
    %1627 = vmatprep.subr.bf16.mxu0 %v1413
    %1628 = vmatpush1.bf16.msra.mxu0 %v1412
    %1629 = vmatprep.subr.bf16.mxu0 %v1417
    %1630 = vmatpush1.bf16.msra.mxu0 %v1416
    %1631 = vmatprep.subr.bf16.mxu0 %v1421
    %1632 = vmatpush1.bf16.msra.mxu0 %v1420
    %1633 = vmatprep.subr.bf16.mxu0 %v1425
    %1634 = vmatpush1.bf16.msra.mxu0 %v1424
    %1635 = vmatprep.subr.bf16.mxu0 %v1429
    %1636 = vmatpush1.bf16.msra.mxu0 %v1428
    %1637 = vmatprep.subr.bf16.mxu0 %v1433
    %1638 = vmatpush1.bf16.msra.mxu0 %v1432
    %1639 = vmatprep.subr.bf16.mxu0 %v1437
    %1640 = vmatpush1.bf16.msra.mxu0 %v1436
    %1641 = vmatprep.mubr.bf16.mxu0 %v777
    %1642 = vmatmul.mubr.bf16.gmra.mrb[0].mxu0 %v776
    %v1643 = vpop.f32.mrb[0].mxu0
    %v1644 = vadd.f32 %v1603, %v1643
    %v1645 = vpop.f32.mrb[0].mxu0
    %v1646 = vadd.f32 %v1605, %v1645
    %v1647 = vpop.f32.mrb[0].mxu0
    %v1648 = vpop.f32.mrb[0].mxu0
    %1649 = vdwg.mxu0
    %1650 = vmatprep.subr.bf16.mxu0 %v1315
    %1651 = vmatpush1.bf16.msra.mxu0 %v1314
    %1652 = vmatprep.subr.bf16.mxu0 %v1319
    %1653 = vmatpush1.bf16.msra.mxu0 %v1318
    %1654 = vmatprep.subr.bf16.mxu0 %v1323
    %1655 = vmatpush1.bf16.msra.mxu0 %v1322
    %1656 = vmatprep.subr.bf16.mxu0 %v1327
    %1657 = vmatpush1.bf16.msra.mxu0 %v1326
    %1658 = vmatprep.subr.bf16.mxu0 %v1331
    %1659 = vmatpush1.bf16.msra.mxu0 %v1330
    %1660 = vmatprep.subr.bf16.mxu0 %v1335
    %1661 = vmatpush1.bf16.msra.mxu0 %v1334
    %1662 = vmatprep.subr.bf16.mxu0 %v1339
    %1663 = vmatpush1.bf16.msra.mxu0 %v1338
    %1664 = vmatprep.subr.bf16.mxu0 %v1343
    %1665 = vmatpush1.bf16.msra.mxu0 %v1342
    %1666 = vmatprep.subr.bf16.mxu0 %v1347
    %1667 = vmatpush1.bf16.msra.mxu0 %v1346
    %1668 = vmatprep.subr.bf16.mxu0 %v1351
    %1669 = vmatpush1.bf16.msra.mxu0 %v1350
    %1670 = vmatprep.subr.bf16.mxu0 %v1355
    %1671 = vmatpush1.bf16.msra.mxu0 %v1354
    %1672 = vmatprep.subr.bf16.mxu0 %v1359
    %1673 = vmatpush1.bf16.msra.mxu0 %v1358
    %1674 = vmatprep.subr.bf16.mxu0 %v1363
    %1675 = vmatpush1.bf16.msra.mxu0 %v1362
    %1676 = vmatprep.subr.bf16.mxu0 %v1367
    %1677 = vmatpush1.bf16.msra.mxu0 %v1366
    %1678 = vmatprep.subr.bf16.mxu0 %v1371
    %1679 = vmatpush1.bf16.msra.mxu0 %v1370
    %1680 = vmatprep.subr.bf16.mxu0 %v1375
    %1681 = vmatpush1.bf16.msra.mxu0 %v1374
    %1682 = vmatprep.mubr.bf16.mxu0 %v775
    %1683 = vmatmul.mubr.bf16.gmra.mrb[0].mxu0 %v774
    %v1684 = vpop.f32.mrb[0].mxu0
    %v1685 = vadd.f32 %v919, %v1684
    %v1686 = vpop.f32.mrb[0].mxu0
    %v1687 = vadd.f32 %v923, %v1686
    %v1688 = vpop.f32.mrb[0].mxu0
    %v1689 = vpop.f32.mrb[0].mxu0
    %1690 = vdwg.mxu0
    %1691 = vmatprep.subr.bf16.mxu0 %v1379
    %1692 = vmatpush1.bf16.msra.mxu0 %v1378
    %1693 = vmatprep.subr.bf16.mxu0 %v1383
    %1694 = vmatpush1.bf16.msra.mxu0 %v1382
    %1695 = vmatprep.subr.bf16.mxu0 %v1387
    %1696 = vmatpush1.bf16.msra.mxu0 %v1386
    %1697 = vmatprep.subr.bf16.mxu0 %v1391
    %1698 = vmatpush1.bf16.msra.mxu0 %v1390
    %1699 = vmatprep.subr.bf16.mxu0 %v1395
    %1700 = vmatpush1.bf16.msra.mxu0 %v1394
    %1701 = vmatprep.subr.bf16.mxu0 %v1399
    %1702 = vmatpush1.bf16.msra.mxu0 %v1398
    %1703 = vmatprep.subr.bf16.mxu0 %v1403
    %1704 = vmatpush1.bf16.msra.mxu0 %v1402
    %1705 = vmatprep.subr.bf16.mxu0 %v1407
    %1706 = vmatpush1.bf16.msra.mxu0 %v1406
    %1707 = vmatprep.subr.bf16.mxu0 %v1411
    %1708 = vmatpush1.bf16.msra.mxu0 %v1410
    %1709 = vmatprep.subr.bf16.mxu0 %v1415
    %1710 = vmatpush1.bf16.msra.mxu0 %v1414
    %1711 = vmatprep.subr.bf16.mxu0 %v1419
    %1712 = vmatpush1.bf16.msra.mxu0 %v1418
    %1713 = vmatprep.subr.bf16.mxu0 %v1423
    %1714 = vmatpush1.bf16.msra.mxu0 %v1422
    %1715 = vmatprep.subr.bf16.mxu0 %v1427
    %1716 = vmatpush1.bf16.msra.mxu0 %v1426
    %1717 = vmatprep.subr.bf16.mxu0 %v1431
    %1718 = vmatpush1.bf16.msra.mxu0 %v1430
    %1719 = vmatprep.subr.bf16.mxu0 %v1435
    %1720 = vmatpush1.bf16.msra.mxu0 %v1434
    %1721 = vmatprep.subr.bf16.mxu0 %v1439
    %1722 = vmatpush1.bf16.msra.mxu0 %v1438
    %1723 = vmatprep.mubr.bf16.mxu0 %v777
    %1724 = vmatmul.mubr.bf16.gmra.mrb[0].mxu0 %v776
    %v1725 = vpop.f32.mrb[0].mxu0
    %v1726 = vadd.f32 %v1685, %v1725
    %v1727 = vpop.f32.mrb[0].mxu0
    %v1728 = vadd.f32 %v1687, %v1727
    %v1729 = vpop.f32.mrb[0].mxu0
    %v1730 = vpop.f32.mrb[0].mxu0
    %1731 = vdwg.mxu0
    %v1732 = vpack.c.bf16 %v1644, %v1644
    %v1733 = vpack.c.bf16 %v1646, %v1646
    %v1734 = vpack.c.bf16 %v1726, %v1726
    %v1735 = vpack.c.bf16 %v1728, %v1728
    %v1736 = vld [vmem:[#allocation14] sm:$0xff]
    %v1737 = vld [vmem:[#allocation14 + $0x8] sm:$0xff]
    %v1738 = vld [vmem:[#allocation14 + $0x10] sm:$0xff]
    %v1739 = vld [vmem:[#allocation14 + $0x18] sm:$0xff]
    %v1740 = vld [vmem:[#allocation14 + $0x20] sm:$0xff]
    %v1741 = vld [vmem:[#allocation14 + $0x28] sm:$0xff]
    %v1742 = vld [vmem:[#allocation14 + $0x30] sm:$0xff]
    %v1743 = vld [vmem:[#allocation14 + $0x38] sm:$0xff]
    %v1744 = vld [vmem:[#allocation14 + $0x40] sm:$0xff]
    %v1745 = vld [vmem:[#allocation14 + $0x48] sm:$0xff]
    %v1746 = vld [vmem:[#allocation14 + $0x50] sm:$0xff]
    %v1747 = vld [vmem:[#allocation14 + $0x58] sm:$0xff]
    %v1748 = vld [vmem:[#allocation14 + $0x60] sm:$0xff]
    %v1749 = vld [vmem:[#allocation14 + $0x68] sm:$0xff]
    %v1750 = vld [vmem:[#allocation14 + $0x70] sm:$0xff]
    %v1751 = vld [vmem:[#allocation14 + $0x78] sm:$0xff]
    %v1752 = vld [vmem:[#allocation14 + $0x80] sm:$0xff]
    %v1753 = vld [vmem:[#allocation14 + $0x88] sm:$0xff]
    %v1754 = vld [vmem:[#allocation14 + $0x90] sm:$0xff]
    %v1755 = vld [vmem:[#allocation14 + $0x98] sm:$0xff]
    %v1756 = vld [vmem:[#allocation14 + $0xa0] sm:$0xff]
    %v1757 = vld [vmem:[#allocation14 + $0xa8] sm:$0xff]
    %v1758 = vld [vmem:[#allocation14 + $0xb0] sm:$0xff]
    %v1759 = vld [vmem:[#allocation14 + $0xb8] sm:$0xff]
    %v1760 = vld [vmem:[#allocation14 + $0xc0] sm:$0xff]
    %v1761 = vld [vmem:[#allocation14 + $0xc8] sm:$0xff]
    %v1762 = vld [vmem:[#allocation14 + $0xd0] sm:$0xff]
    %v1763 = vld [vmem:[#allocation14 + $0xd8] sm:$0xff]
    %v1764 = vld [vmem:[#allocation14 + $0xe0] sm:$0xff]
    %v1765 = vld [vmem:[#allocation14 + $0xe8] sm:$0xff]
    %v1766 = vld [vmem:[#allocation14 + $0xf0] sm:$0xff]
    %v1767 = vld [vmem:[#allocation14 + $0xf8] sm:$0xff]
    %v1768 = vld [vmem:[#allocation14 + $0x100] sm:$0xff]
    %v1769 = vld [vmem:[#allocation14 + $0x108] sm:$0xff]
    %v1770 = vld [vmem:[#allocation14 + $0x110] sm:$0xff]
    %v1771 = vld [vmem:[#allocation14 + $0x118] sm:$0xff]
    %v1772 = vld [vmem:[#allocation14 + $0x120] sm:$0xff]
    %v1773 = vld [vmem:[#allocation14 + $0x128] sm:$0xff]
    %v1774 = vld [vmem:[#allocation14 + $0x130] sm:$0xff]
    %v1775 = vld [vmem:[#allocation14 + $0x138] sm:$0xff]
    %v1776 = vld [vmem:[#allocation14 + $0x140] sm:$0xff]
    %v1777 = vld [vmem:[#allocation14 + $0x148] sm:$0xff]
    %v1778 = vld [vmem:[#allocation14 + $0x150] sm:$0xff]
    %v1779 = vld [vmem:[#allocation14 + $0x158] sm:$0xff]
    %v1780 = vld [vmem:[#allocation14 + $0x160] sm:$0xff]
    %v1781 = vld [vmem:[#allocation14 + $0x168] sm:$0xff]
    %v1782 = vld [vmem:[#allocation14 + $0x170] sm:$0xff]
    %v1783 = vld [vmem:[#allocation14 + $0x178] sm:$0xff]
    %v1784 = vld [vmem:[#allocation14 + $0x180] sm:$0xff]
    %v1785 = vld [vmem:[#allocation14 + $0x188] sm:$0xff]
    %v1786 = vld [vmem:[#allocation14 + $0x190] sm:$0xff]
    %v1787 = vld [vmem:[#allocation14 + $0x198] sm:$0xff]
    %v1788 = vld [vmem:[#allocation14 + $0x1a0] sm:$0xff]
    %v1789 = vld [vmem:[#allocation14 + $0x1a8] sm:$0xff]
    %v1790 = vld [vmem:[#allocation14 + $0x1b0] sm:$0xff]
    %v1791 = vld [vmem:[#allocation14 + $0x1b8] sm:$0xff]
    %v1792 = vld [vmem:[#allocation14 + $0x1c0] sm:$0xff]
    %v1793 = vld [vmem:[#allocation14 + $0x1c8] sm:$0xff]
    %v1794 = vld [vmem:[#allocation14 + $0x1d0] sm:$0xff]
    %v1795 = vld [vmem:[#allocation14 + $0x1d8] sm:$0xff]
    %v1796 = vld [vmem:[#allocation14 + $0x1e0] sm:$0xff]
    %v1797 = vld [vmem:[#allocation14 + $0x1e8] sm:$0xff]
    %v1798 = vld [vmem:[#allocation14 + $0x1f0] sm:$0xff]
    %v1799 = vld [vmem:[#allocation14 + $0x1f8] sm:$0xff]
    %v1800 = vld [vmem:[#allocation16] sm:$0x3]
    %v1802 = vlaneseq
    %v1803 = vshrl.u32 %v1802, 7
    %v1804 = vsub.s32 0, %v1803
    %v1805 = vrot.slane %v1800, %v1804
    %v1806 = vlaneseq
    %v1807 = vshrl.u32 %v1806, 7
    %v1808 = vsub.s32 1, %v1807
    %v1809 = vrot.slane %v1800, %v1808
    %v1876 = vunpack.c.l.b16 %v1736
    %v1877 = vunpack.c.h.b16 %v1736
    %v1878 = vunpack.c.l.b16 %v1737
    %v1879 = vunpack.c.h.b16 %v1737
    %v1880 = vunpack.c.l.b16 %v1738
    %v1881 = vunpack.c.h.b16 %v1738
    %v1882 = vunpack.c.l.b16 %v1739
    %v1883 = vunpack.c.h.b16 %v1739
    %v1884 = vunpack.c.l.b16 %v1740
    %v1885 = vunpack.c.h.b16 %v1740
    %v1886 = vunpack.c.l.b16 %v1741
    %v1887 = vunpack.c.h.b16 %v1741
    %v1888 = vunpack.c.l.b16 %v1742
    %v1889 = vunpack.c.h.b16 %v1742
    %v1890 = vunpack.c.l.b16 %v1743
    %v1891 = vunpack.c.h.b16 %v1743
    %v1892 = vunpack.c.l.b16 %v1744
    %v1893 = vunpack.c.h.b16 %v1744
    %v1894 = vunpack.c.l.b16 %v1745
    %v1895 = vunpack.c.h.b16 %v1745
    %v1896 = vunpack.c.l.b16 %v1746
    %v1897 = vunpack.c.h.b16 %v1746
    %v1898 = vunpack.c.l.b16 %v1747
    %v1899 = vunpack.c.h.b16 %v1747
    %v1900 = vunpack.c.l.b16 %v1748
    %v1901 = vunpack.c.h.b16 %v1748
    %v1902 = vunpack.c.l.b16 %v1749
    %v1903 = vunpack.c.h.b16 %v1749
    %v1904 = vunpack.c.l.b16 %v1750
    %v1905 = vunpack.c.h.b16 %v1750
    %v1906 = vunpack.c.l.b16 %v1751
    %v1907 = vunpack.c.h.b16 %v1751
    %v1908 = vunpack.c.l.b16 %v1752
    %v1909 = vunpack.c.h.b16 %v1752
    %v1910 = vunpack.c.l.b16 %v1753
    %v1911 = vunpack.c.h.b16 %v1753
    %v1912 = vunpack.c.l.b16 %v1754
    %v1913 = vunpack.c.h.b16 %v1754
    %v1914 = vunpack.c.l.b16 %v1755
    %v1915 = vunpack.c.h.b16 %v1755
    %v1916 = vunpack.c.l.b16 %v1756
    %v1917 = vunpack.c.h.b16 %v1756
    %v1918 = vunpack.c.l.b16 %v1757
    %v1919 = vunpack.c.h.b16 %v1757
    %v1920 = vunpack.c.l.b16 %v1758
    %v1921 = vunpack.c.h.b16 %v1758
    %v1922 = vunpack.c.l.b16 %v1759
    %v1923 = vunpack.c.h.b16 %v1759
    %v1924 = vunpack.c.l.b16 %v1760
    %v1925 = vunpack.c.h.b16 %v1760
    %v1926 = vunpack.c.l.b16 %v1761
    %v1927 = vunpack.c.h.b16 %v1761
    %v1928 = vunpack.c.l.b16 %v1762
    %v1929 = vunpack.c.h.b16 %v1762
    %v1930 = vunpack.c.l.b16 %v1763
    %v1931 = vunpack.c.h.b16 %v1763
    %v1932 = vunpack.c.l.b16 %v1764
    %v1933 = vunpack.c.h.b16 %v1764
    %v1934 = vunpack.c.l.b16 %v1765
    %v1935 = vunpack.c.h.b16 %v1765
    %v1936 = vunpack.c.l.b16 %v1766
    %v1937 = vunpack.c.h.b16 %v1766
    %v1938 = vunpack.c.l.b16 %v1767
    %v1939 = vunpack.c.h.b16 %v1767
    %v1940 = vunpack.c.l.b16 %v1768
    %v1941 = vunpack.c.h.b16 %v1768
    %v1942 = vunpack.c.l.b16 %v1769
    %v1943 = vunpack.c.h.b16 %v1769
    %v1944 = vunpack.c.l.b16 %v1770
    %v1945 = vunpack.c.h.b16 %v1770
    %v1946 = vunpack.c.l.b16 %v1771
    %v1947 = vunpack.c.h.b16 %v1771
    %v1948 = vunpack.c.l.b16 %v1772
    %v1949 = vunpack.c.h.b16 %v1772
    %v1950 = vunpack.c.l.b16 %v1773
    %v1951 = vunpack.c.h.b16 %v1773
    %v1952 = vunpack.c.l.b16 %v1774
    %v1953 = vunpack.c.h.b16 %v1774
    %v1954 = vunpack.c.l.b16 %v1775
    %v1955 = vunpack.c.h.b16 %v1775
    %v1956 = vunpack.c.l.b16 %v1776
    %v1957 = vunpack.c.h.b16 %v1776
    %v1958 = vunpack.c.l.b16 %v1777
    %v1959 = vunpack.c.h.b16 %v1777
    %v1960 = vunpack.c.l.b16 %v1778
    %v1961 = vunpack.c.h.b16 %v1778
    %v1962 = vunpack.c.l.b16 %v1779
    %v1963 = vunpack.c.h.b16 %v1779
    %v1964 = vunpack.c.l.b16 %v1780
    %v1965 = vunpack.c.h.b16 %v1780
    %v1966 = vunpack.c.l.b16 %v1781
    %v1967 = vunpack.c.h.b16 %v1781
    %v1968 = vunpack.c.l.b16 %v1782
    %v1969 = vunpack.c.h.b16 %v1782
    %v1970 = vunpack.c.l.b16 %v1783
    %v1971 = vunpack.c.h.b16 %v1783
    %v1972 = vunpack.c.l.b16 %v1784
    %v1973 = vunpack.c.h.b16 %v1784
    %v1974 = vunpack.c.l.b16 %v1785
    %v1975 = vunpack.c.h.b16 %v1785
    %v1976 = vunpack.c.l.b16 %v1786
    %v1977 = vunpack.c.h.b16 %v1786
    %v1978 = vunpack.c.l.b16 %v1787
    %v1979 = vunpack.c.h.b16 %v1787
    %v1980 = vunpack.c.l.b16 %v1788
    %v1981 = vunpack.c.h.b16 %v1788
    %v1982 = vunpack.c.l.b16 %v1789
    %v1983 = vunpack.c.h.b16 %v1789
    %v1984 = vunpack.c.l.b16 %v1790
    %v1985 = vunpack.c.h.b16 %v1790
    %v1986 = vunpack.c.l.b16 %v1791
    %v1987 = vunpack.c.h.b16 %v1791
    %v1988 = vunpack.c.l.b16 %v1792
    %v1989 = vunpack.c.h.b16 %v1792
    %v1990 = vunpack.c.l.b16 %v1793
    %v1991 = vunpack.c.h.b16 %v1793
    %v1992 = vunpack.c.l.b16 %v1794
    %v1993 = vunpack.c.h.b16 %v1794
    %v1994 = vunpack.c.l.b16 %v1795
    %v1995 = vunpack.c.h.b16 %v1795
    %v1996 = vunpack.c.l.b16 %v1796
    %v1997 = vunpack.c.h.b16 %v1796
    %v1998 = vunpack.c.l.b16 %v1797
    %v1999 = vunpack.c.h.b16 %v1797
    %v2000 = vunpack.c.l.b16 %v1798
    %v2001 = vunpack.c.h.b16 %v1798
    %v2002 = vunpack.c.l.b16 %v1799
    %v2003 = vunpack.c.h.b16 %v1799
    %v2004 = vpack.c.b16 %v1878, %v1876
    %v2005 = vpack.c.b16 %v1879, %v1877
    %v2006 = vpack.c.b16 %v1882, %v1880
    %v2007 = vpack.c.b16 %v1883, %v1881
    %v2008 = vpack.c.b16 %v1886, %v1884
    %v2009 = vpack.c.b16 %v1887, %v1885
    %v2010 = vpack.c.b16 %v1890, %v1888
    %v2011 = vpack.c.b16 %v1891, %v1889
    %v2012 = vpack.c.b16 %v1894, %v1892
    %v2013 = vpack.c.b16 %v1895, %v1893
    %v2014 = vpack.c.b16 %v1898, %v1896
    %v2015 = vpack.c.b16 %v1899, %v1897
    %v2016 = vpack.c.b16 %v1902, %v1900
    %v2017 = vpack.c.b16 %v1903, %v1901
    %v2018 = vpack.c.b16 %v1906, %v1904
    %v2019 = vpack.c.b16 %v1907, %v1905
    %v2020 = vpack.c.b16 %v1910, %v1908
    %v2021 = vpack.c.b16 %v1911, %v1909
    %v2022 = vpack.c.b16 %v1914, %v1912
    %v2023 = vpack.c.b16 %v1915, %v1913
    %v2024 = vpack.c.b16 %v1918, %v1916
    %v2025 = vpack.c.b16 %v1919, %v1917
    %v2026 = vpack.c.b16 %v1922, %v1920
    %v2027 = vpack.c.b16 %v1923, %v1921
    %v2028 = vpack.c.b16 %v1926, %v1924
    %v2029 = vpack.c.b16 %v1927, %v1925
    %v2030 = vpack.c.b16 %v1930, %v1928
    %v2031 = vpack.c.b16 %v1931, %v1929
    %v2032 = vpack.c.b16 %v1934, %v1932
    %v2033 = vpack.c.b16 %v1935, %v1933
    %v2034 = vpack.c.b16 %v1938, %v1936
    %v2035 = vpack.c.b16 %v1939, %v1937
    %v2036 = vpack.c.b16 %v1942, %v1940
    %v2037 = vpack.c.b16 %v1943, %v1941
    %v2038 = vpack.c.b16 %v1946, %v1944
    %v2039 = vpack.c.b16 %v1947, %v1945
    %v2040 = vpack.c.b16 %v1950, %v1948
    %v2041 = vpack.c.b16 %v1951, %v1949
    %v2042 = vpack.c.b16 %v1954, %v1952
    %v2043 = vpack.c.b16 %v1955, %v1953
    %v2044 = vpack.c.b16 %v1958, %v1956
    %v2045 = vpack.c.b16 %v1959, %v1957
    %v2046 = vpack.c.b16 %v1962, %v1960
    %v2047 = vpack.c.b16 %v1963, %v1961
    %v2048 = vpack.c.b16 %v1966, %v1964
    %v2049 = vpack.c.b16 %v1967, %v1965
    %v2050 = vpack.c.b16 %v1970, %v1968
    %v2051 = vpack.c.b16 %v1971, %v1969
    %v2052 = vpack.c.b16 %v1974, %v1972
    %v2053 = vpack.c.b16 %v1975, %v1973
    %v2054 = vpack.c.b16 %v1978, %v1976
    %v2055 = vpack.c.b16 %v1979, %v1977
    %v2056 = vpack.c.b16 %v1982, %v1980
    %v2057 = vpack.c.b16 %v1983, %v1981
    %v2058 = vpack.c.b16 %v1986, %v1984
    %v2059 = vpack.c.b16 %v1987, %v1985
    %v2060 = vpack.c.b16 %v1990, %v1988
    %v2061 = vpack.c.b16 %v1991, %v1989
    %v2062 = vpack.c.b16 %v1994, %v1992
    %v2063 = vpack.c.b16 %v1995, %v1993
    %v2064 = vpack.c.b16 %v1998, %v1996
    %v2065 = vpack.c.b16 %v1999, %v1997
    %v2066 = vpack.c.b16 %v2002, %v2000
    %v2067 = vpack.c.b16 %v2003, %v2001
    %2132 = vmatprep.subr.bf16.mxu0 %v2005
    %2133 = vmatpush1.bf16.msra.mxu0 %v2004
    %2134 = vmatprep.subr.bf16.mxu0 %v2007
    %2135 = vmatpush1.bf16.msra.mxu0 %v2006
    %2136 = vmatprep.subr.bf16.mxu0 %v2009
    %2137 = vmatpush1.bf16.msra.mxu0 %v2008
    %2138 = vmatprep.subr.bf16.mxu0 %v2011
    %2139 = vmatpush1.bf16.msra.mxu0 %v2010
    %2140 = vmatprep.subr.bf16.mxu0 %v2013
    %2141 = vmatpush1.bf16.msra.mxu0 %v2012
    %2142 = vmatprep.subr.bf16.mxu0 %v2015
    %2143 = vmatpush1.bf16.msra.mxu0 %v2014
    %2144 = vmatprep.subr.bf16.mxu0 %v2017
    %2145 = vmatpush1.bf16.msra.mxu0 %v2016
    %2146 = vmatprep.subr.bf16.mxu0 %v2019
    %2147 = vmatpush1.bf16.msra.mxu0 %v2018
    %2148 = vmatprep.subr.bf16.mxu0 %v2021
    %2149 = vmatpush1.bf16.msra.mxu0 %v2020
    %2150 = vmatprep.subr.bf16.mxu0 %v2023
    %2151 = vmatpush1.bf16.msra.mxu0 %v2022
    %2152 = vmatprep.subr.bf16.mxu0 %v2025
    %2153 = vmatpush1.bf16.msra.mxu0 %v2024
    %2154 = vmatprep.subr.bf16.mxu0 %v2027
    %2155 = vmatpush1.bf16.msra.mxu0 %v2026
    %2156 = vmatprep.subr.bf16.mxu0 %v2029
    %2157 = vmatpush1.bf16.msra.mxu0 %v2028
    %2158 = vmatprep.subr.bf16.mxu0 %v2031
    %2159 = vmatpush1.bf16.msra.mxu0 %v2030
    %2160 = vmatprep.subr.bf16.mxu0 %v2033
    %2161 = vmatpush1.bf16.msra.mxu0 %v2032
    %2162 = vmatprep.subr.bf16.mxu0 %v2035
    %2163 = vmatpush1.bf16.msra.mxu0 %v2034
    %2164 = vmatprep.mubr.bf16.mxu0 %v1733
    %2165 = vmatmul.mubr.bf16.gmra.mrb[0].mxu0 %v1732
    %v2166 = vpop.f32.mrb[0].mxu0
    %v2167 = vadd.f32 %v1805, %v2166
    %v2168 = vpop.f32.mrb[0].mxu0
    %v2169 = vadd.f32 %v1809, %v2168
    %v2170 = vpop.f32.mrb[0].mxu0
    %v2171 = vpop.f32.mrb[0].mxu0
    %2172 = vdwg.mxu0
    %2173 = vmatprep.subr.bf16.mxu0 %v2037
    %2174 = vmatpush1.bf16.msra.mxu0 %v2036
    %2175 = vmatprep.subr.bf16.mxu0 %v2039
    %2176 = vmatpush1.bf16.msra.mxu0 %v2038
    %2177 = vmatprep.subr.bf16.mxu0 %v2041
    %2178 = vmatpush1.bf16.msra.mxu0 %v2040
    %2179 = vmatprep.subr.bf16.mxu0 %v2043
    %2180 = vmatpush1.bf16.msra.mxu0 %v2042
    %2181 = vmatprep.subr.bf16.mxu0 %v2045
    %2182 = vmatpush1.bf16.msra.mxu0 %v2044
    %2183 = vmatprep.subr.bf16.mxu0 %v2047
    %2184 = vmatpush1.bf16.msra.mxu0 %v2046
    %2185 = vmatprep.subr.bf16.mxu0 %v2049
    %2186 = vmatpush1.bf16.msra.mxu0 %v2048
    %2187 = vmatprep.subr.bf16.mxu0 %v2051
    %2188 = vmatpush1.bf16.msra.mxu0 %v2050
    %2189 = vmatprep.subr.bf16.mxu0 %v2053
    %2190 = vmatpush1.bf16.msra.mxu0 %v2052
    %2191 = vmatprep.subr.bf16.mxu0 %v2055
    %2192 = vmatpush1.bf16.msra.mxu0 %v2054
    %2193 = vmatprep.subr.bf16.mxu0 %v2057
    %2194 = vmatpush1.bf16.msra.mxu0 %v2056
    %2195 = vmatprep.subr.bf16.mxu0 %v2059
    %2196 = vmatpush1.bf16.msra.mxu0 %v2058
    %2197 = vmatprep.subr.bf16.mxu0 %v2061
    %2198 = vmatpush1.bf16.msra.mxu0 %v2060
    %2199 = vmatprep.subr.bf16.mxu0 %v2063
    %2200 = vmatpush1.bf16.msra.mxu0 %v2062
    %2201 = vmatprep.subr.bf16.mxu0 %v2065
    %2202 = vmatpush1.bf16.msra.mxu0 %v2064
    %2203 = vmatprep.subr.bf16.mxu0 %v2067
    %2204 = vmatpush1.bf16.msra.mxu0 %v2066
    %2205 = vmatprep.mubr.bf16.mxu0 %v1735
    %2206 = vmatmul.mubr.bf16.gmra.mrb[0].mxu0 %v1734
    %v2207 = vpop.f32.mrb[0].mxu0
    %v2208 = vadd.f32 %v2167, %v2207
    %v2209 = vpop.f32.mrb[0].mxu0
    %v2210 = vadd.f32 %v2169, %v2209
    %v2211 = vpop.f32.mrb[0].mxu0
    %v2212 = vpop.f32.mrb[0].mxu0
    %2213 = vdwg.mxu0
    %v2214 = vpack.c.bf16 %v2208, %v2208
    %v2215 = vpack.c.bf16 %v2210, %v2210
    %v2216 = vld [vmem:[#allocation17] sm:$0xf]
    %v2217 = vld [vmem:[#allocation17 + $0x4] sm:$0xf]
    %v2218 = vld [vmem:[#allocation17 + $0x8] sm:$0xf]
    %v2219 = vld [vmem:[#allocation17 + $0xc] sm:$0xf]
    %v2220 = vld [vmem:[#allocation17 + $0x10] sm:$0xf]
    %v2221 = vld [vmem:[#allocation17 + $0x14] sm:$0xf]
    %v2222 = vld [vmem:[#allocation17 + $0x18] sm:$0xf]
    %v2223 = vld [vmem:[#allocation17 + $0x1c] sm:$0xf]
    %v2224 = vld [vmem:[#allocation17 + $0x20] sm:$0xf]
    %v2225 = vld [vmem:[#allocation17 + $0x24] sm:$0xf]
    %v2226 = vld [vmem:[#allocation17 + $0x28] sm:$0xf]
    %v2227 = vld [vmem:[#allocation17 + $0x2c] sm:$0xf]
    %v2228 = vld [vmem:[#allocation17 + $0x30] sm:$0xf]
    %v2229 = vld [vmem:[#allocation17 + $0x34] sm:$0xf]
    %v2230 = vld [vmem:[#allocation17 + $0x38] sm:$0xf]
    %v2231 = vld [vmem:[#allocation17 + $0x3c] sm:$0xf]
    %v2232 = vld [vmem:[#allocation17 + $0x40] sm:$0xf]
    %v2233 = vld [vmem:[#allocation17 + $0x44] sm:$0xf]
    %v2234 = vld [vmem:[#allocation17 + $0x48] sm:$0xf]
    %v2235 = vld [vmem:[#allocation17 + $0x4c] sm:$0xf]
    %v2236 = vld [vmem:[#allocation17 + $0x50] sm:$0xf]
    %v2237 = vld [vmem:[#allocation17 + $0x54] sm:$0xf]
    %v2238 = vld [vmem:[#allocation17 + $0x58] sm:$0xf]
    %v2239 = vld [vmem:[#allocation17 + $0x5c] sm:$0xf]
    %v2240 = vld [vmem:[#allocation17 + $0x60] sm:$0xf]
    %v2241 = vld [vmem:[#allocation17 + $0x64] sm:$0xf]
    %v2242 = vld [vmem:[#allocation17 + $0x68] sm:$0xf]
    %v2243 = vld [vmem:[#allocation17 + $0x6c] sm:$0xf]
    %v2244 = vld [vmem:[#allocation17 + $0x70] sm:$0xf]
    %v2245 = vld [vmem:[#allocation17 + $0x74] sm:$0xf]
    %v2246 = vld [vmem:[#allocation17 + $0x78] sm:$0xf]
    %v2247 = vld [vmem:[#allocation17 + $0x7c] sm:$0xf]
    %v2248 = vld [vmem:[#allocation19] sm:$0x1]
    %v2250 = vlaneseq
    %v2251 = vshrl.u32 %v2250, 7
    %v2252 = vsub.s32 0, %v2251
    %v2253 = vrot.slane %v2248, %v2252
    %v2287 = vunpack.c.l.b16 %v2216
    %v2288 = vunpack.c.l.b16 %v2217
    %v2289 = vunpack.c.l.b16 %v2218
    %v2290 = vunpack.c.l.b16 %v2219
    %v2291 = vunpack.c.l.b16 %v2220
    %v2292 = vunpack.c.l.b16 %v2221
    %v2293 = vunpack.c.l.b16 %v2222
    %v2294 = vunpack.c.l.b16 %v2223
    %v2295 = vunpack.c.l.b16 %v2224
    %v2296 = vunpack.c.l.b16 %v2225
    %v2297 = vunpack.c.l.b16 %v2226
    %v2298 = vunpack.c.l.b16 %v2227
    %v2299 = vunpack.c.l.b16 %v2228
    %v2300 = vunpack.c.l.b16 %v2229
    %v2301 = vunpack.c.l.b16 %v2230
    %v2302 = vunpack.c.l.b16 %v2231
    %v2303 = vunpack.c.l.b16 %v2232
    %v2304 = vunpack.c.l.b16 %v2233
    %v2305 = vunpack.c.l.b16 %v2234
    %v2306 = vunpack.c.l.b16 %v2235
    %v2307 = vunpack.c.l.b16 %v2236
    %v2308 = vunpack.c.l.b16 %v2237
    %v2309 = vunpack.c.l.b16 %v2238
    %v2310 = vunpack.c.l.b16 %v2239
    %v2311 = vunpack.c.l.b16 %v2240
    %v2312 = vunpack.c.l.b16 %v2241
    %v2313 = vunpack.c.l.b16 %v2242
    %v2314 = vunpack.c.l.b16 %v2243
    %v2315 = vunpack.c.l.b16 %v2244
    %v2316 = vunpack.c.l.b16 %v2245
    %v2317 = vunpack.c.l.b16 %v2246
    %v2318 = vunpack.c.l.b16 %v2247
    %v2319 = vpack.c.b16 %v2288, %v2287
    %v2320 = vpack.c.b16 %v2290, %v2289
    %v2321 = vpack.c.b16 %v2292, %v2291
    %v2322 = vpack.c.b16 %v2294, %v2293
    %v2323 = vpack.c.b16 %v2296, %v2295
    %v2324 = vpack.c.b16 %v2298, %v2297
    %v2325 = vpack.c.b16 %v2300, %v2299
    %v2326 = vpack.c.b16 %v2302, %v2301
    %v2327 = vpack.c.b16 %v2304, %v2303
    %v2328 = vpack.c.b16 %v2306, %v2305
    %v2329 = vpack.c.b16 %v2308, %v2307
    %v2330 = vpack.c.b16 %v2310, %v2309
    %v2331 = vpack.c.b16 %v2312, %v2311
    %v2332 = vpack.c.b16 %v2314, %v2313
    %v2333 = vpack.c.b16 %v2316, %v2315
    %v2334 = vpack.c.b16 %v2318, %v2317
    %2351 = vmatprep.subr.bf16.mxu0 0
    %2352 = vmatpush1.bf16.msra.mxu0 %v2319
    %2353 = vmatprep.subr.bf16.mxu0 0
    %2354 = vmatpush1.bf16.msra.mxu0 %v2320
    %2355 = vmatprep.subr.bf16.mxu0 0
    %2356 = vmatpush1.bf16.msra.mxu0 %v2321
    %2357 = vmatprep.subr.bf16.mxu0 0
    %2358 = vmatpush1.bf16.msra.mxu0 %v2322
    %2359 = vmatprep.subr.bf16.mxu0 0
    %2360 = vmatpush1.bf16.msra.mxu0 %v2323
    %2361 = vmatprep.subr.bf16.mxu0 0
    %2362 = vmatpush1.bf16.msra.mxu0 %v2324
    %2363 = vmatprep.subr.bf16.mxu0 0
    %2364 = vmatpush1.bf16.msra.mxu0 %v2325
    %2365 = vmatprep.subr.bf16.mxu0 0
    %2366 = vmatpush1.bf16.msra.mxu0 %v2326
    %2367 = vmatprep.subr.bf16.mxu0 0
    %2368 = vmatpush1.bf16.msra.mxu0 %v2327
    %2369 = vmatprep.subr.bf16.mxu0 0
    %2370 = vmatpush1.bf16.msra.mxu0 %v2328
    %2371 = vmatprep.subr.bf16.mxu0 0
    %2372 = vmatpush1.bf16.msra.mxu0 %v2329
    %2373 = vmatprep.subr.bf16.mxu0 0
    %2374 = vmatpush1.bf16.msra.mxu0 %v2330
    %2375 = vmatprep.subr.bf16.mxu0 0
    %2376 = vmatpush1.bf16.msra.mxu0 %v2331
    %2377 = vmatprep.subr.bf16.mxu0 0
    %2378 = vmatpush1.bf16.msra.mxu0 %v2332
    %2379 = vmatprep.subr.bf16.mxu0 0
    %2380 = vmatpush1.bf16.msra.mxu0 %v2333
    %2381 = vmatprep.subr.bf16.mxu0 0
    %2382 = vmatpush1.bf16.msra.mxu0 %v2334
    %2383 = vmatprep.mubr.bf16.mxu0 %v2215
    %2384 = vmatmul.mubr.bf16.gmra.mrb[0].mxu0 %v2214
    %v2385 = vpop.f32.mrb[0].mxu0
    %v2386 = vadd.f32 %v2253, %v2385
    %v2387 = vpop.f32.mrb[0].mxu0
    %v2388 = vpop.f32.mrb[0].mxu0
    %v2389 = vpop.f32.mrb[0].mxu0
    %2390 = vdwg.mxu0
    %vm2391 = vcmask 517120
    %2392 = vst.msk [vmem:[#allocation20] sm:$0x3] %vm2391, %v2386
    // Predicated region
    $region90: #{_forward.1} parent=1 // pred_check
      _
    $region91: #{_forward.1} parent=1 // pred_check_branch
      %2394 = sbr.rel (0) target = $region93
    $region92: #{_forward.1} parent=1 // pred_region
      %s2396 = ssub.s32 32, 32
      %2397 = vsyncadd [#allocation4], %s2396
      %s2399 = sshll.u32 [#allocation20], 4
      %s2400 = int_to_ptr.vmem [resolvable:$true] %s2399
      %2402 = dma.vmem_to_hbm [thread:$0]  %s2400, 32, %s11, [#allocation4]
    $region93: #{_forward.1} parent=1 // pred_fallthru
      _
    // Predicated region
    $region94: #{_forward.1} parent=1 // pred_check
      _
    $region95: #{_forward.1} parent=1 // pred_check_branch
      %2404 = sbr.rel (0) target = $region97
    $region96: #{_forward.1} parent=1 // pred_region
      %2405 = dma.done [#allocation4], 32
    $region97: #{_forward.1} parent=1 // pred_fallthru
      _
    %2406 = vsyncpa [#allocation3], 1
    %2407 = vsyncpa [#allocation6], 1
    %2408 = vsyncpa [#allocation9], 1
    %2409 = vsyncpa [#allocation12], 1
    %2410 = vsyncpa [#allocation15], 1
    %2411 = vsyncpa [#allocation18], 1
    %2412 = vsyncpa [#allocation4], 1

</llo_original>
